<compile_context>
chip_gen: v7x
topology: tpu7x:2x2x1
jax: 0.10.0
libtpu: 0.0.40
codegen_flags: <defaults>
</compile_context>

<pallas_src>
import functools

import jax
import jax.numpy as jnp
from jax.experimental import pallas as pl
from jax.experimental.pallas import tpu as pltpu

EPS = 1e-5
LANE = 128
VMEM_LIMIT = 32 * 1024 * 1024  # safe on v5e/v6e/v7x; tiles below are far smaller


# ---------------------------------------------------------------------------
# Small helpers
# ---------------------------------------------------------------------------
def _round_up(n, m):
    return ((n + m - 1) // m) * m


def _pick_tile(m, cap=256):
    for t in (512, 256, 128, 64, 32, 16, 8):
        if t <= cap and m % t == 0:
            return t
    return m  # fall back to a single full-extent block


def _pad_axis(a, axis, target):
    pad = target - a.shape[axis]
    if pad == 0:
        return a
    widths = [(0, 0)] * a.ndim
    widths[axis] = (0, pad)
    return jnp.pad(a, widths)


def _pad_vec(v, target, value):
    pad = target - v.shape[0]
    if pad == 0:
        return v
    return jnp.concatenate([v, jnp.full((pad,), value, v.dtype)])


def _phase_split_w(x, stride):
    """(N,Hp,Wp,C) -> (N, Hp*stride, Wp//stride, C).

    out[n, h*stride + p, j, :] == x[n, h, j*stride + p, :], so the 3x3 kernel
    only ever needs contiguous slices along W (no strided in-kernel loads).
    For stride == 1 this is a pure reshape (no data movement).
    """
    n, hp, wp, c = x.shape
    if wp % stride:
        x = jnp.pad(x, ((0, 0), (0, 0), (0, stride - wp % stride), (0, 0)))
        wp = x.shape[2]
    x = x.reshape(n, hp, wp // stride, stride, c)
    x = jnp.transpose(x, (0, 1, 3, 2, 4))
    return x.reshape(n, hp * stride, wp // stride, c)


def _bn_scale_shift(stats, count, gamma, beta):
    """Per-channel (sum, sumsq) -> (scale, shift) with biased variance."""
    mean = stats[0] / count
    var = jnp.maximum(stats[1] / count - mean * mean, 0.0)
    scale = gamma * jax.lax.rsqrt(var + EPS)
    shift = beta - mean * scale
    return scale[None, :], shift[None, :]


# ---------------------------------------------------------------------------
# Pallas kernels
# ---------------------------------------------------------------------------
def _matmul_stats_kernel(x_ref, w_ref, b_ref, y_ref, st_ref, acc_ref):
    """Tiled y = x @ w + bias; emits per-M-tile per-channel sum / sumsq."""
    k = pl.program_id(1)

    @pl.when(k == 0)
    def _():
        acc_ref[...] = jnp.zeros_like(acc_ref)

    acc_ref[...] += jnp.dot(x_ref[...], w_ref[...],
                            preferred_element_type=jnp.float32)

    @pl.when(k == pl.num_programs(1) - 1)
    def _():
        y = acc_ref[...] + b_ref[...]
        y_ref[...] = y.astype(y_ref.dtype)
        st_ref[0, 0:1, :] = jnp.sum(y, axis=0, keepdims=True)
        st_ref[0, 1:2, :] = jnp.sum(y * y, axis=0, keepdims=True)


def _conv3x3_stats_kernel(x_ref, w_ref, y_ref, st_ref, acc_ref, *, stride, wo):
    """3x3 conv as 9 accumulated matmuls (3 kw taps per kh grid step)."""
    row = pl.program_id(1)
    kh = pl.program_id(2)

    @pl.when(jnp.logical_and(row == 0, kh == 0))
    def _():
        st_ref[...] = jnp.zeros_like(st_ref)

    @pl.when(kh == 0)
    def _():
        acc_ref[...] = jnp.zeros_like(acc_ref)

    contrib = jnp.dot(x_ref[0, 0, pl.ds(0, wo), :], w_ref[0, 0],
                      preferred_element_type=jnp.float32)
    for kw in (1, 2):
        xs = x_ref[0, kw % stride, pl.ds(kw // stride, wo), :]
        contrib += jnp.dot(xs, w_ref[0, kw], preferred_element_type=jnp.float32)
    acc_ref[...] += contrib

    @pl.when(kh == 2)
    def _():
        y = acc_ref[...]
        y_ref[0, 0] = y.astype(y_ref.dtype)
        st_ref[0, 0:1, :] = st_ref[0, 0:1, :] + jnp.sum(y, axis=0, keepdims=True)
        st_ref[0, 1:2, :] = st_ref[0, 1:2, :] + jnp.sum(y * y, axis=0, keepdims=True)


def _scale_shift_kernel(x_ref, sc_ref, sh_ref, o_ref, *, relu):
    y = x_ref[...].astype(jnp.float32) * sc_ref[...] + sh_ref[...]
    if relu:
        y = jnp.maximum(y, 0.0)
    o_ref[...] = y.astype(o_ref.dtype)


def _dual_bn_add_relu_kernel(a_ref, b_ref, sa_ref, ha_ref, sb_ref, hb_ref, o_ref):
    ya = a_ref[...].astype(jnp.float32) * sa_ref[...] + ha_ref[...]
    yb = b_ref[...].astype(jnp.float32) * sb_ref[...] + hb_ref[...]
    o_ref[...] = jnp.maximum(ya + yb, 0.0).astype(o_ref.dtype)


# ---------------------------------------------------------------------------
# pallas_call wrappers
# ---------------------------------------------------------------------------
def matmul_stats(x, w, bias, *, out_dtype):
    """x:(M,K) @ w:(K,N) + bias:(1,N) -> (y:(M,N), stats:(2,N) [sum, sumsq])."""
    m, k = x.shape
    _, n = w.shape
    tm = _pick_tile(m, cap=256)
    tk = _pick_tile(k, cap=512)
    mt, kt = m // tm, k // tk
    y, stats = pl.pallas_call(
        _matmul_stats_kernel,
        out_shape=(jax.ShapeDtypeStruct((m, n), out_dtype),
                   jax.ShapeDtypeStruct((mt, 2, n), jnp.float32)),
        grid=(mt, kt),
        in_specs=[
            pl.BlockSpec((tm, tk), lambda i, j: (i, j)),
            pl.BlockSpec((tk, n), lambda i, j: (j, 0)),
            pl.BlockSpec((1, n), lambda i, j: (0, 0)),
        ],
        out_specs=(
            pl.BlockSpec((tm, n), lambda i, j: (i, 0)),
            pl.BlockSpec((1, 2, n), lambda i, j: (i, 0, 0)),
        ),
        scratch_shapes=[pltpu.VMEM((tm, n), jnp.float32)],
        compiler_params=pltpu.CompilerParams(
            dimension_semantics=("parallel", "arbitrary"),
            vmem_limit_bytes=VMEM_LIMIT),
    )(x, w, bias)
    return y, jnp.sum(stats, axis=0)


def conv3x3_stats(x_ph, w2, *, stride, ho, wo, out_dtype):
    """x_ph: W-phase-split padded NHWC activation, w2: (3,3,C,Co)."""
    n, _, wps, c = x_ph.shape
    co = w2.shape[-1]
    kernel = functools.partial(_conv3x3_stats_kernel, stride=stride, wo=wo)
    y, stats = pl.pallas_call(
        kernel,
        out_shape=(jax.ShapeDtypeStruct((n, ho, wo, co), out_dtype),
                   jax.ShapeDtypeStruct((n, 2, co), jnp.float32)),
        grid=(n, ho, 3),
        in_specs=[
            pl.BlockSpec((1, stride, wps, c),
                         lambda b, r, t: (b, r * stride + t, 0, 0)),
            pl.BlockSpec((1, 3, c, co), lambda b, r, t: (t, 0, 0, 0)),
        ],
        out_specs=(
            pl.BlockSpec((1, 1, wo, co), lambda b, r, t: (b, r, 0, 0)),
            pl.BlockSpec((1, 2, co), lambda b, r, t: (b, 0, 0)),
        ),
        scratch_shapes=[pltpu.VMEM((wo, co), jnp.float32)],
        compiler_params=pltpu.CompilerParams(
            dimension_semantics=("parallel", "arbitrary", "arbitrary"),
            vmem_limit_bytes=VMEM_LIMIT),
    )(x_ph, w2)
    return y, jnp.sum(stats, axis=0)


def scale_shift(x, scale, shift, *, relu, out_dtype):
    m, c = x.shape
    tm = _pick_tile(m, cap=512)
    kernel = functools.partial(_scale_shift_kernel, relu=relu)
    return pl.pallas_call(
        kernel,
        out_shape=jax.ShapeDtypeStruct((m, c), out_dtype),
        grid=(m // tm,),
        in_specs=[
            pl.BlockSpec((tm, c), lambda i: (i, 0)),
            pl.BlockSpec((1, c), lambda i: (0, 0)),
            pl.BlockSpec((1, c), lambda i: (0, 0)),
        ],
        out_specs=pl.BlockSpec((tm, c), lambda i: (i, 0)),
        compiler_params=pltpu.CompilerParams(
            dimension_semantics=("parallel",),
            vmem_limit_bytes=VMEM_LIMIT),
    )(x, scale, shift)


def dual_bn_add_relu(a, b, sa, ha, sb, hb, *, out_dtype):
    m, c = a.shape
    tm = _pick_tile(m, cap=512)
    return pl.pallas_call(
        _dual_bn_add_relu_kernel,
        out_shape=jax.ShapeDtypeStruct((m, c), out_dtype),
        grid=(m // tm,),
        in_specs=[
            pl.BlockSpec((tm, c), lambda i: (i, 0)),
            pl.BlockSpec((tm, c), lambda i: (i, 0)),
            pl.BlockSpec((1, c), lambda i: (0, 0)),
            pl.BlockSpec((1, c), lambda i: (0, 0)),
            pl.BlockSpec((1, c), lambda i: (0, 0)),
            pl.BlockSpec((1, c), lambda i: (0, 0)),
        ],
        out_specs=pl.BlockSpec((tm, c), lambda i: (i, 0)),
        compiler_params=pltpu.CompilerParams(
            dimension_semantics=("parallel",),
            vmem_limit_bytes=VMEM_LIMIT),
    )(a, b, sa, ha, sb, hb)


# ---------------------------------------------------------------------------
# Bottleneck forward (matches the PyTorch module, training-mode BN)
# ---------------------------------------------------------------------------
@functools.partial(jax.jit, static_argnames=("stride", "compute_dtype"))
def bottleneck_forward(x_nchw, params, *, stride, compute_dtype=jnp.bfloat16):
    n, cin, h, w = x_nchw.shape
    cmid = params["w1"].shape[1]
    cexp = params["w3"].shape[1]
    cin_p, cmid_p, cexp_p = (_round_up(c, LANE) for c in (cin, cmid, cexp))
    ho = (h - 1) // stride + 1
    wo = (w - 1) // stride + 1
    m1 = n * h * w
    m2 = n * ho * wo

    # ---- layout glue: NCHW -> NHWC once, zero-pad channels to 128 lanes ----
    x = jnp.transpose(x_nchw, (0, 2, 3, 1))
    xp = _pad_axis(x, 3, cin_p).astype(compute_dtype)

    w1 = _pad_axis(_pad_axis(params["w1"], 0, cin_p), 1, cmid_p).astype(compute_dtype)
    w2 = _pad_axis(_pad_axis(params["w2"], 2, cmid_p), 3, cmid_p).astype(compute_dtype)
    w3 = _pad_axis(_pad_axis(params["w3"], 0, cmid_p), 1, cexp_p)  # f32 (BN2 folded below)
    ws = _pad_axis(_pad_axis(params["ws"], 0, cin_p), 1, cexp_p).astype(compute_dtype)

    g1 = _pad_vec(params["g1"], cmid_p, 1.0); b1 = _pad_vec(params["b1"], cmid_p, 0.0)
    g2 = _pad_vec(params["g2"], cmid_p, 1.0); b2 = _pad_vec(params["b2"], cmid_p, 0.0)
    g3 = _pad_vec(params["g3"], cexp_p, 1.0); b3 = _pad_vec(params["b3"], cexp_p, 0.0)
    gs = _pad_vec(params["gs"], cexp_p, 1.0); bs = _pad_vec(params["bs"], cexp_p, 0.0)

    zero_mid = jnp.zeros((1, cmid_p), jnp.float32)
    zero_exp = jnp.zeros((1, cexp_p), jnp.float32)

    # ---- conv1 (1x1) + batch stats, then BN1 + ReLU epilogue ----------------
    y1_raw, st1 = matmul_stats(xp.reshape(m1, cin_p), w1, zero_mid,
                               out_dtype=compute_dtype)
    sc1, sh1 = _bn_scale_shift(st1, m1, g1, b1)
    y1n = scale_shift(y1_raw, sc1, sh1, relu=True, out_dtype=compute_dtype)

    # ---- conv2 (3x3, stride, pad=1) + batch stats ---------------------------
    y1sp = jnp.pad(y1n.reshape(n, h, w, cmid_p),
                   ((0, 0), (1, 1), (1, 1), (0, 0)))
    x_ph = _phase_split_w(y1sp, stride)
    y2_raw, st2 = conv3x3_stats(x_ph, w2, stride=stride, ho=ho, wo=wo,
                                out_dtype=compute_dtype)
    sc2, sh2 = _bn_scale_shift(st2, m2, g2, b2)

    # ---- conv3 (1x1 expansion); BN2 folded into weight + bias ---------------
    w3_folded = (sc2.reshape(-1, 1) * w3).astype(compute_dtype)
    bias3 = sh2 @ w3                                           # (1, cexp_p) f32
    y3_raw, st3 = matmul_stats(y2_raw.reshape(m2, cmid_p), w3_folded, bias3,
                               out_dtype=compute_dtype)
    sc3, sh3 = _bn_scale_shift(st3, m2, g3, b3)

    # ---- shortcut: 1x1 stride-s conv + batch stats --------------------------
    # TODO(synk): express this strided spatial subsample through the shortcut
    # matmul's BlockSpec index_map instead of an XLA slice.
    xs = xp[:, ::stride, ::stride, :].reshape(m2, cin_p)
    ys_raw, sts = matmul_stats(xs, ws, zero_exp, out_dtype=compute_dtype)
    scs, shs = _bn_scale_shift(sts, m2, gs, bs)

    # ---- fused BN3 + BN_shortcut + residual add + ReLU ----------------------
    out = dual_bn_add_relu(y3_raw, ys_raw, sc3, sh3, scs, shs,
                           out_dtype=jnp.float32)
    out = out.reshape(n, ho, wo, cexp_p)[..., :cexp]
    return jnp.transpose(out, (0, 3, 1, 2))                    # NHWC -> NCHW


# ---------------------------------------------------------------------------
# Parameter init (deterministic, synthetic) and pure-JAX reference
# ---------------------------------------------------------------------------
def init_params(key, in_ch, out_ch):
    ks = jax.random.split(key, 10)
    cexp = out_ch * 4
    return {
        "w1": jax.random.normal(ks[0], (in_ch, out_ch), jnp.float32) * 0.1,
        "w2": jax.random.normal(ks[1], (3, 3, out_ch, out_ch), jnp.float32) * 0.1,  # HWIO
        "w3": jax.random.normal(ks[2], (out_ch, cexp), jnp.float32) * 0.1,
        "ws": jax.random.normal(ks[3], (in_ch, cexp), jnp.float32) * 0.1,
        "g1": 1.0 + 0.1 * jax.random.normal(ks[4], (out_ch,), jnp.float32),
        "b1": 0.1 * jax.random.normal(ks[5], (out_ch,), jnp.float32),
        "g2": 1.0 + 0.1 * jax.random.normal(ks[6], (out_ch,), jnp.float32),
        "b2": 0.1 * jax.random.normal(ks[7], (out_ch,), jnp.float32),
        "g3": 1.0 + 0.1 * jax.random.normal(ks[8], (cexp,), jnp.float32),
        "b3": 0.1 * jax.random.normal(ks[9], (cexp,), jnp.float32),
        "gs": jnp.ones((cexp,), jnp.float32),
        "bs": jnp.zeros((cexp,), jnp.float32),
    }


def _bn_ref(y_nhwc, gamma, beta):
    mu = jnp.mean(y_nhwc, axis=(0, 1, 2), keepdims=True)
    var = jnp.mean((y_nhwc - mu) ** 2, axis=(0, 1, 2), keepdims=True)
    return (y_nhwc - mu) / jnp.sqrt(var + EPS) * gamma + beta


def bottleneck_reference(x_nchw, params, stride):
    dn = ("NHWC", "HWIO", "NHWC")
    x = jnp.transpose(x_nchw, (0, 2, 3, 1))
    y = jax.lax.conv_general_dilated(x, params["w1"][None, None], (1, 1),
                                     "VALID", dimension_numbers=dn)
    y = jax.nn.relu(_bn_ref(y, params["g1"], params["b1"]))
    y = jax.lax.conv_general_dilated(y, params["w2"], (stride, stride),
                                     [(1, 1), (1, 1)], dimension_numbers=dn)
    y = _bn_ref(y, params["g2"], params["b2"])
    y = jax.lax.conv_general_dilated(y, params["w3"][None, None], (1, 1),
                                     "VALID", dimension_numbers=dn)
    y = _bn_ref(y, params["g3"], params["b3"])
    s = jax.lax.conv_general_dilated(x, params["ws"][None, None],
                                     (stride, stride), "VALID",
                                     dimension_numbers=dn)
    s = _bn_ref(s, params["gs"], params["bs"])
    return jnp.transpose(jax.nn.relu(y + s), (0, 3, 1, 2))


# ---------------------------------------------------------------------------
if __name__ == "__main__":
    key = jax.random.PRNGKey(0)
    k_x, k_p = jax.random.split(key)

    N, IN_CH, OUT_CH, H, W, STRIDE = 2, 4, 4, 16, 16, 2
    x = jax.random.normal(k_x, (N, IN_CH, H, W), jnp.float32)   # NCHW like PyTorch
    params = init_params(k_p, IN_CH, OUT_CH)

    ref = jax.block_until_ready(bottleneck_reference(x, params, STRIDE))
    ho, wo = (H - 1) // STRIDE + 1, (W - 1) // STRIDE + 1

    # f32 compute path: tight check against the pure-JAX reference.
    out_f32 = jax.block_until_ready(
        bottleneck_forward(x, params, stride=STRIDE, compute_dtype=jnp.float32))
    assert out_f32.shape == (N, OUT_CH * 4, ho, wo), out_f32.shape
    assert jnp.allclose(out_f32, ref, atol=2e-3, rtol=2e-3), float(
        jnp.max(jnp.abs(out_f32 - ref)))

    # bf16 MXU-operand path (default / performance path): bf16 rounding vs the
    # f32 reference through 3 stacked convs + BNs -> looser tolerance.
    out_bf16 = jax.block_until_ready(
        bottleneck_forward(x, params, stride=STRIDE, compute_dtype=jnp.bfloat16))
    assert out_bf16.shape == (N, OUT_CH * 4, ho, wo), out_bf16.shape
    assert jnp.allclose(out_bf16, ref, atol=8e-2, rtol=8e-2), float(
        jnp.max(jnp.abs(out_bf16 - ref)))

    print("KERNEL_OK")
</pallas_src>

<mosaic_0001>
module attributes {stable_mosaic.version = 11 : i64} {
  func.func @_matmul_stats_kernel(%arg0: i32, %arg1: i32, %arg2: memref<256x128xf32, #tpu.memory_space<vmem>>, %arg3: memref<128x128xf32, #tpu.memory_space<vmem>>, %arg4: memref<1x128xf32, #tpu.memory_space<vmem>>, %arg5: memref<256x128xf32, #tpu.memory_space<vmem>>, %arg6: memref<1x2x128xf32, #tpu.memory_space<vmem>>, %arg7: memref<256x128xf32, #tpu.memory_space<vmem>>) attributes {dimension_semantics = [#tpu.dimension_semantics<parallel>, #tpu.dimension_semantics<arbitrary>], iteration_bounds = array<i64: 2, 1>, scalar_prefetch = 0 : i64, scratch_operands = 1 : i64, tpu.core_type = #tpu.core_type<tc>, window_params = [{transform_indices = @transform_0, window_bounds = array<i64: 256, 128>}, {transform_indices = @transform_1, window_bounds = array<i64: 128, 128>}, {pipeline_mode = #tpu.pipeline_mode<synchronous>, transform_indices = @transform_2, window_bounds = array<i64: 1, 128>}, {transform_indices = @transform_3, window_bounds = array<i64: 256, 128>}, {transform_indices = @transform_4, window_bounds = array<i64: 1, 2, 128>}]} {
    %c0_i32 = arith.constant 0 : i32
    %0 = arith.cmpi eq, %arg1, %c0_i32 : i32
    %1 = arith.extui %0 : i1 to i32
    %c0_i32_0 = arith.constant 0 : i32
    %2 = arith.cmpi ne, %1, %c0_i32_0 : i32
    scf.if %2 {
      %cst_10 = arith.constant 0.000000e+00 : f32
      %12 = vector.broadcast %cst_10 : f32 to vector<256x128xf32>
      %c0_11 = arith.constant 0 : index
      %c0_12 = arith.constant 0 : index
      %13 = vector.load %arg7[%c0_11, %c0_12] : memref<256x128xf32, #tpu.memory_space<vmem>>, vector<256x128xf32>
      tpu.vector_store %arg7[%c0_11, %c0_12], %12 {strides = array<i32>} : memref<256x128xf32, #tpu.memory_space<vmem>>, vector<256x128xf32>,
    } else {
    }
    %c0 = arith.constant 0 : index
    %c0_1 = arith.constant 0 : index
    %3 = vector.load %arg7[%c0, %c0_1] : memref<256x128xf32, #tpu.memory_space<vmem>>, vector<256x128xf32>
    %c0_2 = arith.constant 0 : index
    %c0_3 = arith.constant 0 : index
    %4 = vector.load %arg2[%c0_2, %c0_3] : memref<256x128xf32, #tpu.memory_space<vmem>>, vector<256x128xf32>
    %c0_4 = arith.constant 0 : index
    %c0_5 = arith.constant 0 : index
    %5 = vector.load %arg3[%c0_4, %c0_5] : memref<128x128xf32, #tpu.memory_space<vmem>>, vector<128x128xf32>
    %cst = arith.constant dense<0.000000e+00> : vector<256x128xf32>
    %6 = tpu.matmul %4, %5, %cst {dimension_numbers = #tpu.dot_dimension_numbers<[1], [0], [0], [1], [0, 0, 1, 1], [], []>} : vector<256x128xf32>, vector<128x128xf32>, vector<256x128xf32> -> vector<256x128xf32>
    %7 = arith.addf %3, %6 : vector<256x128xf32>
    %c0_6 = arith.constant 0 : index
    %c0_7 = arith.constant 0 : index
    %8 = vector.load %arg7[%c0_6, %c0_7] : memref<256x128xf32, #tpu.memory_space<vmem>>, vector<256x128xf32>
    tpu.vector_store %arg7[%c0_6, %c0_7], %7 {strides = array<i32>} : memref<256x128xf32, #tpu.memory_space<vmem>>, vector<256x128xf32>,
    %c0_i32_8 = arith.constant 0 : i32
    %9 = arith.cmpi eq, %arg1, %c0_i32_8 : i32
    %10 = arith.extui %9 : i1 to i32
    %c0_i32_9 = arith.constant 0 : i32
    %11 = arith.cmpi ne, %10, %c0_i32_9 : i32
    scf.if %11 {
      %c0_10 = arith.constant 0 : index
      %c0_11 = arith.constant 0 : index
      %12 = vector.load %arg7[%c0_10, %c0_11] : memref<256x128xf32, #tpu.memory_space<vmem>>, vector<256x128xf32>
      %c0_12 = arith.constant 0 : index
      %c0_13 = arith.constant 0 : index
      %13 = vector.load %arg4[%c0_12, %c0_13] : memref<1x128xf32, #tpu.memory_space<vmem>>, vector<1x128xf32>
      %14 = vector.broadcast %13 : vector<1x128xf32> to vector<256x128xf32>
      %15 = arith.addf %12, %14 : vector<256x128xf32>
      %c0_14 = arith.constant 0 : index
      %c0_15 = arith.constant 0 : index
      %16 = vector.load %arg5[%c0_14, %c0_15] : memref<256x128xf32, #tpu.memory_space<vmem>>, vector<256x128xf32>
      tpu.vector_store %arg5[%c0_14, %c0_15], %15 {strides = array<i32>} : memref<256x128xf32, #tpu.memory_space<vmem>>, vector<256x128xf32>,
      %cst_16 = arith.constant dense<0.000000e+00> : vector<128xf32>
      %17 = vector.multi_reduction <add>, %15, %cst_16 [0] : vector<256x128xf32> to vector<128xf32>
      %18 = vector.shape_cast %17 : vector<128xf32> to vector<1x128xf32>
      %c0_17 = arith.constant 0 : index
      %c0_18 = arith.constant 0 : index
      %c0_19 = arith.constant 0 : index
      %19 = vector.load %arg6[%c0_17, %c0_18, %c0_19] : memref<1x2x128xf32, #tpu.memory_space<vmem>>, vector<1x1x128xf32>
      %20 = vector.shape_cast %19 : vector<1x1x128xf32> to vector<1x128xf32>
      %21 = vector.shape_cast %18 : vector<1x128xf32> to vector<1x1x128xf32>
      tpu.vector_store %arg6[%c0_17, %c0_18, %c0_19], %21 {strides = array<i32>} : memref<1x2x128xf32, #tpu.memory_space<vmem>>, vector<1x1x128xf32>,
      %22 = arith.mulf %15, %15 : vector<256x128xf32>
      %cst_20 = arith.constant dense<0.000000e+00> : vector<128xf32>
      %23 = vector.multi_reduction <add>, %22, %cst_20 [0] : vector<256x128xf32> to vector<128xf32>
      %24 = vector.shape_cast %23 : vector<128xf32> to vector<1x128xf32>
      %c0_21 = arith.constant 0 : index
      %c1 = arith.constant 1 : index
      %c0_22 = arith.constant 0 : index
      %25 = vector.load %arg6[%c0_21, %c1, %c0_22] : memref<1x2x128xf32, #tpu.memory_space<vmem>>, vector<1x1x128xf32>
      %26 = vector.shape_cast %25 : vector<1x1x128xf32> to vector<1x128xf32>
      %27 = vector.shape_cast %24 : vector<1x128xf32> to vector<1x1x128xf32>
      tpu.vector_store %arg6[%c0_21, %c1, %c0_22], %27 {strides = array<i32>} : memref<1x2x128xf32, #tpu.memory_space<vmem>>, vector<1x1x128xf32>,
    } else {
    }
    return
  }
  func.func @transform_0(%arg0: i32, %arg1: i32) -> (i32, i32) {
    %c0_i32 = arith.constant 0 : i32
    return %arg0, %arg1 : i32, i32
  }
  func.func @transform_1(%arg0: i32, %arg1: i32) -> (i32, i32) {
    %c0_i32 = arith.constant 0 : i32
    %c0_i32_0 = arith.constant 0 : i32
    return %arg1, %c0_i32 : i32, i32
  }
  func.func @transform_2(%arg0: i32, %arg1: i32) -> (i32, i32) {
    %c0_i32 = arith.constant 0 : i32
    %c0_i32_0 = arith.constant 0 : i32
    %c0_i32_1 = arith.constant 0 : i32
    return %c0_i32, %c0_i32_0 : i32, i32
  }
  func.func @transform_3(%arg0: i32, %arg1: i32) -> (i32, i32) {
    %c0_i32 = arith.constant 0 : i32
    %c0_i32_0 = arith.constant 0 : i32
    return %arg0, %c0_i32 : i32, i32
  }
  func.func @transform_4(%arg0: i32, %arg1: i32) -> (i32, i32, i32) {
    %c0_i32 = arith.constant 0 : i32
    %c0_i32_0 = arith.constant 0 : i32
    %c0_i32_1 = arith.constant 0 : i32
    return %arg0, %c0_i32, %c0_i32_0 : i32, i32, i32
  }
}

module attributes {stable_mosaic.version = 11 : i64} {
  func.func @_scale_shift_kernel(%arg0: i32, %arg1: memref<512x128xf32, #tpu.memory_space<vmem>>, %arg2: memref<1x128xf32, #tpu.memory_space<vmem>>, %arg3: memref<1x128xf32, #tpu.memory_space<vmem>>, %arg4: memref<512x128xf32, #tpu.memory_space<vmem>>) attributes {dimension_semantics = [#tpu.dimension_semantics<parallel>], iteration_bounds = array<i64: 1>, scalar_prefetch = 0 : i64, scratch_operands = 0 : i64, tpu.core_type = #tpu.core_type<tc>, window_params = [{transform_indices = @transform_0, window_bounds = array<i64: 512, 128>}, {pipeline_mode = #tpu.pipeline_mode<synchronous>, transform_indices = @transform_1, window_bounds = array<i64: 1, 128>}, {pipeline_mode = #tpu.pipeline_mode<synchronous>, transform_indices = @transform_2, window_bounds = array<i64: 1, 128>}, {transform_indices = @transform_3, window_bounds = array<i64: 512, 128>}]} {
    %c0 = arith.constant 0 : index
    %c0_0 = arith.constant 0 : index
    %0 = vector.load %arg1[%c0, %c0_0] : memref<512x128xf32, #tpu.memory_space<vmem>>, vector<512x128xf32>
    %c0_1 = arith.constant 0 : index
    %c0_2 = arith.constant 0 : index
    %1 = vector.load %arg2[%c0_1, %c0_2] : memref<1x128xf32, #tpu.memory_space<vmem>>, vector<1x128xf32>
    %2 = vector.broadcast %1 : vector<1x128xf32> to vector<512x128xf32>
    %3 = arith.mulf %0, %2 : vector<512x128xf32>
    %c0_3 = arith.constant 0 : index
    %c0_4 = arith.constant 0 : index
    %4 = vector.load %arg3[%c0_3, %c0_4] : memref<1x128xf32, #tpu.memory_space<vmem>>, vector<1x128xf32>
    %5 = vector.broadcast %4 : vector<1x128xf32> to vector<512x128xf32>
    %6 = arith.addf %3, %5 : vector<512x128xf32>
    %cst = arith.constant 0.000000e+00 : f32
    %7 = vector.broadcast %cst : f32 to vector<512x128xf32>
    %8 = arith.maximumf %6, %7 : vector<512x128xf32>
    %c0_5 = arith.constant 0 : index
    %c0_6 = arith.constant 0 : index
    %9 = vector.load %arg4[%c0_5, %c0_6] : memref<512x128xf32, #tpu.memory_space<vmem>>, vector<512x128xf32>
    tpu.vector_store %arg4[%c0_5, %c0_6], %8 {strides = array<i32>} : memref<512x128xf32, #tpu.memory_space<vmem>>, vector<512x128xf32>,
    return
  }
  func.func @transform_0(%arg0: i32) -> (i32, i32) {
    %c0_i32 = arith.constant 0 : i32
    %c0_i32_0 = arith.constant 0 : i32
    return %arg0, %c0_i32 : i32, i32
  }
  func.func @transform_1(%arg0: i32) -> (i32, i32) {
    %c0_i32 = arith.constant 0 : i32
    %c0_i32_0 = arith.constant 0 : i32
    %c0_i32_1 = arith.constant 0 : i32
    return %c0_i32, %c0_i32_0 : i32, i32
  }
  func.func @transform_2(%arg0: i32) -> (i32, i32) {
    %c0_i32 = arith.constant 0 : i32
    %c0_i32_0 = arith.constant 0 : i32
    %c0_i32_1 = arith.constant 0 : i32
    return %c0_i32, %c0_i32_0 : i32, i32
  }
  func.func @transform_3(%arg0: i32) -> (i32, i32) {
    %c0_i32 = arith.constant 0 : i32
    %c0_i32_0 = arith.constant 0 : i32
    return %arg0, %c0_i32 : i32, i32
  }
}

module attributes {stable_mosaic.version = 11 : i64} {
  func.func @_conv3x3_stats_kernel(%arg0: i32, %arg1: i32, %arg2: i32, %arg3: memref<1x2x9x128xf32, #tpu.memory_space<vmem>>, %arg4: memref<1x3x128x128xf32, #tpu.memory_space<vmem>>, %arg5: memref<1x1x8x128xf32, #tpu.memory_space<vmem>>, %arg6: memref<1x2x128xf32, #tpu.memory_space<vmem>>, %arg7: memref<8x128xf32, #tpu.memory_space<vmem>>) attributes {dimension_semantics = [#tpu.dimension_semantics<parallel>, #tpu.dimension_semantics<arbitrary>, #tpu.dimension_semantics<arbitrary>], iteration_bounds = array<i64: 2, 8, 3>, scalar_prefetch = 0 : i64, scratch_operands = 1 : i64, tpu.core_type = #tpu.core_type<tc>, window_params = [{transform_indices = @transform_0, window_bounds = array<i64: 1, 2, 9, 128>}, {transform_indices = @transform_1, window_bounds = array<i64: 1, 3, 128, 128>}, {transform_indices = @transform_2, window_bounds = array<i64: 1, 1, 8, 128>}, {transform_indices = @transform_3, window_bounds = array<i64: 1, 2, 128>}]} {
    %c0_i32 = arith.constant 0 : i32
    %0 = arith.cmpi eq, %arg1, %c0_i32 : i32
    %c0_i32_0 = arith.constant 0 : i32
    %1 = arith.cmpi eq, %arg2, %c0_i32_0 : i32
    %2 = arith.andi %0, %1 : i1
    %3 = arith.extui %2 : i1 to i32
    %c0_i32_1 = arith.constant 0 : i32
    %4 = arith.cmpi ne, %3, %c0_i32_1 : i32
    scf.if %4 {
      %cst_32 = arith.constant 0.000000e+00 : f32
      %31 = vector.broadcast %cst_32 : f32 to vector<1x2x128xf32>
      %c0_33 = arith.constant 0 : index
      %c0_34 = arith.constant 0 : index
      %c0_35 = arith.constant 0 : index
      %32 = vector.load %arg6[%c0_33, %c0_34, %c0_35] : memref<1x2x128xf32, #tpu.memory_space<vmem>>, vector<1x2x128xf32>
      tpu.vector_store %arg6[%c0_33, %c0_34, %c0_35], %31 {strides = array<i32>} : memref<1x2x128xf32, #tpu.memory_space<vmem>>, vector<1x2x128xf32>,
    } else {
    }
    %c0_i32_2 = arith.constant 0 : i32
    %5 = arith.cmpi eq, %arg2, %c0_i32_2 : i32
    %6 = arith.extui %5 : i1 to i32
    %c0_i32_3 = arith.constant 0 : i32
    %7 = arith.cmpi ne, %6, %c0_i32_3 : i32
    scf.if %7 {
      %cst_32 = arith.constant 0.000000e+00 : f32
      %31 = vector.broadcast %cst_32 : f32 to vector<8x128xf32>
      %c0_33 = arith.constant 0 : index
      %c0_34 = arith.constant 0 : index
      %32 = vector.load %arg7[%c0_33, %c0_34] : memref<8x128xf32, #tpu.memory_space<vmem>>, vector<8x128xf32>
      tpu.vector_store %arg7[%c0_33, %c0_34], %31 {strides = array<i32>} : memref<8x128xf32, #tpu.memory_space<vmem>>, vector<8x128xf32>,
    } else {
    }
    %c0 = arith.constant 0 : index
    %c0_4 = arith.constant 0 : index
    %c0_5 = arith.constant 0 : index
    %c0_6 = arith.constant 0 : index
    %8 = vector.load %arg3[%c0, %c0_4, %c0_5, %c0_6] : memref<1x2x9x128xf32, #tpu.memory_space<vmem>>, vector<1x1x8x128xf32>
    %9 = vector.shape_cast %8 : vector<1x1x8x128xf32> to vector<8x128xf32>
    %c0_7 = arith.constant 0 : index
    %c0_8 = arith.constant 0 : index
    %c0_9 = arith.constant 0 : index
    %c0_10 = arith.constant 0 : index
    %10 = vector.load %arg4[%c0_7, %c0_8, %c0_9, %c0_10] : memref<1x3x128x128xf32, #tpu.memory_space<vmem>>, vector<1x1x128x128xf32>
    %11 = vector.shape_cast %10 : vector<1x1x128x128xf32> to vector<128x128xf32>
    %cst = arith.constant dense<0.000000e+00> : vector<8x128xf32>
    %12 = tpu.matmul %9, %11, %cst {dimension_numbers = #tpu.dot_dimension_numbers<[1], [0], [0], [1], [0, 0, 1, 1], [], []>} : vector<8x128xf32>, vector<128x128xf32>, vector<8x128xf32> -> vector<8x128xf32>
    %c0_11 = arith.constant 0 : index
    %c1 = arith.constant 1 : index
    %c0_12 = arith.constant 0 : index
    %c0_13 = arith.constant 0 : index
    %13 = vector.load %arg3[%c0_11, %c1, %c0_12, %c0_13] : memref<1x2x9x128xf32, #tpu.memory_space<vmem>>, vector<1x1x8x128xf32>
    %14 = vector.shape_cast %13 : vector<1x1x8x128xf32> to vector<8x128xf32>
    %c0_14 = arith.constant 0 : index
    %c1_15 = arith.constant 1 : index
    %c0_16 = arith.constant 0 : index
    %c0_17 = arith.constant 0 : index
    %15 = vector.load %arg4[%c0_14, %c1_15, %c0_16, %c0_17] : memref<1x3x128x128xf32, #tpu.memory_space<vmem>>, vector<1x1x128x128xf32>
    %16 = vector.shape_cast %15 : vector<1x1x128x128xf32> to vector<128x128xf32>
    %cst_18 = arith.constant dense<0.000000e+00> : vector<8x128xf32>
    %17 = tpu.matmul %14, %16, %cst_18 {dimension_numbers = #tpu.dot_dimension_numbers<[1], [0], [0], [1], [0, 0, 1, 1], [], []>} : vector<8x128xf32>, vector<128x128xf32>, vector<8x128xf32> -> vector<8x128xf32>
    %18 = arith.addf %12, %17 : vector<8x128xf32>
    %c0_19 = arith.constant 0 : index
    %c0_20 = arith.constant 0 : index
    %c1_21 = arith.constant 1 : index
    %c0_22 = arith.constant 0 : index
    %19 = vector.load %arg3[%c0_19, %c0_20, %c1_21, %c0_22] : memref<1x2x9x128xf32, #tpu.memory_space<vmem>>, vector<1x1x8x128xf32>
    %20 = vector.shape_cast %19 : vector<1x1x8x128xf32> to vector<8x128xf32>
    %c0_23 = arith.constant 0 : index
    %c2 = arith.constant 2 : index
    %c0_24 = arith.constant 0 : index
    %c0_25 = arith.constant 0 : index
    %21 = vector.load %arg4[%c0_23, %c2, %c0_24, %c0_25] : memref<1x3x128x128xf32, #tpu.memory_space<vmem>>, vector<1x1x128x128xf32>
    %22 = vector.shape_cast %21 : vector<1x1x128x128xf32> to vector<128x128xf32>
    %cst_26 = arith.constant dense<0.000000e+00> : vector<8x128xf32>
    %23 = tpu.matmul %20, %22, %cst_26 {dimension_numbers = #tpu.dot_dimension_numbers<[1], [0], [0], [1], [0, 0, 1, 1], [], []>} : vector<8x128xf32>, vector<128x128xf32>, vector<8x128xf32> -> vector<8x128xf32>
    %24 = arith.addf %18, %23 : vector<8x128xf32>
    %c0_27 = arith.constant 0 : index
    %c0_28 = arith.constant 0 : index
    %25 = vector.load %arg7[%c0_27, %c0_28] : memref<8x128xf32, #tpu.memory_space<vmem>>, vector<8x128xf32>
    %26 = arith.addf %25, %24 : vector<8x128xf32>
    %c0_29 = arith.constant 0 : index
    %c0_30 = arith.constant 0 : index
    %27 = vector.load %arg7[%c0_29, %c0_30] : memref<8x128xf32, #tpu.memory_space<vmem>>, vector<8x128xf32>
    tpu.vector_store %arg7[%c0_29, %c0_30], %26 {strides = array<i32>} : memref<8x128xf32, #tpu.memory_space<vmem>>, vector<8x128xf32>,
    %c2_i32 = arith.constant 2 : i32
    %28 = arith.cmpi eq, %arg2, %c2_i32 : i32
    %29 = arith.extui %28 : i1 to i32
    %c0_i32_31 = arith.constant 0 : i32
    %30 = arith.cmpi ne, %29, %c0_i32_31 : i32
    scf.if %30 {
      %c0_32 = arith.constant 0 : index
      %c0_33 = arith.constant 0 : index
      %31 = vector.load %arg7[%c0_32, %c0_33] : memref<8x128xf32, #tpu.memory_space<vmem>>, vector<8x128xf32>
      %c0_34 = arith.constant 0 : index
      %c0_35 = arith.constant 0 : index
      %c0_36 = arith.constant 0 : index
      %c0_37 = arith.constant 0 : index
      %32 = vector.load %arg5[%c0_34, %c0_35, %c0_36, %c0_37] : memref<1x1x8x128xf32, #tpu.memory_space<vmem>>, vector<1x1x8x128xf32>
      %33 = vector.shape_cast %32 : vector<1x1x8x128xf32> to vector<8x128xf32>
      %34 = vector.shape_cast %31 : vector<8x128xf32> to vector<1x1x8x128xf32>
      tpu.vector_store %arg5[%c0_34, %c0_35, %c0_36, %c0_37], %34 {strides = array<i32>} : memref<1x1x8x128xf32, #tpu.memory_space<vmem>>, vector<1x1x8x128xf32>,
      %c0_38 = arith.constant 0 : index
      %c0_39 = arith.constant 0 : index
      %c0_40 = arith.constant 0 : index
      %35 = vector.load %arg6[%c0_38, %c0_39, %c0_40] : memref<1x2x128xf32, #tpu.memory_space<vmem>>, vector<1x1x128xf32>
      %36 = vector.shape_cast %35 : vector<1x1x128xf32> to vector<1x128xf32>
      %cst_41 = arith.constant dense<0.000000e+00> : vector<128xf32>
      %37 = vector.multi_reduction <add>, %31, %cst_41 [0] : vector<8x128xf32> to vector<128xf32>
      %38 = vector.shape_cast %37 : vector<128xf32> to vector<1x128xf32>
      %39 = arith.addf %36, %38 : vector<1x128xf32>
      %c0_42 = arith.constant 0 : index
      %c0_43 = arith.constant 0 : index
      %c0_44 = arith.constant 0 : index
      %40 = vector.load %arg6[%c0_42, %c0_43, %c0_44] : memref<1x2x128xf32, #tpu.memory_space<vmem>>, vector<1x1x128xf32>
      %41 = vector.shape_cast %40 : vector<1x1x128xf32> to vector<1x128xf32>
      %42 = vector.shape_cast %39 : vector<1x128xf32> to vector<1x1x128xf32>
      tpu.vector_store %arg6[%c0_42, %c0_43, %c0_44], %42 {strides = array<i32>} : memref<1x2x128xf32, #tpu.memory_space<vmem>>, vector<1x1x128xf32>,
      %c0_45 = arith.constant 0 : index
      %c1_46 = arith.constant 1 : index
      %c0_47 = arith.constant 0 : index
      %43 = vector.load %arg6[%c0_45, %c1_46, %c0_47] : memref<1x2x128xf32, #tpu.memory_space<vmem>>, vector<1x1x128xf32>
      %44 = vector.shape_cast %43 : vector<1x1x128xf32> to vector<1x128xf32>
      %45 = arith.mulf %31, %31 : vector<8x128xf32>
      %cst_48 = arith.constant dense<0.000000e+00> : vector<128xf32>
      %46 = vector.multi_reduction <add>, %45, %cst_48 [0] : vector<8x128xf32> to vector<128xf32>
      %47 = vector.shape_cast %46 : vector<128xf32> to vector<1x128xf32>
      %48 = arith.addf %44, %47 : vector<1x128xf32>
      %c0_49 = arith.constant 0 : index
      %c1_50 = arith.constant 1 : index
      %c0_51 = arith.constant 0 : index
      %49 = vector.load %arg6[%c0_49, %c1_50, %c0_51] : memref<1x2x128xf32, #tpu.memory_space<vmem>>, vector<1x1x128xf32>
      %50 = vector.shape_cast %49 : vector<1x1x128xf32> to vector<1x128xf32>
      %51 = vector.shape_cast %48 : vector<1x128xf32> to vector<1x1x128xf32>
      tpu.vector_store %arg6[%c0_49, %c1_50, %c0_51], %51 {strides = array<i32>} : memref<1x2x128xf32, #tpu.memory_space<vmem>>, vector<1x1x128xf32>,
    } else {
    }
    return
  }
  func.func @transform_0(%arg0: i32, %arg1: i32, %arg2: i32) -> (i32, i32, i32, i32) {
    %c2_i32 = arith.constant 2 : i32
    %0 = arith.muli %arg1, %c2_i32 : i32
    %1 = arith.addi %0, %arg2 : i32
    %c0_i32 = arith.constant 0 : i32
    %c0_i32_0 = arith.constant 0 : i32
    %c0_i32_1 = arith.constant 0 : i32
    return %arg0, %1, %c0_i32, %c0_i32_0 : i32, i32, i32, i32
  }
  func.func @transform_1(%arg0: i32, %arg1: i32, %arg2: i32) -> (i32, i32, i32, i32) {
    %c0_i32 = arith.constant 0 : i32
    %c0_i32_0 = arith.constant 0 : i32
    %c0_i32_1 = arith.constant 0 : i32
    %c0_i32_2 = arith.constant 0 : i32
    return %arg2, %c0_i32, %c0_i32_0, %c0_i32_1 : i32, i32, i32, i32
  }
  func.func @transform_2(%arg0: i32, %arg1: i32, %arg2: i32) -> (i32, i32, i32, i32) {
    %c0_i32 = arith.constant 0 : i32
    %c0_i32_0 = arith.constant 0 : i32
    %c0_i32_1 = arith.constant 0 : i32
    return %arg0, %arg1, %c0_i32, %c0_i32_0 : i32, i32, i32, i32
  }
  func.func @transform_3(%arg0: i32, %arg1: i32, %arg2: i32) -> (i32, i32, i32) {
    %c0_i32 = arith.constant 0 : i32
    %c0_i32_0 = arith.constant 0 : i32
    %c0_i32_1 = arith.constant 0 : i32
    return %arg0, %c0_i32, %c0_i32_0 : i32, i32, i32
  }
}

module attributes {stable_mosaic.version = 11 : i64} {
  func.func @_matmul_stats_kernel(%arg0: i32, %arg1: i32, %arg2: memref<128x128xf32, #tpu.memory_space<vmem>>, %arg3: memref<128x128xf32, #tpu.memory_space<vmem>>, %arg4: memref<1x128xf32, #tpu.memory_space<vmem>>, %arg5: memref<128x128xf32, #tpu.memory_space<vmem>>, %arg6: memref<1x2x128xf32, #tpu.memory_space<vmem>>, %arg7: memref<128x128xf32, #tpu.memory_space<vmem>>) attributes {dimension_semantics = [#tpu.dimension_semantics<parallel>, #tpu.dimension_semantics<arbitrary>], iteration_bounds = array<i64: 1, 1>, scalar_prefetch = 0 : i64, scratch_operands = 1 : i64, tpu.core_type = #tpu.core_type<tc>, window_params = [{transform_indices = @transform_0, window_bounds = array<i64: 128, 128>}, {transform_indices = @transform_1, window_bounds = array<i64: 128, 128>}, {pipeline_mode = #tpu.pipeline_mode<synchronous>, transform_indices = @transform_2, window_bounds = array<i64: 1, 128>}, {transform_indices = @transform_3, window_bounds = array<i64: 128, 128>}, {transform_indices = @transform_4, window_bounds = array<i64: 1, 2, 128>}]} {
    %c0_i32 = arith.constant 0 : i32
    %0 = arith.cmpi eq, %arg1, %c0_i32 : i32
    %1 = arith.extui %0 : i1 to i32
    %c0_i32_0 = arith.constant 0 : i32
    %2 = arith.cmpi ne, %1, %c0_i32_0 : i32
    scf.if %2 {
      %cst_10 = arith.constant 0.000000e+00 : f32
      %12 = vector.broadcast %cst_10 : f32 to vector<128x128xf32>
      %c0_11 = arith.constant 0 : index
      %c0_12 = arith.constant 0 : index
      %13 = vector.load %arg7[%c0_11, %c0_12] : memref<128x128xf32, #tpu.memory_space<vmem>>, vector<128x128xf32>
      tpu.vector_store %arg7[%c0_11, %c0_12], %12 {strides = array<i32>} : memref<128x128xf32, #tpu.memory_space<vmem>>, vector<128x128xf32>,
    } else {
    }
    %c0 = arith.constant 0 : index
    %c0_1 = arith.constant 0 : index
    %3 = vector.load %arg7[%c0, %c0_1] : memref<128x128xf32, #tpu.memory_space<vmem>>, vector<128x128xf32>
    %c0_2 = arith.constant 0 : index
    %c0_3 = arith.constant 0 : index
    %4 = vector.load %arg2[%c0_2, %c0_3] : memref<128x128xf32, #tpu.memory_space<vmem>>, vector<128x128xf32>
    %c0_4 = arith.constant 0 : index
    %c0_5 = arith.constant 0 : index
    %5 = vector.load %arg3[%c0_4, %c0_5] : memref<128x128xf32, #tpu.memory_space<vmem>>, vector<128x128xf32>
    %cst = arith.constant dense<0.000000e+00> : vector<128x128xf32>
    %6 = tpu.matmul %4, %5, %cst {dimension_numbers = #tpu.dot_dimension_numbers<[1], [0], [0], [1], [0, 0, 1, 1], [], []>} : vector<128x128xf32>, vector<128x128xf32>, vector<128x128xf32> -> vector<128x128xf32>
    %7 = arith.addf %3, %6 : vector<128x128xf32>
    %c0_6 = arith.constant 0 : index
    %c0_7 = arith.constant 0 : index
    %8 = vector.load %arg7[%c0_6, %c0_7] : memref<128x128xf32, #tpu.memory_space<vmem>>, vector<128x128xf32>
    tpu.vector_store %arg7[%c0_6, %c0_7], %7 {strides = array<i32>} : memref<128x128xf32, #tpu.memory_space<vmem>>, vector<128x128xf32>,
    %c0_i32_8 = arith.constant 0 : i32
    %9 = arith.cmpi eq, %arg1, %c0_i32_8 : i32
    %10 = arith.extui %9 : i1 to i32
    %c0_i32_9 = arith.constant 0 : i32
    %11 = arith.cmpi ne, %10, %c0_i32_9 : i32
    scf.if %11 {
      %c0_10 = arith.constant 0 : index
      %c0_11 = arith.constant 0 : index
      %12 = vector.load %arg7[%c0_10, %c0_11] : memref<128x128xf32, #tpu.memory_space<vmem>>, vector<128x128xf32>
      %c0_12 = arith.constant 0 : index
      %c0_13 = arith.constant 0 : index
      %13 = vector.load %arg4[%c0_12, %c0_13] : memref<1x128xf32, #tpu.memory_space<vmem>>, vector<1x128xf32>
      %14 = vector.broadcast %13 : vector<1x128xf32> to vector<128x128xf32>
      %15 = arith.addf %12, %14 : vector<128x128xf32>
      %c0_14 = arith.constant 0 : index
      %c0_15 = arith.constant 0 : index
      %16 = vector.load %arg5[%c0_14, %c0_15] : memref<128x128xf32, #tpu.memory_space<vmem>>, vector<128x128xf32>
      tpu.vector_store %arg5[%c0_14, %c0_15], %15 {strides = array<i32>} : memref<128x128xf32, #tpu.memory_space<vmem>>, vector<128x128xf32>,
      %cst_16 = arith.constant dense<0.000000e+00> : vector<128xf32>
      %17 = vector.multi_reduction <add>, %15, %cst_16 [0] : vector<128x128xf32> to vector<128xf32>
      %18 = vector.shape_cast %17 : vector<128xf32> to vector<1x128xf32>
      %c0_17 = arith.constant 0 : index
      %c0_18 = arith.constant 0 : index
      %c0_19 = arith.constant 0 : index
      %19 = vector.load %arg6[%c0_17, %c0_18, %c0_19] : memref<1x2x128xf32, #tpu.memory_space<vmem>>, vector<1x1x128xf32>
      %20 = vector.shape_cast %19 : vector<1x1x128xf32> to vector<1x128xf32>
      %21 = vector.shape_cast %18 : vector<1x128xf32> to vector<1x1x128xf32>
      tpu.vector_store %arg6[%c0_17, %c0_18, %c0_19], %21 {strides = array<i32>} : memref<1x2x128xf32, #tpu.memory_space<vmem>>, vector<1x1x128xf32>,
      %22 = arith.mulf %15, %15 : vector<128x128xf32>
      %cst_20 = arith.constant dense<0.000000e+00> : vector<128xf32>
      %23 = vector.multi_reduction <add>, %22, %cst_20 [0] : vector<128x128xf32> to vector<128xf32>
      %24 = vector.shape_cast %23 : vector<128xf32> to vector<1x128xf32>
      %c0_21 = arith.constant 0 : index
      %c1 = arith.constant 1 : index
      %c0_22 = arith.constant 0 : index
      %25 = vector.load %arg6[%c0_21, %c1, %c0_22] : memref<1x2x128xf32, #tpu.memory_space<vmem>>, vector<1x1x128xf32>
      %26 = vector.shape_cast %25 : vector<1x1x128xf32> to vector<1x128xf32>
      %27 = vector.shape_cast %24 : vector<1x128xf32> to vector<1x1x128xf32>
      tpu.vector_store %arg6[%c0_21, %c1, %c0_22], %27 {strides = array<i32>} : memref<1x2x128xf32, #tpu.memory_space<vmem>>, vector<1x1x128xf32>,
    } else {
    }
    return
  }
  func.func @transform_0(%arg0: i32, %arg1: i32) -> (i32, i32) {
    %c0_i32 = arith.constant 0 : i32
    return %arg0, %arg1 : i32, i32
  }
  func.func @transform_1(%arg0: i32, %arg1: i32) -> (i32, i32) {
    %c0_i32 = arith.constant 0 : i32
    %c0_i32_0 = arith.constant 0 : i32
    return %arg1, %c0_i32 : i32, i32
  }
  func.func @transform_2(%arg0: i32, %arg1: i32) -> (i32, i32) {
    %c0_i32 = arith.constant 0 : i32
    %c0_i32_0 = arith.constant 0 : i32
    %c0_i32_1 = arith.constant 0 : i32
    return %c0_i32, %c0_i32_0 : i32, i32
  }
  func.func @transform_3(%arg0: i32, %arg1: i32) -> (i32, i32) {
    %c0_i32 = arith.constant 0 : i32
    %c0_i32_0 = arith.constant 0 : i32
    return %arg0, %c0_i32 : i32, i32
  }
  func.func @transform_4(%arg0: i32, %arg1: i32) -> (i32, i32, i32) {
    %c0_i32 = arith.constant 0 : i32
    %c0_i32_0 = arith.constant 0 : i32
    %c0_i32_1 = arith.constant 0 : i32
    return %arg0, %c0_i32, %c0_i32_0 : i32, i32, i32
  }
}

module attributes {stable_mosaic.version = 11 : i64} {
  func.func @_dual_bn_add_relu_kernel(%arg0: i32, %arg1: memref<128x128xf32, #tpu.memory_space<vmem>>, %arg2: memref<128x128xf32, #tpu.memory_space<vmem>>, %arg3: memref<1x128xf32, #tpu.memory_space<vmem>>, %arg4: memref<1x128xf32, #tpu.memory_space<vmem>>, %arg5: memref<1x128xf32, #tpu.memory_space<vmem>>, %arg6: memref<1x128xf32, #tpu.memory_space<vmem>>, %arg7: memref<128x128xf32, #tpu.memory_space<vmem>>) attributes {dimension_semantics = [#tpu.dimension_semantics<parallel>], iteration_bounds = array<i64: 1>, scalar_prefetch = 0 : i64, scratch_operands = 0 : i64, tpu.core_type = #tpu.core_type<tc>, window_params = [{transform_indices = @transform_0, window_bounds = array<i64: 128, 128>}, {transform_indices = @transform_1, window_bounds = array<i64: 128, 128>}, {pipeline_mode = #tpu.pipeline_mode<synchronous>, transform_indices = @transform_2, window_bounds = array<i64: 1, 128>}, {pipeline_mode = #tpu.pipeline_mode<synchronous>, transform_indices = @transform_3, window_bounds = array<i64: 1, 128>}, {pipeline_mode = #tpu.pipeline_mode<synchronous>, transform_indices = @transform_4, window_bounds = array<i64: 1, 128>}, {pipeline_mode = #tpu.pipeline_mode<synchronous>, transform_indices = @transform_5, window_bounds = array<i64: 1, 128>}, {transform_indices = @transform_6, window_bounds = array<i64: 128, 128>}]} {
    %c0 = arith.constant 0 : index
    %c0_0 = arith.constant 0 : index
    %0 = vector.load %arg1[%c0, %c0_0] : memref<128x128xf32, #tpu.memory_space<vmem>>, vector<128x128xf32>
    %c0_1 = arith.constant 0 : index
    %c0_2 = arith.constant 0 : index
    %1 = vector.load %arg3[%c0_1, %c0_2] : memref<1x128xf32, #tpu.memory_space<vmem>>, vector<1x128xf32>
    %2 = vector.broadcast %1 : vector<1x128xf32> to vector<128x128xf32>
    %3 = arith.mulf %0, %2 : vector<128x128xf32>
    %c0_3 = arith.constant 0 : index
    %c0_4 = arith.constant 0 : index
    %4 = vector.load %arg4[%c0_3, %c0_4] : memref<1x128xf32, #tpu.memory_space<vmem>>, vector<1x128xf32>
    %5 = vector.broadcast %4 : vector<1x128xf32> to vector<128x128xf32>
    %6 = arith.addf %3, %5 : vector<128x128xf32>
    %c0_5 = arith.constant 0 : index
    %c0_6 = arith.constant 0 : index
    %7 = vector.load %arg2[%c0_5, %c0_6] : memref<128x128xf32, #tpu.memory_space<vmem>>, vector<128x128xf32>
    %c0_7 = arith.constant 0 : index
    %c0_8 = arith.constant 0 : index
    %8 = vector.load %arg5[%c0_7, %c0_8] : memref<1x128xf32, #tpu.memory_space<vmem>>, vector<1x128xf32>
    %9 = vector.broadcast %8 : vector<1x128xf32> to vector<128x128xf32>
    %10 = arith.mulf %7, %9 : vector<128x128xf32>
    %c0_9 = arith.constant 0 : index
    %c0_10 = arith.constant 0 : index
    %11 = vector.load %arg6[%c0_9, %c0_10] : memref<1x128xf32, #tpu.memory_space<vmem>>, vector<1x128xf32>
    %12 = vector.broadcast %11 : vector<1x128xf32> to vector<128x128xf32>
    %13 = arith.addf %10, %12 : vector<128x128xf32>
    %14 = arith.addf %6, %13 : vector<128x128xf32>
    %cst = arith.constant 0.000000e+00 : f32
    %15 = vector.broadcast %cst : f32 to vector<128x128xf32>
    %16 = arith.maximumf %14, %15 : vector<128x128xf32>
    %c0_11 = arith.constant 0 : index
    %c0_12 = arith.constant 0 : index
    %17 = vector.load %arg7[%c0_11, %c0_12] : memref<128x128xf32, #tpu.memory_space<vmem>>, vector<128x128xf32>
    tpu.vector_store %arg7[%c0_11, %c0_12], %16 {strides = array<i32>} : memref<128x128xf32, #tpu.memory_space<vmem>>, vector<128x128xf32>,
    return
  }
  func.func @transform_0(%arg0: i32) -> (i32, i32) {
    %c0_i32 = arith.constant 0 : i32
    %c0_i32_0 = arith.constant 0 : i32
    return %arg0, %c0_i32 : i32, i32
  }
  func.func @transform_1(%arg0: i32) -> (i32, i32) {
    %c0_i32 = arith.constant 0 : i32
    %c0_i32_0 = arith.constant 0 : i32
    return %arg0, %c0_i32 : i32, i32
  }
  func.func @transform_2(%arg0: i32) -> (i32, i32) {
    %c0_i32 = arith.constant 0 : i32
    %c0_i32_0 = arith.constant 0 : i32
    %c0_i32_1 = arith.constant 0 : i32
    return %c0_i32, %c0_i32_0 : i32, i32
  }
  func.func @transform_3(%arg0: i32) -> (i32, i32) {
    %c0_i32 = arith.constant 0 : i32
    %c0_i32_0 = arith.constant 0 : i32
    %c0_i32_1 = arith.constant 0 : i32
    return %c0_i32, %c0_i32_0 : i32, i32
  }
  func.func @transform_4(%arg0: i32) -> (i32, i32) {
    %c0_i32 = arith.constant 0 : i32
    %c0_i32_0 = arith.constant 0 : i32
    %c0_i32_1 = arith.constant 0 : i32
    return %c0_i32, %c0_i32_0 : i32, i32
  }
  func.func @transform_5(%arg0: i32) -> (i32, i32) {
    %c0_i32 = arith.constant 0 : i32
    %c0_i32_0 = arith.constant 0 : i32
    %c0_i32_1 = arith.constant 0 : i32
    return %c0_i32, %c0_i32_0 : i32, i32
  }
  func.func @transform_6(%arg0: i32) -> (i32, i32) {
    %c0_i32 = arith.constant 0 : i32
    %c0_i32_0 = arith.constant 0 : i32
    return %arg0, %c0_i32 : i32, i32
  }
}

</mosaic_0001>

<llo_original>
// kernel: bottleneck_forward.7
$region0: #{bottleneck_forward.7}
  #allocation0 [shape = 'u32[]', space=smem, size = 0x4, offset = 0x4, fixed_abs, tag = 'smem constant byte address 0x4 - core index']
  #allocation1 [shape = 'u32[144,128]{1,0:T(1,128)}', space=vmem, size = 0x12000, scoped, tag = 'internal scratch']
  %s0 = inlined_call_operand.vmem [shape: f32[512,128], index: 0, kind: input, shape index: {}]
  %s1 = inlined_call_operand.vmem [shape: f32[1,128], index: 1, kind: input, shape index: {}]
  %s2 = inlined_call_operand.vmem [shape: f32[1,128], index: 2, kind: input, shape index: {}]
  %s3 = inlined_call_operand.vmem [shape: f32[512,128], index: 3, kind: output, shape index: {}]
  %s4 = sld [smem:[#allocation0]]
  $region22: #{bottleneck_forward.7} parent=0
    _
  %s6 = ssub.s32 1, %s4
  %s7 = scalar_select 0, %s6, %s4
  // Predicated region
  $region2: #{bottleneck_forward.7} parent=0 // pred_check
    _
  $region3: #{bottleneck_forward.7} parent=0 // pred_check_branch
    %9 = sbr.rel (0) target = $region5
  $region4: #{bottleneck_forward.7} parent=0 // pred_region
    _
  $region5: #{bottleneck_forward.7} parent=0 // pred_fallthru
    _
  // Predicated region
  $region6: #{bottleneck_forward.7} parent=0 // pred_check
    _
  $region7: #{bottleneck_forward.7} parent=0 // pred_check_branch
    %11 = sbr.rel (0) target = $region9
  $region8: #{bottleneck_forward.7} parent=0 // pred_region
    _
  $region9: #{bottleneck_forward.7} parent=0 // pred_fallthru
    _
  // Predicated region
  $region10: #{bottleneck_forward.7} parent=0 // pred_check
    _
  $region11: #{bottleneck_forward.7} parent=0 // pred_check_branch
    %13 = sbr.rel (0) target = $region13
  $region12: #{bottleneck_forward.7} parent=0 // pred_region
    _
  $region13: #{bottleneck_forward.7} parent=0 // pred_fallthru
    _
  %v14 = vld [vmem:[%s0] sm:$0xff]
  %v15 = vld [vmem:[%s0 + $0x8] sm:$0xff]
  %v16 = vld [vmem:[%s0 + $0x10] sm:$0xff]
  %v17 = vld [vmem:[%s0 + $0x18] sm:$0xff]
  %v18 = vld [vmem:[%s0 + $0x20] sm:$0xff]
  %v19 = vld [vmem:[%s0 + $0x28] sm:$0xff]
  %v20 = vld [vmem:[%s0 + $0x30] sm:$0xff]
  %v21 = vld [vmem:[%s0 + $0x38] sm:$0xff]
  %v22 = vld [vmem:[%s0 + $0x40] sm:$0xff]
  %v23 = vld [vmem:[%s0 + $0x48] sm:$0xff]
  %v24 = vld [vmem:[%s0 + $0x50] sm:$0xff]
  %v25 = vld [vmem:[%s0 + $0x58] sm:$0xff]
  %v26 = vld [vmem:[%s0 + $0x60] sm:$0xff]
  %v27 = vld [vmem:[%s0 + $0x68] sm:$0xff]
  %v28 = vld [vmem:[%s0 + $0x70] sm:$0xff]
  %v29 = vld [vmem:[%s0 + $0x78] sm:$0xff]
  %v30 = vld [vmem:[%s0 + $0x80] sm:$0xff]
  %v31 = vld [vmem:[%s0 + $0x88] sm:$0xff]
  %v32 = vld [vmem:[%s0 + $0x90] sm:$0xff]
  %v33 = vld [vmem:[%s0 + $0x98] sm:$0xff]
  %v34 = vld [vmem:[%s0 + $0xa0] sm:$0xff]
  %v35 = vld [vmem:[%s0 + $0xa8] sm:$0xff]
  %v36 = vld [vmem:[%s0 + $0xb0] sm:$0xff]
  %v37 = vld [vmem:[%s0 + $0xb8] sm:$0xff]
  %v38 = vld [vmem:[%s0 + $0xc0] sm:$0xff]
  %v39 = vld [vmem:[%s0 + $0xc8] sm:$0xff]
  %v40 = vld [vmem:[%s0 + $0xd0] sm:$0xff]
  %v41 = vld [vmem:[%s0 + $0xd8] sm:$0xff]
  %v42 = vld [vmem:[%s0 + $0xe0] sm:$0xff]
  %v43 = vld [vmem:[%s0 + $0xe8] sm:$0xff]
  %v44 = vld [vmem:[%s0 + $0xf0] sm:$0xff]
  %v45 = vld [vmem:[%s0 + $0xf8] sm:$0xff]
  %v46 = vld [vmem:[%s0 + $0x100] sm:$0xff]
  %v47 = vld [vmem:[%s0 + $0x108] sm:$0xff]
  %v48 = vld [vmem:[%s0 + $0x110] sm:$0xff]
  %v49 = vld [vmem:[%s0 + $0x118] sm:$0xff]
  %v50 = vld [vmem:[%s0 + $0x120] sm:$0xff]
  %v51 = vld [vmem:[%s0 + $0x128] sm:$0xff]
  %v52 = vld [vmem:[%s0 + $0x130] sm:$0xff]
  %v53 = vld [vmem:[%s0 + $0x138] sm:$0xff]
  %v54 = vld [vmem:[%s0 + $0x140] sm:$0xff]
  %v55 = vld [vmem:[%s0 + $0x148] sm:$0xff]
  %v56 = vld [vmem:[%s0 + $0x150] sm:$0xff]
  %v57 = vld [vmem:[%s0 + $0x158] sm:$0xff]
  %v58 = vld [vmem:[%s0 + $0x160] sm:$0xff]
  %v59 = vld [vmem:[%s0 + $0x168] sm:$0xff]
  %v60 = vld [vmem:[%s0 + $0x170] sm:$0xff]
  %v61 = vld [vmem:[%s0 + $0x178] sm:$0xff]
  %v62 = vld [vmem:[%s0 + $0x180] sm:$0xff]
  %v63 = vld [vmem:[%s0 + $0x188] sm:$0xff]
  %v64 = vld [vmem:[%s0 + $0x190] sm:$0xff]
  %v65 = vld [vmem:[%s0 + $0x198] sm:$0xff]
  %v66 = vld [vmem:[%s0 + $0x1a0] sm:$0xff]
  %v67 = vld [vmem:[%s0 + $0x1a8] sm:$0xff]
  %v68 = vld [vmem:[%s0 + $0x1b0] sm:$0xff]
  %v69 = vld [vmem:[%s0 + $0x1b8] sm:$0xff]
  %v70 = vld [vmem:[%s0 + $0x1c0] sm:$0xff]
  %v71 = vld [vmem:[%s0 + $0x1c8] sm:$0xff]
  %v72 = vld [vmem:[%s0 + $0x1d0] sm:$0xff]
  %v73 = vld [vmem:[%s0 + $0x1d8] sm:$0xff]
  %v74 = vld [vmem:[%s0 + $0x1e0] sm:$0xff]
  %v75 = vld [vmem:[%s0 + $0x1e8] sm:$0xff]
  %v76 = vld [vmem:[%s0 + $0x1f0] sm:$0xff]
  %v77 = vld [vmem:[%s0 + $0x1f8] sm:$0xff]
  %v78 = vld [vmem:[%s1] sm:$0x1]
  %v80 = vlaneseq
  %v81 = vshrl.u32 %v80, 7
  %v82 = vsub.s32 0, %v81
  %v83 = vrot.slane %v78, %v82
  %v85 = vmul.f32 %v14, %v83
  %v86 = vmul.f32 %v15, %v83
  %v87 = vmul.f32 %v16, %v83
  %v88 = vmul.f32 %v17, %v83
  %v89 = vmul.f32 %v18, %v83
  %v90 = vmul.f32 %v19, %v83
  %v91 = vmul.f32 %v20, %v83
  %v92 = vmul.f32 %v21, %v83
  %v93 = vmul.f32 %v22, %v83
  %v94 = vmul.f32 %v23, %v83
  %v95 = vmul.f32 %v24, %v83
  %v96 = vmul.f32 %v25, %v83
  %v97 = vmul.f32 %v26, %v83
  %v98 = vmul.f32 %v27, %v83
  %v99 = vmul.f32 %v28, %v83
  %v100 = vmul.f32 %v29, %v83
  %v101 = vmul.f32 %v30, %v83
  %v102 = vmul.f32 %v31, %v83
  %v103 = vmul.f32 %v32, %v83
  %v104 = vmul.f32 %v33, %v83
  %v105 = vmul.f32 %v34, %v83
  %v106 = vmul.f32 %v35, %v83
  %v107 = vmul.f32 %v36, %v83
  %v108 = vmul.f32 %v37, %v83
  %v109 = vmul.f32 %v38, %v83
  %v110 = vmul.f32 %v39, %v83
  %v111 = vmul.f32 %v40, %v83
  %v112 = vmul.f32 %v41, %v83
  %v113 = vmul.f32 %v42, %v83
  %v114 = vmul.f32 %v43, %v83
  %v115 = vmul.f32 %v44, %v83
  %v116 = vmul.f32 %v45, %v83
  %v117 = vmul.f32 %v46, %v83
  %v118 = vmul.f32 %v47, %v83
  %v119 = vmul.f32 %v48, %v83
  %v120 = vmul.f32 %v49, %v83
  %v121 = vmul.f32 %v50, %v83
  %v122 = vmul.f32 %v51, %v83
  %v123 = vmul.f32 %v52, %v83
  %v124 = vmul.f32 %v53, %v83
  %v125 = vmul.f32 %v54, %v83
  %v126 = vmul.f32 %v55, %v83
  %v127 = vmul.f32 %v56, %v83
  %v128 = vmul.f32 %v57, %v83
  %v129 = vmul.f32 %v58, %v83
  %v130 = vmul.f32 %v59, %v83
  %v131 = vmul.f32 %v60, %v83
  %v132 = vmul.f32 %v61, %v83
  %v133 = vmul.f32 %v62, %v83
  %v134 = vmul.f32 %v63, %v83
  %v135 = vmul.f32 %v64, %v83
  %v136 = vmul.f32 %v65, %v83
  %v137 = vmul.f32 %v66, %v83
  %v138 = vmul.f32 %v67, %v83
  %v139 = vmul.f32 %v68, %v83
  %v140 = vmul.f32 %v69, %v83
  %v141 = vmul.f32 %v70, %v83
  %v142 = vmul.f32 %v71, %v83
  %v143 = vmul.f32 %v72, %v83
  %v144 = vmul.f32 %v73, %v83
  %v145 = vmul.f32 %v74, %v83
  %v146 = vmul.f32 %v75, %v83
  %v147 = vmul.f32 %v76, %v83
  %v148 = vmul.f32 %v77, %v83
  %v149 = vld [vmem:[%s2] sm:$0x1]
  %v151 = vlaneseq
  %v152 = vshrl.u32 %v151, 7
  %v153 = vsub.s32 0, %v152
  %v154 = vrot.slane %v149, %v153
  %v156 = vadd.f32 %v85, %v154
  %v157 = vadd.f32 %v86, %v154
  %v158 = vadd.f32 %v87, %v154
  %v159 = vadd.f32 %v88, %v154
  %v160 = vadd.f32 %v89, %v154
  %v161 = vadd.f32 %v90, %v154
  %v162 = vadd.f32 %v91, %v154
  %v163 = vadd.f32 %v92, %v154
  %v164 = vadd.f32 %v93, %v154
  %v165 = vadd.f32 %v94, %v154
  %v166 = vadd.f32 %v95, %v154
  %v167 = vadd.f32 %v96, %v154
  %v168 = vadd.f32 %v97, %v154
  %v169 = vadd.f32 %v98, %v154
  %v170 = vadd.f32 %v99, %v154
  %v171 = vadd.f32 %v100, %v154
  %v172 = vadd.f32 %v101, %v154
  %v173 = vadd.f32 %v102, %v154
  %v174 = vadd.f32 %v103, %v154
  %v175 = vadd.f32 %v104, %v154
  %v176 = vadd.f32 %v105, %v154
  %v177 = vadd.f32 %v106, %v154
  %v178 = vadd.f32 %v107, %v154
  %v179 = vadd.f32 %v108, %v154
  %v180 = vadd.f32 %v109, %v154
  %v181 = vadd.f32 %v110, %v154
  %v182 = vadd.f32 %v111, %v154
  %v183 = vadd.f32 %v112, %v154
  %v184 = vadd.f32 %v113, %v154
  %v185 = vadd.f32 %v114, %v154
  %v186 = vadd.f32 %v115, %v154
  %v187 = vadd.f32 %v116, %v154
  %v188 = vadd.f32 %v117, %v154
  %v189 = vadd.f32 %v118, %v154
  %v190 = vadd.f32 %v119, %v154
  %v191 = vadd.f32 %v120, %v154
  %v192 = vadd.f32 %v121, %v154
  %v193 = vadd.f32 %v122, %v154
  %v194 = vadd.f32 %v123, %v154
  %v195 = vadd.f32 %v124, %v154
  %v196 = vadd.f32 %v125, %v154
  %v197 = vadd.f32 %v126, %v154
  %v198 = vadd.f32 %v127, %v154
  %v199 = vadd.f32 %v128, %v154
  %v200 = vadd.f32 %v129, %v154
  %v201 = vadd.f32 %v130, %v154
  %v202 = vadd.f32 %v131, %v154
  %v203 = vadd.f32 %v132, %v154
  %v204 = vadd.f32 %v133, %v154
  %v205 = vadd.f32 %v134, %v154
  %v206 = vadd.f32 %v135, %v154
  %v207 = vadd.f32 %v136, %v154
  %v208 = vadd.f32 %v137, %v154
  %v209 = vadd.f32 %v138, %v154
  %v210 = vadd.f32 %v139, %v154
  %v211 = vadd.f32 %v140, %v154
  %v212 = vadd.f32 %v141, %v154
  %v213 = vadd.f32 %v142, %v154
  %v214 = vadd.f32 %v143, %v154
  %v215 = vadd.f32 %v144, %v154
  %v216 = vadd.f32 %v145, %v154
  %v217 = vadd.f32 %v146, %v154
  %v218 = vadd.f32 %v147, %v154
  %v219 = vadd.f32 %v148, %v154
  %v220 = vmax.f32 %v156, 0.0
  %v221 = vmax.f32 %v157, 0.0
  %v222 = vmax.f32 %v158, 0.0
  %v223 = vmax.f32 %v159, 0.0
  %v224 = vmax.f32 %v160, 0.0
  %v225 = vmax.f32 %v161, 0.0
  %v226 = vmax.f32 %v162, 0.0
  %v227 = vmax.f32 %v163, 0.0
  %v228 = vmax.f32 %v164, 0.0
  %v229 = vmax.f32 %v165, 0.0
  %v230 = vmax.f32 %v166, 0.0
  %v231 = vmax.f32 %v167, 0.0
  %v232 = vmax.f32 %v168, 0.0
  %v233 = vmax.f32 %v169, 0.0
  %v234 = vmax.f32 %v170, 0.0
  %v235 = vmax.f32 %v171, 0.0
  %v236 = vmax.f32 %v172, 0.0
  %v237 = vmax.f32 %v173, 0.0
  %v238 = vmax.f32 %v174, 0.0
  %v239 = vmax.f32 %v175, 0.0
  %v240 = vmax.f32 %v176, 0.0
  %v241 = vmax.f32 %v177, 0.0
  %v242 = vmax.f32 %v178, 0.0
  %v243 = vmax.f32 %v179, 0.0
  %v244 = vmax.f32 %v180, 0.0
  %v245 = vmax.f32 %v181, 0.0
  %v246 = vmax.f32 %v182, 0.0
  %v247 = vmax.f32 %v183, 0.0
  %v248 = vmax.f32 %v184, 0.0
  %v249 = vmax.f32 %v185, 0.0
  %v250 = vmax.f32 %v186, 0.0
  %v251 = vmax.f32 %v187, 0.0
  %v252 = vmax.f32 %v188, 0.0
  %v253 = vmax.f32 %v189, 0.0
  %v254 = vmax.f32 %v190, 0.0
  %v255 = vmax.f32 %v191, 0.0
  %v256 = vmax.f32 %v192, 0.0
  %v257 = vmax.f32 %v193, 0.0
  %v258 = vmax.f32 %v194, 0.0
  %v259 = vmax.f32 %v195, 0.0
  %v260 = vmax.f32 %v196, 0.0
  %v261 = vmax.f32 %v197, 0.0
  %v262 = vmax.f32 %v198, 0.0
  %v263 = vmax.f32 %v199, 0.0
  %v264 = vmax.f32 %v200, 0.0
  %v265 = vmax.f32 %v201, 0.0
  %v266 = vmax.f32 %v202, 0.0
  %v267 = vmax.f32 %v203, 0.0
  %v268 = vmax.f32 %v204, 0.0
  %v269 = vmax.f32 %v205, 0.0
  %v270 = vmax.f32 %v206, 0.0
  %v271 = vmax.f32 %v207, 0.0
  %v272 = vmax.f32 %v208, 0.0
  %v273 = vmax.f32 %v209, 0.0
  %v274 = vmax.f32 %v210, 0.0
  %v275 = vmax.f32 %v211, 0.0
  %v276 = vmax.f32 %v212, 0.0
  %v277 = vmax.f32 %v213, 0.0
  %v278 = vmax.f32 %v214, 0.0
  %v279 = vmax.f32 %v215, 0.0
  %v280 = vmax.f32 %v216, 0.0
  %v281 = vmax.f32 %v217, 0.0
  %v282 = vmax.f32 %v218, 0.0
  %v283 = vmax.f32 %v219, 0.0
  %284 = vst [vmem:[%s3] sm:$0xff] %v220
  %285 = vst [vmem:[%s3 + $0x8] sm:$0xff] %v221
  %286 = vst [vmem:[%s3 + $0x10] sm:$0xff] %v222
  %287 = vst [vmem:[%s3 + $0x18] sm:$0xff] %v223
  %288 = vst [vmem:[%s3 + $0x20] sm:$0xff] %v224
  %289 = vst [vmem:[%s3 + $0x28] sm:$0xff] %v225
  %290 = vst [vmem:[%s3 + $0x30] sm:$0xff] %v226
  %291 = vst [vmem:[%s3 + $0x38] sm:$0xff] %v227
  %292 = vst [vmem:[%s3 + $0x40] sm:$0xff] %v228
  %293 = vst [vmem:[%s3 + $0x48] sm:$0xff] %v229
  %294 = vst [vmem:[%s3 + $0x50] sm:$0xff] %v230
  %295 = vst [vmem:[%s3 + $0x58] sm:$0xff] %v231
  %296 = vst [vmem:[%s3 + $0x60] sm:$0xff] %v232
  %297 = vst [vmem:[%s3 + $0x68] sm:$0xff] %v233
  %298 = vst [vmem:[%s3 + $0x70] sm:$0xff] %v234
  %299 = vst [vmem:[%s3 + $0x78] sm:$0xff] %v235
  %300 = vst [vmem:[%s3 + $0x80] sm:$0xff] %v236
  %301 = vst [vmem:[%s3 + $0x88] sm:$0xff] %v237
  %302 = vst [vmem:[%s3 + $0x90] sm:$0xff] %v238
  %303 = vst [vmem:[%s3 + $0x98] sm:$0xff] %v239
  %304 = vst [vmem:[%s3 + $0xa0] sm:$0xff] %v240
  %305 = vst [vmem:[%s3 + $0xa8] sm:$0xff] %v241
  %306 = vst [vmem:[%s3 + $0xb0] sm:$0xff] %v242
  %307 = vst [vmem:[%s3 + $0xb8] sm:$0xff] %v243
  %308 = vst [vmem:[%s3 + $0xc0] sm:$0xff] %v244
  %309 = vst [vmem:[%s3 + $0xc8] sm:$0xff] %v245
  %310 = vst [vmem:[%s3 + $0xd0] sm:$0xff] %v246
  %311 = vst [vmem:[%s3 + $0xd8] sm:$0xff] %v247
  %312 = vst [vmem:[%s3 + $0xe0] sm:$0xff] %v248
  %313 = vst [vmem:[%s3 + $0xe8] sm:$0xff] %v249
  %314 = vst [vmem:[%s3 + $0xf0] sm:$0xff] %v250
  %315 = vst [vmem:[%s3 + $0xf8] sm:$0xff] %v251
  %316 = vst [vmem:[%s3 + $0x100] sm:$0xff] %v252
  %317 = vst [vmem:[%s3 + $0x108] sm:$0xff] %v253
  %318 = vst [vmem:[%s3 + $0x110] sm:$0xff] %v254
  %319 = vst [vmem:[%s3 + $0x118] sm:$0xff] %v255
  %320 = vst [vmem:[%s3 + $0x120] sm:$0xff] %v256
  %321 = vst [vmem:[%s3 + $0x128] sm:$0xff] %v257
  %322 = vst [vmem:[%s3 + $0x130] sm:$0xff] %v258
  %323 = vst [vmem:[%s3 + $0x138] sm:$0xff] %v259
  %324 = vst [vmem:[%s3 + $0x140] sm:$0xff] %v260
  %325 = vst [vmem:[%s3 + $0x148] sm:$0xff] %v261
  %326 = vst [vmem:[%s3 + $0x150] sm:$0xff] %v262
  %327 = vst [vmem:[%s3 + $0x158] sm:$0xff] %v263
  %328 = vst [vmem:[%s3 + $0x160] sm:$0xff] %v264
  %329 = vst [vmem:[%s3 + $0x168] sm:$0xff] %v265
  %330 = vst [vmem:[%s3 + $0x170] sm:$0xff] %v266
  %331 = vst [vmem:[%s3 + $0x178] sm:$0xff] %v267
  %332 = vst [vmem:[%s3 + $0x180] sm:$0xff] %v268
  %333 = vst [vmem:[%s3 + $0x188] sm:$0xff] %v269
  %334 = vst [vmem:[%s3 + $0x190] sm:$0xff] %v270
  %335 = vst [vmem:[%s3 + $0x198] sm:$0xff] %v271
  %336 = vst [vmem:[%s3 + $0x1a0] sm:$0xff] %v272
  %337 = vst [vmem:[%s3 + $0x1a8] sm:$0xff] %v273
  %338 = vst [vmem:[%s3 + $0x1b0] sm:$0xff] %v274
  %339 = vst [vmem:[%s3 + $0x1b8] sm:$0xff] %v275
  %340 = vst [vmem:[%s3 + $0x1c0] sm:$0xff] %v276
  %341 = vst [vmem:[%s3 + $0x1c8] sm:$0xff] %v277
  %342 = vst [vmem:[%s3 + $0x1d0] sm:$0xff] %v278
  %343 = vst [vmem:[%s3 + $0x1d8] sm:$0xff] %v279
  %344 = vst [vmem:[%s3 + $0x1e0] sm:$0xff] %v280
  %345 = vst [vmem:[%s3 + $0x1e8] sm:$0xff] %v281
  %346 = vst [vmem:[%s3 + $0x1f0] sm:$0xff] %v282
  %347 = vst [vmem:[%s3 + $0x1f8] sm:$0xff] %v283
  // Predicated region
  $region14: #{bottleneck_forward.7} parent=0 // pred_check
    _
  $region15: #{bottleneck_forward.7} parent=0 // pred_check_branch
    %349 = sbr.rel (0) target = $region17
  $region16: #{bottleneck_forward.7} parent=0 // pred_region
    _
  $region17: #{bottleneck_forward.7} parent=0 // pred_fallthru
    _
  // Predicated region
  $region18: #{bottleneck_forward.7} parent=0 // pred_check
    _
  $region19: #{bottleneck_forward.7} parent=0 // pred_check_branch
    %351 = sbr.rel (0) target = $region21
  $region20: #{bottleneck_forward.7} parent=0 // pred_region
    _
  $region21: #{bottleneck_forward.7} parent=0 // pred_fallthru
    _

// kernel: bottleneck_forward.6
$region0: #{bottleneck_forward.6}
  #allocation0 [shape = 'u32[]', space=smem, size = 0x4, offset = 0x4, fixed_abs, tag = 'smem constant byte address 0x4 - core index']
  #allocation1 [shape = 'u32[144,128]{1,0:T(1,128)}', space=vmem, size = 0x12000, scoped, tag = 'internal scratch']
  #allocation2 [shape = 'f32[256,128]{1,0:T(8,128)}', space=vmem, size = 0x20000, scoped, tag = 'scratch operand']
  %s0 = inlined_call_operand.vmem [shape: f32[512,128], index: 0, kind: input, shape index: {}]
  %s1 = inlined_call_operand.vmem [shape: f32[128,128], index: 1, kind: input, shape index: {}]
  %s2 = inlined_call_operand.vmem [shape: f32[1,128], index: 2, kind: input, shape index: {}]
  %s3 = inlined_call_operand.vmem [shape: f32[512,128], index: 3, kind: output, shape index: {0}]
  %s4 = inlined_call_operand.vmem [shape: f32[2,2,128], index: 4, kind: output, shape index: {1}]
  %5 = xla_tuple %s3, %s4
  %s6 = sld [smem:[#allocation0]]
  $region61: #{bottleneck_forward.6} parent=0
    _
  %s8 = ssub.s32 1, %s6
  %s9 = scalar_select 0, %s8, %s6
  loop: start=0, step=1, limit=4
  $region2: #{bottleneck_forward.6} parent=0 // loop_pre_header
    _
  $region3: #{bottleneck_forward.6} parent=0 // loop_header
    %s11 = sphi 0, %s15
    %p12 = scmp.ge.s32.totalorder %s11, 4
    %s18 = sphi 0, %s30
    %s19 = sphi 0, %s26
    %s20 = sphi 0, %s18
    %s21 = sphi 0, %s19
    %s22 = sphi 0, %s20
    %s23 = sphi 0, %s21
    %s35 = sphi 0, %s37
    %s38 = sphi 0, %s35
    %s39 = sphi 0, %s38
    %s55 = sphi 0, %s39
    %s61 = sphi 0, %s63
    %s64 = sphi 0, %s61
    %s65 = sphi 0, %s64
    %s81 = sphi 0, %s65
    %s85 = sphi 0, %s85
    %s87 = sphi 0, %s85
    %s88 = sphi 0, %s87
    %s102 = sphi 0, %s88
    %s108 = sphi 0, %s110
    %s111 = sphi 0, %s108
    %s112 = sphi 0, %s111
    %s128 = sphi 0, %s112
    %s134 = sphi 0, %s136
    %s137 = sphi 0, %s134
    %s138 = sphi 0, %s137
    %s154 = sphi 0, %s138
  $region4: #{bottleneck_forward.6} parent=0 // loop_header_branch
    %14 = sbr.rel (%p12) target = $region8
  $region5: #{bottleneck_forward.6} parent=0 // loop_body
    %s16 = ssub.s32 %s11, 1
    %s17 = ssub.s32 %s11, 2
    %s24 = sadd.s32 1, %s19
    %p25 = scmp.ge.s32.totalorder %s24, 1
    %s26 = scalar_select %p25, 0, %s24
    %s27 = sadd.s32 1, %s18
    %s28 = scalar_select %p25, %s27, %s18
    %p29 = scmp.ge.s32.totalorder %s28, 2
    %s30 = scalar_select %p29, 0, %s28
    %s31 = ssub.s32 %s18, %s30
    %s32 = ssub.s32 %s19, %s26
    %s33 = sor.u32 %s31, %s32
    %p34 = scmp.eq.s32.totalorder %s33, 0
    %s36 = sadd.s32 %s35, 1
    %s37 = scalar_select %p34, %s35, %s36
    %p40 = pneg %p34
    %p41 = scmp.eq.s32.totalorder %s11, 1
    %p42 = por %p40, %p41
    %p43 = scmp.ne.s32.totalorder %s35, %s38
    %p44 = scmp.eq.s32.totalorder %s11, 0
    %p45 = por %p43, %p44
    %p46 = scmp.ne.s32.totalorder %s35, %s38
    %p47 = scmp.eq.s32.totalorder %s16, 1
    %p48 = por %p46, %p47
    %p49 = scmp.ne.s32.totalorder %s38, %s39
    %p50 = scmp.eq.s32.totalorder %s16, 0
    %p51 = por %p49, %p50
    %p52 = scmp.ne.s32.totalorder %s38, %s39
    %p53 = scmp.eq.s32.totalorder %s17, 1
    %p54 = por %p52, %p53
    %p56 = scmp.ne.s32.totalorder %s39, %s55
    %p57 = scmp.eq.s32.totalorder %s17, 0
    %p58 = por %p56, %p57
    %s59 = ssub.s32 %s19, %s26
    %p60 = scmp.eq.s32.totalorder %s59, 0
    %s62 = sadd.s32 %s61, 1
    %s63 = scalar_select %p60, %s61, %s62
    %p66 = pneg %p60
    %p67 = scmp.eq.s32.totalorder %s11, 1
    %p68 = por %p66, %p67
    %p69 = scmp.ne.s32.totalorder %s61, %s64
    %p70 = scmp.eq.s32.totalorder %s11, 0
    %p71 = por %p69, %p70
    %p72 = scmp.ne.s32.totalorder %s61, %s64
    %p73 = scmp.eq.s32.totalorder %s16, 1
    %p74 = por %p72, %p73
    %p75 = scmp.ne.s32.totalorder %s64, %s65
    %p76 = scmp.eq.s32.totalorder %s16, 0
    %p77 = por %p75, %p76
    %p78 = scmp.ne.s32.totalorder %s64, %s65
    %p79 = scmp.eq.s32.totalorder %s17, 1
    %p80 = por %p78, %p79
    %p82 = scmp.ne.s32.totalorder %s65, %s81
    %p83 = scmp.eq.s32.totalorder %s17, 0
    %p84 = por %p82, %p83
    %s86 = sadd.s32 %s85, 1
    %p89 = scmp.eq.s32.totalorder %s11, 1
    %p90 = scmp.ne.s32.totalorder %s85, %s87
    %p91 = scmp.eq.s32.totalorder %s11, 0
    %p92 = por %p90, %p91
    %p93 = scmp.ne.s32.totalorder %s85, %s87
    %p94 = scmp.eq.s32.totalorder %s16, 1
    %p95 = por %p93, %p94
    %p96 = scmp.ne.s32.totalorder %s87, %s88
    %p97 = scmp.eq.s32.totalorder %s16, 0
    %p98 = por %p96, %p97
    %p99 = scmp.ne.s32.totalorder %s87, %s88
    %p100 = scmp.eq.s32.totalorder %s17, 1
    %p101 = por %p99, %p100
    %p103 = scmp.ne.s32.totalorder %s88, %s102
    %p104 = scmp.eq.s32.totalorder %s17, 0
    %p105 = por %p103, %p104
    %s106 = ssub.s32 %s18, %s30
    %p107 = scmp.eq.s32.totalorder %s106, 0
    %s109 = sadd.s32 %s108, 1
    %s110 = scalar_select %p107, %s108, %s109
    %p113 = pneg %p107
    %p114 = scmp.eq.s32.totalorder %s11, 1
    %p115 = por %p113, %p114
    %p116 = scmp.ne.s32.totalorder %s108, %s111
    %p117 = scmp.eq.s32.totalorder %s11, 0
    %p118 = por %p116, %p117
    %p119 = scmp.ne.s32.totalorder %s108, %s111
    %p120 = scmp.eq.s32.totalorder %s16, 1
    %p121 = por %p119, %p120
    %p122 = scmp.ne.s32.totalorder %s111, %s112
    %p123 = scmp.eq.s32.totalorder %s16, 0
    %p124 = por %p122, %p123
    %p125 = scmp.ne.s32.totalorder %s111, %s112
    %p126 = scmp.eq.s32.totalorder %s17, 1
    %p127 = por %p125, %p126
    %p129 = scmp.ne.s32.totalorder %s112, %s128
    %p130 = scmp.eq.s32.totalorder %s17, 0
    %p131 = por %p129, %p130
    %s132 = ssub.s32 %s18, %s30
    %p133 = scmp.eq.s32.totalorder %s132, 0
    %s135 = sadd.s32 %s134, 1
    %s136 = scalar_select %p133, %s134, %s135
    %p139 = pneg %p133
    %p140 = scmp.eq.s32.totalorder %s11, 1
    %p141 = por %p139, %p140
    %p142 = scmp.ne.s32.totalorder %s134, %s137
    %p143 = scmp.eq.s32.totalorder %s11, 0
    %p144 = por %p142, %p143
    %p145 = scmp.ne.s32.totalorder %s134, %s137
    %p146 = scmp.eq.s32.totalorder %s16, 1
    %p147 = por %p145, %p146
    %p148 = scmp.ne.s32.totalorder %s137, %s138
    %p149 = scmp.eq.s32.totalorder %s16, 0
    %p150 = por %p148, %p149
    %p151 = scmp.ne.s32.totalorder %s137, %s138
    %p152 = scmp.eq.s32.totalorder %s17, 1
    %p153 = por %p151, %p152
    %p155 = scmp.ne.s32.totalorder %s138, %s154
    %p156 = scmp.eq.s32.totalorder %s17, 0
    %p157 = por %p155, %p156
    %p158 = scmp.le.s32.totalorder 1, %s11
    %p159 = scmp.lt.s32.totalorder %s11, 3
    %p160 = pnand %p158, %p159
    %p161 = pneg %p160
    // Predicated region
    $region9: #{bottleneck_forward.6} parent=5 // pred_check
      _
    $region10: #{bottleneck_forward.6} parent=5 // pred_check_branch
      %163 = sbr.rel (%p160) target = $region12
    $region11: #{bottleneck_forward.6} parent=5 // pred_region
      %s164 = ssub.s32 %s11, 1
      // Predicated region
      $region13: #{bottleneck_forward.6} parent=11 // pred_check
        %p165 = pneg %p77
      $region14: #{bottleneck_forward.6} parent=11 // pred_check_branch
        %167 = sbr.rel (%p165) target = $region16
      $region15: #{bottleneck_forward.6} parent=11 // pred_region
        %s168 = smul.u32 16, %s21
        %p169 = scmp.lt.s32.totalorder %s168, 15
        %s170 = scalar_select %p169, %s168, 15
        %s171 = smul.addr %s170, 8
        %s172 = scalar_lea.vmem %s1, %s171
        %s173 = smul.u32 16, %s21
      $region16: #{bottleneck_forward.6} parent=11 // pred_fallthru
        _
      // Predicated region
      $region17: #{bottleneck_forward.6} parent=11 // pred_check
        %p174 = pneg %p98
      $region18: #{bottleneck_forward.6} parent=11 // pred_check_branch
        %176 = sbr.rel (%p174) target = $region20
      $region19: #{bottleneck_forward.6} parent=11 // pred_region
        _
      $region20: #{bottleneck_forward.6} parent=11 // pred_fallthru
        _
    $region12: #{bottleneck_forward.6} parent=5 // pred_fallthru
      _
    %p177 = scmp.lt.s32.totalorder %s11, 2
    // Predicated region
    $region21: #{bottleneck_forward.6} parent=5 // pred_check
      %p178 = pneg %p177
    $region22: #{bottleneck_forward.6} parent=5 // pred_check_branch
      %180 = sbr.rel (%p178) target = $region24
    $region23: #{bottleneck_forward.6} parent=5 // pred_region
      // Predicated region
      $region25: #{bottleneck_forward.6} parent=23 // pred_check
        %p181 = pneg %p45
      $region26: #{bottleneck_forward.6} parent=23 // pred_check_branch
        %183 = sbr.rel (%p181) target = $region28
      $region27: #{bottleneck_forward.6} parent=23 // pred_region
        %s184 = smul.u32 32, %s18
        %p185 = scmp.lt.s32.totalorder %s184, 63
        %s186 = scalar_select %p185, %s184, 63
        %p187 = scmp.lt.s32.totalorder %s19, 0
        %s188 = scalar_select %p187, %s19, 0
        %s189 = sadd.s32 %s188, %s186
        %s190 = smul.addr %s189, 8
        %s191 = scalar_lea.vmem %s0, %s190
        %s192 = smul.u32 32, %s18
      $region28: #{bottleneck_forward.6} parent=23 // pred_fallthru
        _
    $region24: #{bottleneck_forward.6} parent=5 // pred_fallthru
      _
    %p193 = scmp.le.s32.totalorder 1, %s11
    %p194 = scmp.lt.s32.totalorder %s11, 3
    %p195 = pnand %p193, %p194
    %p196 = pneg %p195
    // Predicated region
    $region29: #{bottleneck_forward.6} parent=5 // pred_check
      _
    $region30: #{bottleneck_forward.6} parent=5 // pred_check_branch
      %198 = sbr.rel (%p195) target = $region32
    $region31: #{bottleneck_forward.6} parent=5 // pred_region
      %s199 = ssub.s32 %s11, 1
      %s200 = smul.u32 32, %s20
      %p201 = scmp.lt.s32.totalorder %s200, 63
      %s202 = scalar_select %p201, %s200, 63
      %p203 = scmp.lt.s32.totalorder %s21, 0
      %s204 = scalar_select %p203, %s21, 0
      %s205 = sadd.s32 %s204, %s202
      %s206 = smul.addr %s205, 8
      %s207 = scalar_lea.vmem %s0, %s206
      %p208 = pneg %p51
      %p209 = pneg %p48
      %s210 = smul.u32 16, %s21
      %p211 = scmp.lt.s32.totalorder %s210, 15
      %s212 = scalar_select %p211, %s210, 15
      %s213 = smul.addr %s212, 8
      %s214 = scalar_lea.vmem %s1, %s213
      %p215 = pneg %p77
      %p216 = pneg %p74
      %p217 = pneg %p98
      %p218 = pneg %p95
      %p219 = pneg %p124
      %p220 = pneg %p121
      %s221 = smul.u32 32, %s20
      %p222 = scmp.lt.s32.totalorder %s221, 63
      %s223 = scalar_select %p222, %s221, 63
      %s224 = smul.addr %s223, 8
      %s225 = scalar_lea.vmem %s3, %s224
      %p226 = pneg %p150
      %p227 = pneg %p147
      %p228 = scmp.lt.s32.totalorder %s20, 1
      %s229 = scalar_select %p228, %s20, 1
      %s230 = smul.addr %s229, 2
      %s231 = scalar_lea.vmem %s4, %s230
      %s232 = smul.u32 32, %s20
      %p233 = scmp.lt.s32.totalorder %s232, 63
      %s234 = scalar_select %p233, %s232, 63
      %p235 = scmp.lt.s32.totalorder %s21, 0
      %s236 = scalar_select %p235, %s21, 0
      %s237 = sadd.s32 %s236, %s234
      %s238 = smul.addr %s237, 8
      %s239 = scalar_lea.vmem %s0, %s238
      %s240 = smul.u32 32, %s20
      %s241 = smul.u32 16, %s21
      %p242 = scmp.lt.s32.totalorder %s241, 15
      %s243 = scalar_select %p242, %s241, 15
      %s244 = smul.addr %s243, 8
      %s245 = scalar_lea.vmem %s1, %s244
      %s246 = smul.u32 16, %s21
      %s247 = smul.u32 32, %s20
      %p248 = scmp.lt.s32.totalorder %s247, 63
      %s249 = scalar_select %p248, %s247, 63
      %s250 = smul.addr %s249, 8
      %s251 = scalar_lea.vmem %s3, %s250
      %s252 = smul.u32 32, %s20
      %p253 = scmp.lt.s32.totalorder %s20, 1
      %s254 = scalar_select %p253, %s20, 1
      %s255 = smul.addr %s254, 2
      %s256 = scalar_lea.vmem %s4, %s255
      %p257 = scmp.eq.s32.totalorder %s21, 0
      // Predicated region
      $region33: #{bottleneck_forward.6} parent=31 // pred_check
        %p258 = pneg %p257
      $region34: #{bottleneck_forward.6} parent=31 // pred_check_branch
        %260 = sbr.rel (%p258) target = $region36
      $region35: #{bottleneck_forward.6} parent=31 // pred_region
        %261 = vst [vmem:[#allocation2] sm:$0xff] 0.0
        %262 = vst [vmem:[#allocation2 + $0x8] sm:$0xff] 0.0
        %263 = vst [vmem:[#allocation2 + $0x10] sm:$0xff] 0.0
        %264 = vst [vmem:[#allocation2 + $0x18] sm:$0xff] 0.0
        %265 = vst [vmem:[#allocation2 + $0x20] sm:$0xff] 0.0
        %266 = vst [vmem:[#allocation2 + $0x28] sm:$0xff] 0.0
        %267 = vst [vmem:[#allocation2 + $0x30] sm:$0xff] 0.0
        %268 = vst [vmem:[#allocation2 + $0x38] sm:$0xff] 0.0
        %269 = vst [vmem:[#allocation2 + $0x40] sm:$0xff] 0.0
        %270 = vst [vmem:[#allocation2 + $0x48] sm:$0xff] 0.0
        %271 = vst [vmem:[#allocation2 + $0x50] sm:$0xff] 0.0
        %272 = vst [vmem:[#allocation2 + $0x58] sm:$0xff] 0.0
        %273 = vst [vmem:[#allocation2 + $0x60] sm:$0xff] 0.0
        %274 = vst [vmem:[#allocation2 + $0x68] sm:$0xff] 0.0
        %275 = vst [vmem:[#allocation2 + $0x70] sm:$0xff] 0.0
        %276 = vst [vmem:[#allocation2 + $0x78] sm:$0xff] 0.0
        %277 = vst [vmem:[#allocation2 + $0x80] sm:$0xff] 0.0
        %278 = vst [vmem:[#allocation2 + $0x88] sm:$0xff] 0.0
        %279 = vst [vmem:[#allocation2 + $0x90] sm:$0xff] 0.0
        %280 = vst [vmem:[#allocation2 + $0x98] sm:$0xff] 0.0
        %281 = vst [vmem:[#allocation2 + $0xa0] sm:$0xff] 0.0
        %282 = vst [vmem:[#allocation2 + $0xa8] sm:$0xff] 0.0
        %283 = vst [vmem:[#allocation2 + $0xb0] sm:$0xff] 0.0
        %284 = vst [vmem:[#allocation2 + $0xb8] sm:$0xff] 0.0
        %285 = vst [vmem:[#allocation2 + $0xc0] sm:$0xff] 0.0
        %286 = vst [vmem:[#allocation2 + $0xc8] sm:$0xff] 0.0
        %287 = vst [vmem:[#allocation2 + $0xd0] sm:$0xff] 0.0
        %288 = vst [vmem:[#allocation2 + $0xd8] sm:$0xff] 0.0
        %289 = vst [vmem:[#allocation2 + $0xe0] sm:$0xff] 0.0
        %290 = vst [vmem:[#allocation2 + $0xe8] sm:$0xff] 0.0
        %291 = vst [vmem:[#allocation2 + $0xf0] sm:$0xff] 0.0
        %292 = vst [vmem:[#allocation2 + $0xf8] sm:$0xff] 0.0
      $region36: #{bottleneck_forward.6} parent=31 // pred_fallthru
        _
      %v293 = vld [vmem:[#allocation2] sm:$0xff]
      %v294 = vld [vmem:[#allocation2 + $0x8] sm:$0xff]
      %v295 = vld [vmem:[#allocation2 + $0x10] sm:$0xff]
      %v296 = vld [vmem:[#allocation2 + $0x18] sm:$0xff]
      %v297 = vld [vmem:[#allocation2 + $0x20] sm:$0xff]
      %v298 = vld [vmem:[#allocation2 + $0x28] sm:$0xff]
      %v299 = vld [vmem:[#allocation2 + $0x30] sm:$0xff]
      %v300 = vld [vmem:[#allocation2 + $0x38] sm:$0xff]
      %v301 = vld [vmem:[#allocation2 + $0x40] sm:$0xff]
      %v302 = vld [vmem:[#allocation2 + $0x48] sm:$0xff]
      %v303 = vld [vmem:[#allocation2 + $0x50] sm:$0xff]
      %v304 = vld [vmem:[#allocation2 + $0x58] sm:$0xff]
      %v305 = vld [vmem:[#allocation2 + $0x60] sm:$0xff]
      %v306 = vld [vmem:[#allocation2 + $0x68] sm:$0xff]
      %v307 = vld [vmem:[#allocation2 + $0x70] sm:$0xff]
      %v308 = vld [vmem:[#allocation2 + $0x78] sm:$0xff]
      %v309 = vld [vmem:[#allocation2 + $0x80] sm:$0xff]
      %v310 = vld [vmem:[#allocation2 + $0x88] sm:$0xff]
      %v311 = vld [vmem:[#allocation2 + $0x90] sm:$0xff]
      %v312 = vld [vmem:[#allocation2 + $0x98] sm:$0xff]
      %v313 = vld [vmem:[#allocation2 + $0xa0] sm:$0xff]
      %v314 = vld [vmem:[#allocation2 + $0xa8] sm:$0xff]
      %v315 = vld [vmem:[#allocation2 + $0xb0] sm:$0xff]
      %v316 = vld [vmem:[#allocation2 + $0xb8] sm:$0xff]
      %v317 = vld [vmem:[#allocation2 + $0xc0] sm:$0xff]
      %v318 = vld [vmem:[#allocation2 + $0xc8] sm:$0xff]
      %v319 = vld [vmem:[#allocation2 + $0xd0] sm:$0xff]
      %v320 = vld [vmem:[#allocation2 + $0xd8] sm:$0xff]
      %v321 = vld [vmem:[#allocation2 + $0xe0] sm:$0xff]
      %v322 = vld [vmem:[#allocation2 + $0xe8] sm:$0xff]
      %v323 = vld [vmem:[#allocation2 + $0xf0] sm:$0xff]
      %v324 = vld [vmem:[#allocation2 + $0xf8] sm:$0xff]
      %v325 = vld [vmem:[%s239] sm:$0xff]
      %v326 = vld [vmem:[%s239 + $0x8] sm:$0xff]
      %v327 = vld [vmem:[%s239 + $0x10] sm:$0xff]
      %v328 = vld [vmem:[%s239 + $0x18] sm:$0xff]
      %v329 = vld [vmem:[%s239 + $0x20] sm:$0xff]
      %v330 = vld [vmem:[%s239 + $0x28] sm:$0xff]
      %v331 = vld [vmem:[%s239 + $0x30] sm:$0xff]
      %v332 = vld [vmem:[%s239 + $0x38] sm:$0xff]
      %v333 = vld [vmem:[%s239 + $0x40] sm:$0xff]
      %v334 = vld [vmem:[%s239 + $0x48] sm:$0xff]
      %v335 = vld [vmem:[%s239 + $0x50] sm:$0xff]
      %v336 = vld [vmem:[%s239 + $0x58] sm:$0xff]
      %v337 = vld [vmem:[%s239 + $0x60] sm:$0xff]
      %v338 = vld [vmem:[%s239 + $0x68] sm:$0xff]
      %v339 = vld [vmem:[%s239 + $0x70] sm:$0xff]
      %v340 = vld [vmem:[%s239 + $0x78] sm:$0xff]
      %v341 = vld [vmem:[%s239 + $0x80] sm:$0xff]
      %v342 = vld [vmem:[%s239 + $0x88] sm:$0xff]
      %v343 = vld [vmem:[%s239 + $0x90] sm:$0xff]
      %v344 = vld [vmem:[%s239 + $0x98] sm:$0xff]
      %v345 = vld [vmem:[%s239 + $0xa0] sm:$0xff]
      %v346 = vld [vmem:[%s239 + $0xa8] sm:$0xff]
      %v347 = vld [vmem:[%s239 + $0xb0] sm:$0xff]
      %v348 = vld [vmem:[%s239 + $0xb8] sm:$0xff]
      %v349 = vld [vmem:[%s239 + $0xc0] sm:$0xff]
      %v350 = vld [vmem:[%s239 + $0xc8] sm:$0xff]
      %v351 = vld [vmem:[%s239 + $0xd0] sm:$0xff]
      %v352 = vld [vmem:[%s239 + $0xd8] sm:$0xff]
      %v353 = vld [vmem:[%s239 + $0xe0] sm:$0xff]
      %v354 = vld [vmem:[%s239 + $0xe8] sm:$0xff]
      %v355 = vld [vmem:[%s239 + $0xf0] sm:$0xff]
      %v356 = vld [vmem:[%s239 + $0xf8] sm:$0xff]
      %v357 = vld [vmem:[%s245] sm:$0xff]
      %v358 = vld [vmem:[%s245 + $0x8] sm:$0xff]
      %v359 = vld [vmem:[%s245 + $0x10] sm:$0xff]
      %v360 = vld [vmem:[%s245 + $0x18] sm:$0xff]
      %v361 = vld [vmem:[%s245 + $0x20] sm:$0xff]
      %v362 = vld [vmem:[%s245 + $0x28] sm:$0xff]
      %v363 = vld [vmem:[%s245 + $0x30] sm:$0xff]
      %v364 = vld [vmem:[%s245 + $0x38] sm:$0xff]
      %v365 = vld [vmem:[%s245 + $0x40] sm:$0xff]
      %v366 = vld [vmem:[%s245 + $0x48] sm:$0xff]
      %v367 = vld [vmem:[%s245 + $0x50] sm:$0xff]
      %v368 = vld [vmem:[%s245 + $0x58] sm:$0xff]
      %v369 = vld [vmem:[%s245 + $0x60] sm:$0xff]
      %v370 = vld [vmem:[%s245 + $0x68] sm:$0xff]
      %v371 = vld [vmem:[%s245 + $0x70] sm:$0xff]
      %v372 = vld [vmem:[%s245 + $0x78] sm:$0xff]
      %373 = vmatprep.subr.mxu0 0.0
      %374 = vmatpush1.msra.mxu0 %v357
      %375 = vmatprep.subr.mxu0 0.0
      %376 = vmatpush1.msra.mxu0 %v358
      %377 = vmatprep.subr.mxu0 0.0
      %378 = vmatpush1.msra.mxu0 %v359
      %379 = vmatprep.subr.mxu0 0.0
      %380 = vmatpush1.msra.mxu0 %v360
      %381 = vmatprep.subr.mxu0 0.0
      %382 = vmatpush1.msra.mxu0 %v361
      %383 = vmatprep.subr.mxu0 0.0
      %384 = vmatpush1.msra.mxu0 %v362
      %385 = vmatprep.subr.mxu0 0.0
      %386 = vmatpush1.msra.mxu0 %v363
      %387 = vmatprep.subr.mxu0 0.0
      %388 = vmatpush1.msra.mxu0 %v364
      %389 = vmatprep.subr.mxu0 0.0
      %390 = vmatpush1.msra.mxu0 %v365
      %391 = vmatprep.subr.mxu0 0.0
      %392 = vmatpush1.msra.mxu0 %v366
      %393 = vmatprep.subr.mxu0 0.0
      %394 = vmatpush1.msra.mxu0 %v367
      %395 = vmatprep.subr.mxu0 0.0
      %396 = vmatpush1.msra.mxu0 %v368
      %397 = vmatprep.subr.mxu0 0.0
      %398 = vmatpush1.msra.mxu0 %v369
      %399 = vmatprep.subr.mxu0 0.0
      %400 = vmatpush1.msra.mxu0 %v370
      %401 = vmatprep.subr.mxu0 0.0
      %402 = vmatpush1.msra.mxu0 %v371
      %403 = vmatprep.subr.mxu0 0.0
      %404 = vmatpush1.msra.mxu0 %v372
      %405 = vmatprep.subr.mxu0 0.0
      %406 = vmatpush1.msra.mxu0 0.0
      %407 = vmatprep.subr.mxu0 0.0
      %408 = vmatpush1.msra.mxu0 0.0
      %409 = vmatprep.subr.mxu0 0.0
      %410 = vmatpush1.msra.mxu0 0.0
      %411 = vmatprep.subr.mxu0 0.0
      %412 = vmatpush1.msra.mxu0 0.0
      %413 = vmatprep.subr.mxu0 0.0
      %414 = vmatpush1.msra.mxu0 0.0
      %415 = vmatprep.subr.mxu0 0.0
      %416 = vmatpush1.msra.mxu0 0.0
      %417 = vmatprep.subr.mxu0 0.0
      %418 = vmatpush1.msra.mxu0 0.0
      %419 = vmatprep.subr.mxu0 0.0
      %420 = vmatpush1.msra.mxu0 0.0
      %421 = vmatprep.subr.mxu0 0.0
      %422 = vmatpush1.msra.mxu0 0.0
      %423 = vmatprep.subr.mxu0 0.0
      %424 = vmatpush1.msra.mxu0 0.0
      %425 = vmatprep.subr.mxu0 0.0
      %426 = vmatpush1.msra.mxu0 0.0
      %427 = vmatprep.subr.mxu0 0.0
      %428 = vmatpush1.msra.mxu0 0.0
      %429 = vmatprep.subr.mxu0 0.0
      %430 = vmatpush1.msra.mxu0 0.0
      %431 = vmatprep.subr.mxu0 0.0
      %432 = vmatpush1.msra.mxu0 0.0
      %433 = vmatprep.subr.mxu0 0.0
      %434 = vmatpush1.msra.mxu0 0.0
      %435 = vmatprep.subr.mxu0 0.0
      %436 = vmatpush1.msra.mxu0 0.0
      %437 = vmatprep.mubr.f32.mxu0 0.0
      %438 = vmatmul.mubr.f32.gmra.mrb[0].mxu0 %v325
      %v439 = vpop.f32.mrb[0].mxu0
      %v440 = vadd.f32 0.0, %v439
      %v441 = vpop.f32.mrb[0].mxu0
      %442 = vmatprep.mubr.f32.mxu0 0.0
      %443 = vmatmul.mubr.f32.gmra.mrb[0].mxu0 %v326
      %v444 = vpop.f32.mrb[0].mxu0
      %v445 = vadd.f32 0.0, %v444
      %v446 = vpop.f32.mrb[0].mxu0
      %447 = vmatprep.mubr.f32.mxu0 0.0
      %448 = vmatmul.mubr.f32.gmra.mrb[0].mxu0 %v327
      %v449 = vpop.f32.mrb[0].mxu0
      %v450 = vadd.f32 0.0, %v449
      %v451 = vpop.f32.mrb[0].mxu0
      %452 = vmatprep.mubr.f32.mxu0 0.0
      %453 = vmatmul.mubr.f32.gmra.mrb[0].mxu0 %v328
      %v454 = vpop.f32.mrb[0].mxu0
      %v455 = vadd.f32 0.0, %v454
      %v456 = vpop.f32.mrb[0].mxu0
      %457 = vmatprep.mubr.f32.mxu0 0.0
      %458 = vmatmul.mubr.f32.gmra.mrb[0].mxu0 %v329
      %v459 = vpop.f32.mrb[0].mxu0
      %v460 = vadd.f32 0.0, %v459
      %v461 = vpop.f32.mrb[0].mxu0
      %462 = vmatprep.mubr.f32.mxu0 0.0
      %463 = vmatmul.mubr.f32.gmra.mrb[0].mxu0 %v330
      %v464 = vpop.f32.mrb[0].mxu0
      %v465 = vadd.f32 0.0, %v464
      %v466 = vpop.f32.mrb[0].mxu0
      %467 = vmatprep.mubr.f32.mxu0 0.0
      %468 = vmatmul.mubr.f32.gmra.mrb[0].mxu0 %v331
      %v469 = vpop.f32.mrb[0].mxu0
      %v470 = vadd.f32 0.0, %v469
      %v471 = vpop.f32.mrb[0].mxu0
      %472 = vmatprep.mubr.f32.mxu0 0.0
      %473 = vmatmul.mubr.f32.gmra.mrb[0].mxu0 %v332
      %v474 = vpop.f32.mrb[0].mxu0
      %v475 = vadd.f32 0.0, %v474
      %v476 = vpop.f32.mrb[0].mxu0
      %477 = vmatprep.mubr.f32.mxu0 0.0
      %478 = vmatmul.mubr.f32.gmra.mrb[0].mxu0 %v333
      %v479 = vpop.f32.mrb[0].mxu0
      %v480 = vadd.f32 0.0, %v479
      %v481 = vpop.f32.mrb[0].mxu0
      %482 = vmatprep.mubr.f32.mxu0 0.0
      %483 = vmatmul.mubr.f32.gmra.mrb[0].mxu0 %v334
      %v484 = vpop.f32.mrb[0].mxu0
      %v485 = vadd.f32 0.0, %v484
      %v486 = vpop.f32.mrb[0].mxu0
      %487 = vmatprep.mubr.f32.mxu0 0.0
      %488 = vmatmul.mubr.f32.gmra.mrb[0].mxu0 %v335
      %v489 = vpop.f32.mrb[0].mxu0
      %v490 = vadd.f32 0.0, %v489
      %v491 = vpop.f32.mrb[0].mxu0
      %492 = vmatprep.mubr.f32.mxu0 0.0
      %493 = vmatmul.mubr.f32.gmra.mrb[0].mxu0 %v336
      %v494 = vpop.f32.mrb[0].mxu0
      %v495 = vadd.f32 0.0, %v494
      %v496 = vpop.f32.mrb[0].mxu0
      %497 = vmatprep.mubr.f32.mxu0 0.0
      %498 = vmatmul.mubr.f32.gmra.mrb[0].mxu0 %v337
      %v499 = vpop.f32.mrb[0].mxu0
      %v500 = vadd.f32 0.0, %v499
      %v501 = vpop.f32.mrb[0].mxu0
      %502 = vmatprep.mubr.f32.mxu0 0.0
      %503 = vmatmul.mubr.f32.gmra.mrb[0].mxu0 %v338
      %v504 = vpop.f32.mrb[0].mxu0
      %v505 = vadd.f32 0.0, %v504
      %v506 = vpop.f32.mrb[0].mxu0
      %507 = vmatprep.mubr.f32.mxu0 0.0
      %508 = vmatmul.mubr.f32.gmra.mrb[0].mxu0 %v339
      %v509 = vpop.f32.mrb[0].mxu0
      %v510 = vadd.f32 0.0, %v509
      %v511 = vpop.f32.mrb[0].mxu0
      %512 = vmatprep.mubr.f32.mxu0 0.0
      %513 = vmatmul.mubr.f32.gmra.mrb[0].mxu0 %v340
      %v514 = vpop.f32.mrb[0].mxu0
      %v515 = vadd.f32 0.0, %v514
      %v516 = vpop.f32.mrb[0].mxu0
      %517 = vmatprep.mubr.f32.mxu0 0.0
      %518 = vmatmul.mubr.f32.gmra.mrb[0].mxu0 %v341
      %v519 = vpop.f32.mrb[0].mxu0
      %v520 = vadd.f32 0.0, %v519
      %v521 = vpop.f32.mrb[0].mxu0
      %522 = vmatprep.mubr.f32.mxu0 0.0
      %523 = vmatmul.mubr.f32.gmra.mrb[0].mxu0 %v342
      %v524 = vpop.f32.mrb[0].mxu0
      %v525 = vadd.f32 0.0, %v524
      %v526 = vpop.f32.mrb[0].mxu0
      %527 = vmatprep.mubr.f32.mxu0 0.0
      %528 = vmatmul.mubr.f32.gmra.mrb[0].mxu0 %v343
      %v529 = vpop.f32.mrb[0].mxu0
      %v530 = vadd.f32 0.0, %v529
      %v531 = vpop.f32.mrb[0].mxu0
      %532 = vmatprep.mubr.f32.mxu0 0.0
      %533 = vmatmul.mubr.f32.gmra.mrb[0].mxu0 %v344
      %v534 = vpop.f32.mrb[0].mxu0
      %v535 = vadd.f32 0.0, %v534
      %v536 = vpop.f32.mrb[0].mxu0
      %537 = vmatprep.mubr.f32.mxu0 0.0
      %538 = vmatmul.mubr.f32.gmra.mrb[0].mxu0 %v345
      %v539 = vpop.f32.mrb[0].mxu0
      %v540 = vadd.f32 0.0, %v539
      %v541 = vpop.f32.mrb[0].mxu0
      %542 = vmatprep.mubr.f32.mxu0 0.0
      %543 = vmatmul.mubr.f32.gmra.mrb[0].mxu0 %v346
      %v544 = vpop.f32.mrb[0].mxu0
      %v545 = vadd.f32 0.0, %v544
      %v546 = vpop.f32.mrb[0].mxu0
      %547 = vmatprep.mubr.f32.mxu0 0.0
      %548 = vmatmul.mubr.f32.gmra.mrb[0].mxu0 %v347
      %v549 = vpop.f32.mrb[0].mxu0
      %v550 = vadd.f32 0.0, %v549
      %v551 = vpop.f32.mrb[0].mxu0
      %552 = vmatprep.mubr.f32.mxu0 0.0
      %553 = vmatmul.mubr.f32.gmra.mrb[0].mxu0 %v348
      %v554 = vpop.f32.mrb[0].mxu0
      %v555 = vadd.f32 0.0, %v554
      %v556 = vpop.f32.mrb[0].mxu0
      %557 = vmatprep.mubr.f32.mxu0 0.0
      %558 = vmatmul.mubr.f32.gmra.mrb[0].mxu0 %v349
      %v559 = vpop.f32.mrb[0].mxu0
      %v560 = vadd.f32 0.0, %v559
      %v561 = vpop.f32.mrb[0].mxu0
      %562 = vmatprep.mubr.f32.mxu0 0.0
      %563 = vmatmul.mubr.f32.gmra.mrb[0].mxu0 %v350
      %v564 = vpop.f32.mrb[0].mxu0
      %v565 = vadd.f32 0.0, %v564
      %v566 = vpop.f32.mrb[0].mxu0
      %567 = vmatprep.mubr.f32.mxu0 0.0
      %568 = vmatmul.mubr.f32.gmra.mrb[0].mxu0 %v351
      %v569 = vpop.f32.mrb[0].mxu0
      %v570 = vadd.f32 0.0, %v569
      %v571 = vpop.f32.mrb[0].mxu0
      %572 = vmatprep.mubr.f32.mxu0 0.0
      %573 = vmatmul.mubr.f32.gmra.mrb[0].mxu0 %v352
      %v574 = vpop.f32.mrb[0].mxu0
      %v575 = vadd.f32 0.0, %v574
      %v576 = vpop.f32.mrb[0].mxu0
      %577 = vmatprep.mubr.f32.mxu0 0.0
      %578 = vmatmul.mubr.f32.gmra.mrb[0].mxu0 %v353
      %v579 = vpop.f32.mrb[0].mxu0
      %v580 = vadd.f32 0.0, %v579
      %v581 = vpop.f32.mrb[0].mxu0
      %582 = vmatprep.mubr.f32.mxu0 0.0
      %583 = vmatmul.mubr.f32.gmra.mrb[0].mxu0 %v354
      %v584 = vpop.f32.mrb[0].mxu0
      %v585 = vadd.f32 0.0, %v584
      %v586 = vpop.f32.mrb[0].mxu0
      %587 = vmatprep.mubr.f32.mxu0 0.0
      %588 = vmatmul.mubr.f32.gmra.mrb[0].mxu0 %v355
      %v589 = vpop.f32.mrb[0].mxu0
      %v590 = vadd.f32 0.0, %v589
      %v591 = vpop.f32.mrb[0].mxu0
      %592 = vmatprep.mubr.f32.mxu0 0.0
      %593 = vmatmul.mubr.f32.gmra.mrb[0].mxu0 %v356
      %v594 = vpop.f32.mrb[0].mxu0
      %v595 = vadd.f32 0.0, %v594
      %v596 = vpop.f32.mrb[0].mxu0
      %597 = vdwg.mxu0
      %v598 = vadd.f32 %v293, %v440
      %v599 = vadd.f32 %v294, %v445
      %v600 = vadd.f32 %v295, %v450
      %v601 = vadd.f32 %v296, %v455
      %v602 = vadd.f32 %v297, %v460
      %v603 = vadd.f32 %v298, %v465
      %v604 = vadd.f32 %v299, %v470
      %v605 = vadd.f32 %v300, %v475
      %v606 = vadd.f32 %v301, %v480
      %v607 = vadd.f32 %v302, %v485
      %v608 = vadd.f32 %v303, %v490
      %v609 = vadd.f32 %v304, %v495
      %v610 = vadd.f32 %v305, %v500
      %v611 = vadd.f32 %v306, %v505
      %v612 = vadd.f32 %v307, %v510
      %v613 = vadd.f32 %v308, %v515
      %v614 = vadd.f32 %v309, %v520
      %v615 = vadd.f32 %v310, %v525
      %v616 = vadd.f32 %v311, %v530
      %v617 = vadd.f32 %v312, %v535
      %v618 = vadd.f32 %v313, %v540
      %v619 = vadd.f32 %v314, %v545
      %v620 = vadd.f32 %v315, %v550
      %v621 = vadd.f32 %v316, %v555
      %v622 = vadd.f32 %v317, %v560
      %v623 = vadd.f32 %v318, %v565
      %v624 = vadd.f32 %v319, %v570
      %v625 = vadd.f32 %v320, %v575
      %v626 = vadd.f32 %v321, %v580
      %v627 = vadd.f32 %v322, %v585
      %v628 = vadd.f32 %v323, %v590
      %v629 = vadd.f32 %v324, %v595
      %630 = vst [vmem:[#allocation2] sm:$0xff] %v598
      %631 = vst [vmem:[#allocation2 + $0x8] sm:$0xff] %v599
      %632 = vst [vmem:[#allocation2 + $0x10] sm:$0xff] %v600
      %633 = vst [vmem:[#allocation2 + $0x18] sm:$0xff] %v601
      %634 = vst [vmem:[#allocation2 + $0x20] sm:$0xff] %v602
      %635 = vst [vmem:[#allocation2 + $0x28] sm:$0xff] %v603
      %636 = vst [vmem:[#allocation2 + $0x30] sm:$0xff] %v604
      %637 = vst [vmem:[#allocation2 + $0x38] sm:$0xff] %v605
      %638 = vst [vmem:[#allocation2 + $0x40] sm:$0xff] %v606
      %639 = vst [vmem:[#allocation2 + $0x48] sm:$0xff] %v607
      %640 = vst [vmem:[#allocation2 + $0x50] sm:$0xff] %v608
      %641 = vst [vmem:[#allocation2 + $0x58] sm:$0xff] %v609
      %642 = vst [vmem:[#allocation2 + $0x60] sm:$0xff] %v610
      %643 = vst [vmem:[#allocation2 + $0x68] sm:$0xff] %v611
      %644 = vst [vmem:[#allocation2 + $0x70] sm:$0xff] %v612
      %645 = vst [vmem:[#allocation2 + $0x78] sm:$0xff] %v613
      %646 = vst [vmem:[#allocation2 + $0x80] sm:$0xff] %v614
      %647 = vst [vmem:[#allocation2 + $0x88] sm:$0xff] %v615
      %648 = vst [vmem:[#allocation2 + $0x90] sm:$0xff] %v616
      %649 = vst [vmem:[#allocation2 + $0x98] sm:$0xff] %v617
      %650 = vst [vmem:[#allocation2 + $0xa0] sm:$0xff] %v618
      %651 = vst [vmem:[#allocation2 + $0xa8] sm:$0xff] %v619
      %652 = vst [vmem:[#allocation2 + $0xb0] sm:$0xff] %v620
      %653 = vst [vmem:[#allocation2 + $0xb8] sm:$0xff] %v621
      %654 = vst [vmem:[#allocation2 + $0xc0] sm:$0xff] %v622
      %655 = vst [vmem:[#allocation2 + $0xc8] sm:$0xff] %v623
      %656 = vst [vmem:[#allocation2 + $0xd0] sm:$0xff] %v624
      %657 = vst [vmem:[#allocation2 + $0xd8] sm:$0xff] %v625
      %658 = vst [vmem:[#allocation2 + $0xe0] sm:$0xff] %v626
      %659 = vst [vmem:[#allocation2 + $0xe8] sm:$0xff] %v627
      %660 = vst [vmem:[#allocation2 + $0xf0] sm:$0xff] %v628
      %661 = vst [vmem:[#allocation2 + $0xf8] sm:$0xff] %v629
      // Predicated region
      $region37: #{bottleneck_forward.6} parent=31 // pred_check
        %p662 = pneg %p257
      $region38: #{bottleneck_forward.6} parent=31 // pred_check_branch
        %664 = sbr.rel (%p662) target = $region40
      $region39: #{bottleneck_forward.6} parent=31 // pred_region
        %v665 = vld [vmem:[#allocation2] sm:$0xff]
        %v666 = vld [vmem:[#allocation2 + $0x8] sm:$0xff]
        %v667 = vld [vmem:[#allocation2 + $0x10] sm:$0xff]
        %v668 = vld [vmem:[#allocation2 + $0x18] sm:$0xff]
        %v669 = vld [vmem:[#allocation2 + $0x20] sm:$0xff]
        %v670 = vld [vmem:[#allocation2 + $0x28] sm:$0xff]
        %v671 = vld [vmem:[#allocation2 + $0x30] sm:$0xff]
        %v672 = vld [vmem:[#allocation2 + $0x38] sm:$0xff]
        %v673 = vld [vmem:[#allocation2 + $0x40] sm:$0xff]
        %v674 = vld [vmem:[#allocation2 + $0x48] sm:$0xff]
        %v675 = vld [vmem:[#allocation2 + $0x50] sm:$0xff]
        %v676 = vld [vmem:[#allocation2 + $0x58] sm:$0xff]
        %v677 = vld [vmem:[#allocation2 + $0x60] sm:$0xff]
        %v678 = vld [vmem:[#allocation2 + $0x68] sm:$0xff]
        %v679 = vld [vmem:[#allocation2 + $0x70] sm:$0xff]
        %v680 = vld [vmem:[#allocation2 + $0x78] sm:$0xff]
        %v681 = vld [vmem:[#allocation2 + $0x80] sm:$0xff]
        %v682 = vld [vmem:[#allocation2 + $0x88] sm:$0xff]
        %v683 = vld [vmem:[#allocation2 + $0x90] sm:$0xff]
        %v684 = vld [vmem:[#allocation2 + $0x98] sm:$0xff]
        %v685 = vld [vmem:[#allocation2 + $0xa0] sm:$0xff]
        %v686 = vld [vmem:[#allocation2 + $0xa8] sm:$0xff]
        %v687 = vld [vmem:[#allocation2 + $0xb0] sm:$0xff]
        %v688 = vld [vmem:[#allocation2 + $0xb8] sm:$0xff]
        %v689 = vld [vmem:[#allocation2 + $0xc0] sm:$0xff]
        %v690 = vld [vmem:[#allocation2 + $0xc8] sm:$0xff]
        %v691 = vld [vmem:[#allocation2 + $0xd0] sm:$0xff]
        %v692 = vld [vmem:[#allocation2 + $0xd8] sm:$0xff]
        %v693 = vld [vmem:[#allocation2 + $0xe0] sm:$0xff]
        %v694 = vld [vmem:[#allocation2 + $0xe8] sm:$0xff]
        %v695 = vld [vmem:[#allocation2 + $0xf0] sm:$0xff]
        %v696 = vld [vmem:[#allocation2 + $0xf8] sm:$0xff]
        %v697 = vld [vmem:[%s2] sm:$0x1]
        %v699 = vlaneseq
        %v700 = vshrl.u32 %v699, 7
        %v701 = vsub.s32 0, %v700
        %v702 = vrot.slane %v697, %v701
        %v704 = vadd.f32 %v665, %v702
        %v705 = vadd.f32 %v666, %v702
        %v706 = vadd.f32 %v667, %v702
        %v707 = vadd.f32 %v668, %v702
        %v708 = vadd.f32 %v669, %v702
        %v709 = vadd.f32 %v670, %v702
        %v710 = vadd.f32 %v671, %v702
        %v711 = vadd.f32 %v672, %v702
        %v712 = vadd.f32 %v673, %v702
        %v713 = vadd.f32 %v674, %v702
        %v714 = vadd.f32 %v675, %v702
        %v715 = vadd.f32 %v676, %v702
        %v716 = vadd.f32 %v677, %v702
        %v717 = vadd.f32 %v678, %v702
        %v718 = vadd.f32 %v679, %v702
        %v719 = vadd.f32 %v680, %v702
        %v720 = vadd.f32 %v681, %v702
        %v721 = vadd.f32 %v682, %v702
        %v722 = vadd.f32 %v683, %v702
        %v723 = vadd.f32 %v684, %v702
        %v724 = vadd.f32 %v685, %v702
        %v725 = vadd.f32 %v686, %v702
        %v726 = vadd.f32 %v687, %v702
        %v727 = vadd.f32 %v688, %v702
        %v728 = vadd.f32 %v689, %v702
        %v729 = vadd.f32 %v690, %v702
        %v730 = vadd.f32 %v691, %v702
        %v731 = vadd.f32 %v692, %v702
        %v732 = vadd.f32 %v693, %v702
        %v733 = vadd.f32 %v694, %v702
        %v734 = vadd.f32 %v695, %v702
        %v735 = vadd.f32 %v696, %v702
        %736 = vst [vmem:[%s251] sm:$0xff] %v704
        %737 = vst [vmem:[%s251 + $0x8] sm:$0xff] %v705
        %738 = vst [vmem:[%s251 + $0x10] sm:$0xff] %v706
        %739 = vst [vmem:[%s251 + $0x18] sm:$0xff] %v707
        %740 = vst [vmem:[%s251 + $0x20] sm:$0xff] %v708
        %741 = vst [vmem:[%s251 + $0x28] sm:$0xff] %v709
        %742 = vst [vmem:[%s251 + $0x30] sm:$0xff] %v710
        %743 = vst [vmem:[%s251 + $0x38] sm:$0xff] %v711
        %744 = vst [vmem:[%s251 + $0x40] sm:$0xff] %v712
        %745 = vst [vmem:[%s251 + $0x48] sm:$0xff] %v713
        %746 = vst [vmem:[%s251 + $0x50] sm:$0xff] %v714
        %747 = vst [vmem:[%s251 + $0x58] sm:$0xff] %v715
        %748 = vst [vmem:[%s251 + $0x60] sm:$0xff] %v716
        %749 = vst [vmem:[%s251 + $0x68] sm:$0xff] %v717
        %750 = vst [vmem:[%s251 + $0x70] sm:$0xff] %v718
        %751 = vst [vmem:[%s251 + $0x78] sm:$0xff] %v719
        %752 = vst [vmem:[%s251 + $0x80] sm:$0xff] %v720
        %753 = vst [vmem:[%s251 + $0x88] sm:$0xff] %v721
        %754 = vst [vmem:[%s251 + $0x90] sm:$0xff] %v722
        %755 = vst [vmem:[%s251 + $0x98] sm:$0xff] %v723
        %756 = vst [vmem:[%s251 + $0xa0] sm:$0xff] %v724
        %757 = vst [vmem:[%s251 + $0xa8] sm:$0xff] %v725
        %758 = vst [vmem:[%s251 + $0xb0] sm:$0xff] %v726
        %759 = vst [vmem:[%s251 + $0xb8] sm:$0xff] %v727
        %760 = vst [vmem:[%s251 + $0xc0] sm:$0xff] %v728
        %761 = vst [vmem:[%s251 + $0xc8] sm:$0xff] %v729
        %762 = vst [vmem:[%s251 + $0xd0] sm:$0xff] %v730
        %763 = vst [vmem:[%s251 + $0xd8] sm:$0xff] %v731
        %764 = vst [vmem:[%s251 + $0xe0] sm:$0xff] %v732
        %765 = vst [vmem:[%s251 + $0xe8] sm:$0xff] %v733
        %766 = vst [vmem:[%s251 + $0xf0] sm:$0xff] %v734
        %767 = vst [vmem:[%s251 + $0xf8] sm:$0xff] %v735
        %v768 = vadd.f32 %v704, %v705
        %v769 = vadd.f32 %v768, %v706
        %v770 = vadd.f32 %v769, %v707
        %v771 = vadd.f32 %v770, %v708
        %v772 = vadd.f32 %v771, %v709
        %v773 = vadd.f32 %v772, %v710
        %v774 = vadd.f32 %v773, %v711
        %v775 = vadd.f32 %v774, %v712
        %v776 = vadd.f32 %v775, %v713
        %v777 = vadd.f32 %v776, %v714
        %v778 = vadd.f32 %v777, %v715
        %v779 = vadd.f32 %v778, %v716
        %v780 = vadd.f32 %v779, %v717
        %v781 = vadd.f32 %v780, %v718
        %v782 = vadd.f32 %v781, %v719
        %v783 = vadd.f32 %v782, %v720
        %v784 = vadd.f32 %v783, %v721
        %v785 = vadd.f32 %v784, %v722
        %v786 = vadd.f32 %v785, %v723
        %v787 = vadd.f32 %v786, %v724
        %v788 = vadd.f32 %v787, %v725
        %v789 = vadd.f32 %v788, %v726
        %v790 = vadd.f32 %v789, %v727
        %v791 = vadd.f32 %v790, %v728
        %v792 = vadd.f32 %v791, %v729
        %v793 = vadd.f32 %v792, %v730
        %v794 = vadd.f32 %v793, %v731
        %v795 = vadd.f32 %v794, %v732
        %v796 = vadd.f32 %v795, %v733
        %v797 = vadd.f32 %v796, %v734
        %v798 = vadd.f32 %v797, %v735
        %v799 = vrot.slane %v798, 4
        %v800 = vadd.f32 %v798, %v799
        %v801 = vrot.slane %v800, 2
        %v802 = vadd.f32 %v800, %v801
        %v803 = vrot.slane %v802, 1
        %v804 = vadd.f32 %v802, %v803
        %805 = vst [vmem:[%s256] sm:$0x1] %v804
        %v806 = vmul.f32 %v704, %v704
        %v807 = vmul.f32 %v705, %v705
        %v808 = vmul.f32 %v706, %v706
        %v809 = vmul.f32 %v707, %v707
        %v810 = vmul.f32 %v708, %v708
        %v811 = vmul.f32 %v709, %v709
        %v812 = vmul.f32 %v710, %v710
        %v813 = vmul.f32 %v711, %v711
        %v814 = vmul.f32 %v712, %v712
        %v815 = vmul.f32 %v713, %v713
        %v816 = vmul.f32 %v714, %v714
        %v817 = vmul.f32 %v715, %v715
        %v818 = vmul.f32 %v716, %v716
        %v819 = vmul.f32 %v717, %v717
        %v820 = vmul.f32 %v718, %v718
        %v821 = vmul.f32 %v719, %v719
        %v822 = vmul.f32 %v720, %v720
        %v823 = vmul.f32 %v721, %v721
        %v824 = vmul.f32 %v722, %v722
        %v825 = vmul.f32 %v723, %v723
        %v826 = vmul.f32 %v724, %v724
        %v827 = vmul.f32 %v725, %v725
        %v828 = vmul.f32 %v726, %v726
        %v829 = vmul.f32 %v727, %v727
        %v830 = vmul.f32 %v728, %v728
        %v831 = vmul.f32 %v729, %v729
        %v832 = vmul.f32 %v730, %v730
        %v833 = vmul.f32 %v731, %v731
        %v834 = vmul.f32 %v732, %v732
        %v835 = vmul.f32 %v733, %v733
        %v836 = vmul.f32 %v734, %v734
        %v837 = vmul.f32 %v735, %v735
        %v838 = vadd.f32 %v806, %v807
        %v839 = vadd.f32 %v838, %v808
        %v840 = vadd.f32 %v839, %v809
        %v841 = vadd.f32 %v840, %v810
        %v842 = vadd.f32 %v841, %v811
        %v843 = vadd.f32 %v842, %v812
        %v844 = vadd.f32 %v843, %v813
        %v845 = vadd.f32 %v844, %v814
        %v846 = vadd.f32 %v845, %v815
        %v847 = vadd.f32 %v846, %v816
        %v848 = vadd.f32 %v847, %v817
        %v849 = vadd.f32 %v848, %v818
        %v850 = vadd.f32 %v849, %v819
        %v851 = vadd.f32 %v850, %v820
        %v852 = vadd.f32 %v851, %v821
        %v853 = vadd.f32 %v852, %v822
        %v854 = vadd.f32 %v853, %v823
        %v855 = vadd.f32 %v854, %v824
        %v856 = vadd.f32 %v855, %v825
        %v857 = vadd.f32 %v856, %v826
        %v858 = vadd.f32 %v857, %v827
        %v859 = vadd.f32 %v858, %v828
        %v860 = vadd.f32 %v859, %v829
        %v861 = vadd.f32 %v860, %v830
        %v862 = vadd.f32 %v861, %v831
        %v863 = vadd.f32 %v862, %v832
        %v864 = vadd.f32 %v863, %v833
        %v865 = vadd.f32 %v864, %v834
        %v866 = vadd.f32 %v865, %v835
        %v867 = vadd.f32 %v866, %v836
        %v868 = vadd.f32 %v867, %v837
        %v869 = vrot.slane %v868, 4
        %v870 = vadd.f32 %v868, %v869
        %v871 = vrot.slane %v870, 2
        %v872 = vadd.f32 %v870, %v871
        %v873 = vrot.slane %v872, 1
        %v874 = vadd.f32 %v872, %v873
        %875 = vst [vmem:[%s256 + $0x1] sm:$0x1] %v874
      $region40: #{bottleneck_forward.6} parent=31 // pred_fallthru
        _
      %s876 = smul.u32 32, %s20
      %p877 = scmp.lt.s32.totalorder %s876, 63
      %s878 = scalar_select %p877, %s876, 63
      %s879 = smul.addr %s878, 8
      %s880 = scalar_lea.vmem %s3, %s879
      %p881 = scmp.lt.s32.totalorder %s20, 1
      %s882 = scalar_select %p881, %s20, 1
      %s883 = smul.addr %s882, 2
      %s884 = scalar_lea.vmem %s4, %s883
      // Predicated region
      $region41: #{bottleneck_forward.6} parent=31 // pred_check
        %p885 = pneg %p121
      $region42: #{bottleneck_forward.6} parent=31 // pred_check_branch
        %887 = sbr.rel (%p885) target = $region44
      $region43: #{bottleneck_forward.6} parent=31 // pred_region
        %s888 = smul.u32 32, %s20
      $region44: #{bottleneck_forward.6} parent=31 // pred_fallthru
        _
      // Predicated region
      $region45: #{bottleneck_forward.6} parent=31 // pred_check
        %p889 = pneg %p147
      $region46: #{bottleneck_forward.6} parent=31 // pred_check_branch
        %891 = sbr.rel (%p889) target = $region48
      $region47: #{bottleneck_forward.6} parent=31 // pred_region
        _
      $region48: #{bottleneck_forward.6} parent=31 // pred_fallthru
        _
    $region32: #{bottleneck_forward.6} parent=5 // pred_fallthru
      _
    %p892 = scmp.le.s32.totalorder 2, %s11
    // Predicated region
    $region49: #{bottleneck_forward.6} parent=5 // pred_check
      %p893 = pneg %p892
    $region50: #{bottleneck_forward.6} parent=5 // pred_check_branch
      %895 = sbr.rel (%p893) target = $region52
    $region51: #{bottleneck_forward.6} parent=5 // pred_region
      %s896 = ssub.s32 %s11, 2
      // Predicated region
      $region53: #{bottleneck_forward.6} parent=51 // pred_check
        %p897 = pneg %p127
      $region54: #{bottleneck_forward.6} parent=51 // pred_check_branch
        %899 = sbr.rel (%p897) target = $region56
      $region55: #{bottleneck_forward.6} parent=51 // pred_region
        %s900 = smul.u32 32, %s22
        %p901 = scmp.lt.s32.totalorder %s900, 63
        %s902 = scalar_select %p901, %s900, 63
        %s903 = smul.addr %s902, 8
        %s904 = scalar_lea.vmem %s3, %s903
      $region56: #{bottleneck_forward.6} parent=51 // pred_fallthru
        _
      // Predicated region
      $region57: #{bottleneck_forward.6} parent=51 // pred_check
        %p905 = pneg %p153
      $region58: #{bottleneck_forward.6} parent=51 // pred_check_branch
        %907 = sbr.rel (%p905) target = $region60
      $region59: #{bottleneck_forward.6} parent=51 // pred_region
        %p908 = scmp.lt.s32.totalorder %s22, 1
        %s909 = scalar_select %p908, %s22, 1
        %s910 = smul.addr %s909, 2
        %s911 = scalar_lea.vmem %s4, %s910
      $region60: #{bottleneck_forward.6} parent=51 // pred_fallthru
        _
    $region52: #{bottleneck_forward.6} parent=5 // pred_fallthru
      _
  $region6: #{bottleneck_forward.6} parent=0 // loop_footer
    %s15 = sadd.s32 1, %s11
  $region7: #{bottleneck_forward.6} parent=0 // loop_footer_branch
    %10 = sbr.rel target = $region3
  $region8: #{bottleneck_forward.6} parent=0 // loop_exit
    _

// kernel: bottleneck_forward.8
$region0: #{bottleneck_forward.8}
  #allocation0 [shape = 'u32[]', space=smem, size = 0x4, offset = 0x4, fixed_abs, tag = 'smem constant byte address 0x4 - core index']
  #allocation1 [shape = 'u32[144,128]{1,0:T(1,128)}', space=vmem, size = 0x12000, scoped, tag = 'internal scratch']
  #allocation2 [shape = 'f32[8,128]{1,0:T(8,128)}', space=vmem, size = 0x1000, scoped, tag = 'scratch operand']
  %s0 = inlined_call_operand.vmem [shape: f32[2,36,9,128], index: 0, kind: input, shape index: {}]
  %s1 = inlined_call_operand.vmem [shape: f32[3,3,128,128], index: 1, kind: input, shape index: {}]
  %s2 = inlined_call_operand.vmem [shape: f32[2,8,8,128], index: 2, kind: output, shape index: {0}]
  %s3 = inlined_call_operand.vmem [shape: f32[2,2,128], index: 3, kind: output, shape index: {1}]
  %4 = xla_tuple %s2, %s3
  %s5 = sld [smem:[#allocation0]]
  $region61: #{bottleneck_forward.8} parent=0
    _
  %s7 = ssub.s32 1, %s5
  %s8 = scalar_select 0, %s7, %s5
  loop: start=0, step=1, limit=50
  $region2: #{bottleneck_forward.8} parent=0 // loop_pre_header
    _
  $region3: #{bottleneck_forward.8} parent=0 // loop_header
    %s10 = sphi 0, %s14
    %p11 = scmp.ge.s32.totalorder %s10, 50
    %s17 = sphi 0, %s36
    %s18 = sphi 0, %s32
    %s19 = sphi 0, %s28
    %s20 = sphi 0, %s17
    %s21 = sphi 0, %s18
    %s22 = sphi 0, %s19
    %s23 = sphi 0, %s20
    %s24 = sphi 0, %s21
    %s25 = sphi 0, %s22
    %s45 = sphi 0, %s47
    %s48 = sphi 0, %s45
    %s49 = sphi 0, %s48
    %s65 = sphi 0, %s49
    %s71 = sphi 0, %s73
    %s74 = sphi 0, %s71
    %s75 = sphi 0, %s74
    %s91 = sphi 0, %s75
    %s99 = sphi 0, %s101
    %s102 = sphi 0, %s99
    %s103 = sphi 0, %s102
    %s119 = sphi 0, %s103
    %s125 = sphi 0, %s127
    %s128 = sphi 0, %s125
    %s129 = sphi 0, %s128
    %s145 = sphi 0, %s129
  $region4: #{bottleneck_forward.8} parent=0 // loop_header_branch
    %13 = sbr.rel (%p11) target = $region8
  $region5: #{bottleneck_forward.8} parent=0 // loop_body
    %s15 = ssub.s32 %s10, 1
    %s16 = ssub.s32 %s10, 2
    %s26 = sadd.s32 1, %s19
    %p27 = scmp.ge.s32.totalorder %s26, 3
    %s28 = scalar_select %p27, 0, %s26
    %s29 = sadd.s32 1, %s18
    %s30 = scalar_select %p27, %s29, %s18
    %p31 = scmp.ge.s32.totalorder %s30, 8
    %s32 = scalar_select %p31, 0, %s30
    %s33 = sadd.s32 1, %s17
    %s34 = scalar_select %p31, %s33, %s17
    %p35 = scmp.ge.s32.totalorder %s34, 2
    %s36 = scalar_select %p35, 0, %s34
    %s37 = smul.u32 %s18, 2
    %s38 = sadd.s32 %s37, %s19
    %s39 = smul.u32 %s32, 2
    %s40 = sadd.s32 %s39, %s28
    %s41 = ssub.s32 %s17, %s36
    %s42 = ssub.s32 %s38, %s40
    %s43 = sor.u32 %s41, %s42
    %p44 = scmp.eq.s32.totalorder %s43, 0
    %s46 = sadd.s32 %s45, 1
    %s47 = scalar_select %p44, %s45, %s46
    %p50 = pneg %p44
    %p51 = scmp.eq.s32.totalorder %s10, 47
    %p52 = por %p50, %p51
    %p53 = scmp.ne.s32.totalorder %s45, %s48
    %p54 = scmp.eq.s32.totalorder %s10, 0
    %p55 = por %p53, %p54
    %p56 = scmp.ne.s32.totalorder %s45, %s48
    %p57 = scmp.eq.s32.totalorder %s15, 47
    %p58 = por %p56, %p57
    %p59 = scmp.ne.s32.totalorder %s48, %s49
    %p60 = scmp.eq.s32.totalorder %s15, 0
    %p61 = por %p59, %p60
    %p62 = scmp.ne.s32.totalorder %s48, %s49
    %p63 = scmp.eq.s32.totalorder %s16, 47
    %p64 = por %p62, %p63
    %p66 = scmp.ne.s32.totalorder %s49, %s65
    %p67 = scmp.eq.s32.totalorder %s16, 0
    %p68 = por %p66, %p67
    %s69 = ssub.s32 %s19, %s28
    %p70 = scmp.eq.s32.totalorder %s69, 0
    %s72 = sadd.s32 %s71, 1
    %s73 = scalar_select %p70, %s71, %s72
    %p76 = pneg %p70
    %p77 = scmp.eq.s32.totalorder %s10, 47
    %p78 = por %p76, %p77
    %p79 = scmp.ne.s32.totalorder %s71, %s74
    %p80 = scmp.eq.s32.totalorder %s10, 0
    %p81 = por %p79, %p80
    %p82 = scmp.ne.s32.totalorder %s71, %s74
    %p83 = scmp.eq.s32.totalorder %s15, 47
    %p84 = por %p82, %p83
    %p85 = scmp.ne.s32.totalorder %s74, %s75
    %p86 = scmp.eq.s32.totalorder %s15, 0
    %p87 = por %p85, %p86
    %p88 = scmp.ne.s32.totalorder %s74, %s75
    %p89 = scmp.eq.s32.totalorder %s16, 47
    %p90 = por %p88, %p89
    %p92 = scmp.ne.s32.totalorder %s75, %s91
    %p93 = scmp.eq.s32.totalorder %s16, 0
    %p94 = por %p92, %p93
    %s95 = ssub.s32 %s17, %s36
    %s96 = ssub.s32 %s18, %s32
    %s97 = sor.u32 %s95, %s96
    %p98 = scmp.eq.s32.totalorder %s97, 0
    %s100 = sadd.s32 %s99, 1
    %s101 = scalar_select %p98, %s99, %s100
    %p104 = pneg %p98
    %p105 = scmp.eq.s32.totalorder %s10, 47
    %p106 = por %p104, %p105
    %p107 = scmp.ne.s32.totalorder %s99, %s102
    %p108 = scmp.eq.s32.totalorder %s10, 0
    %p109 = por %p107, %p108
    %p110 = scmp.ne.s32.totalorder %s99, %s102
    %p111 = scmp.eq.s32.totalorder %s15, 47
    %p112 = por %p110, %p111
    %p113 = scmp.ne.s32.totalorder %s102, %s103
    %p114 = scmp.eq.s32.totalorder %s15, 0
    %p115 = por %p113, %p114
    %p116 = scmp.ne.s32.totalorder %s102, %s103
    %p117 = scmp.eq.s32.totalorder %s16, 47
    %p118 = por %p116, %p117
    %p120 = scmp.ne.s32.totalorder %s103, %s119
    %p121 = scmp.eq.s32.totalorder %s16, 0
    %p122 = por %p120, %p121
    %s123 = ssub.s32 %s17, %s36
    %p124 = scmp.eq.s32.totalorder %s123, 0
    %s126 = sadd.s32 %s125, 1
    %s127 = scalar_select %p124, %s125, %s126
    %p130 = pneg %p124
    %p131 = scmp.eq.s32.totalorder %s10, 47
    %p132 = por %p130, %p131
    %p133 = scmp.ne.s32.totalorder %s125, %s128
    %p134 = scmp.eq.s32.totalorder %s10, 0
    %p135 = por %p133, %p134
    %p136 = scmp.ne.s32.totalorder %s125, %s128
    %p137 = scmp.eq.s32.totalorder %s15, 47
    %p138 = por %p136, %p137
    %p139 = scmp.ne.s32.totalorder %s128, %s129
    %p140 = scmp.eq.s32.totalorder %s15, 0
    %p141 = por %p139, %p140
    %p142 = scmp.ne.s32.totalorder %s128, %s129
    %p143 = scmp.eq.s32.totalorder %s16, 47
    %p144 = por %p142, %p143
    %p146 = scmp.ne.s32.totalorder %s129, %s145
    %p147 = scmp.eq.s32.totalorder %s16, 0
    %p148 = por %p146, %p147
    %p149 = scmp.le.s32.totalorder 1, %s10
    %p150 = scmp.lt.s32.totalorder %s10, 49
    %p151 = pnand %p149, %p150
    %p152 = pneg %p151
    // Predicated region
    $region9: #{bottleneck_forward.8} parent=5 // pred_check
      _
    $region10: #{bottleneck_forward.8} parent=5 // pred_check_branch
      %154 = sbr.rel (%p151) target = $region12
    $region11: #{bottleneck_forward.8} parent=5 // pred_region
      %s155 = ssub.s32 %s10, 1
    $region12: #{bottleneck_forward.8} parent=5 // pred_fallthru
      _
    %p156 = scmp.lt.s32.totalorder %s10, 48
    // Predicated region
    $region13: #{bottleneck_forward.8} parent=5 // pred_check
      %p157 = pneg %p156
    $region14: #{bottleneck_forward.8} parent=5 // pred_check_branch
      %159 = sbr.rel (%p157) target = $region16
    $region15: #{bottleneck_forward.8} parent=5 // pred_region
      // Predicated region
      $region17: #{bottleneck_forward.8} parent=15 // pred_check
        %p160 = pneg %p55
      $region18: #{bottleneck_forward.8} parent=15 // pred_check_branch
        %162 = sbr.rel (%p160) target = $region20
      $region19: #{bottleneck_forward.8} parent=15 // pred_region
        %s163 = smul.u32 %s18, 2
        %s164 = sadd.s32 %s163, %s19
        %s165 = smul.u32 2, %s164
        %p166 = scmp.lt.s32.totalorder %s17, 1
        %s167 = scalar_select %p166, %s17, 1
        %p168 = scmp.lt.s32.totalorder %s165, 35
        %s169 = scalar_select %p168, %s165, 35
        %s170 = smul.addr %s169, 2
        %s171 = smul.addr %s167, 72
        %s172 = sadd.s32 %s170, %s171
        %s173 = smul.addr %s172, 8
        %s174 = scalar_lea.vmem %s0, %s173
        %s175 = smul.u32 %s18, 2
        %s176 = sadd.s32 %s175, %s19
        %s177 = smul.u32 2, %s176
      $region20: #{bottleneck_forward.8} parent=15 // pred_fallthru
        _
      // Predicated region
      $region21: #{bottleneck_forward.8} parent=15 // pred_check
        %p178 = pneg %p81
      $region22: #{bottleneck_forward.8} parent=15 // pred_check_branch
        %180 = sbr.rel (%p178) target = $region24
      $region23: #{bottleneck_forward.8} parent=15 // pred_region
        %p181 = scmp.lt.s32.totalorder %s19, 2
        %s182 = scalar_select %p181, %s19, 2
        %s183 = smul.addr %s182, 48
        %s184 = smul.addr %s183, 8
        %s185 = scalar_lea.vmem %s1, %s184
      $region24: #{bottleneck_forward.8} parent=15 // pred_fallthru
        _
    $region16: #{bottleneck_forward.8} parent=5 // pred_fallthru
      _
    %p186 = scmp.le.s32.totalorder 1, %s10
    %p187 = scmp.lt.s32.totalorder %s10, 49
    %p188 = pnand %p186, %p187
    %p189 = pneg %p188
    // Predicated region
    $region25: #{bottleneck_forward.8} parent=5 // pred_check
      _
    $region26: #{bottleneck_forward.8} parent=5 // pred_check_branch
      %191 = sbr.rel (%p188) target = $region28
    $region27: #{bottleneck_forward.8} parent=5 // pred_region
      %s192 = ssub.s32 %s10, 1
      %s193 = smul.u32 %s21, 2
      %s194 = sadd.s32 %s193, %s22
      %s195 = smul.u32 2, %s194
      %p196 = scmp.lt.s32.totalorder %s20, 1
      %s197 = scalar_select %p196, %s20, 1
      %p198 = scmp.lt.s32.totalorder %s195, 35
      %s199 = scalar_select %p198, %s195, 35
      %s200 = smul.addr %s199, 2
      %s201 = smul.addr %s197, 72
      %s202 = sadd.s32 %s200, %s201
      %s203 = smul.addr %s202, 8
      %s204 = scalar_lea.vmem %s0, %s203
      %p205 = pneg %p61
      %p206 = pneg %p58
      %p207 = scmp.lt.s32.totalorder %s22, 2
      %s208 = scalar_select %p207, %s22, 2
      %s209 = smul.addr %s208, 48
      %s210 = smul.addr %s209, 8
      %s211 = scalar_lea.vmem %s1, %s210
      %p212 = pneg %p87
      %p213 = pneg %p84
      %p214 = pneg %p115
      %p215 = pneg %p112
      %p216 = scmp.lt.s32.totalorder %s20, 1
      %s217 = scalar_select %p216, %s20, 1
      %p218 = scmp.lt.s32.totalorder %s21, 7
      %s219 = scalar_select %p218, %s21, 7
      %s220 = smul.addr %s217, 8
      %s221 = sadd.s32 %s219, %s220
      %s222 = smul.addr %s221, 8
      %s223 = scalar_lea.vmem %s2, %s222
      %p224 = pneg %p141
      %p225 = pneg %p138
      %p226 = scmp.lt.s32.totalorder %s20, 1
      %s227 = scalar_select %p226, %s20, 1
      %s228 = smul.addr %s227, 2
      %s229 = scalar_lea.vmem %s3, %s228
      %s230 = smul.u32 %s21, 2
      %s231 = sadd.s32 %s230, %s22
      %s232 = smul.u32 2, %s231
      %p233 = scmp.lt.s32.totalorder %s20, 1
      %s234 = scalar_select %p233, %s20, 1
      %p235 = scmp.lt.s32.totalorder %s232, 35
      %s236 = scalar_select %p235, %s232, 35
      %s237 = smul.addr %s236, 2
      %s238 = smul.addr %s234, 72
      %s239 = sadd.s32 %s237, %s238
      %s240 = smul.addr %s239, 8
      %s241 = scalar_lea.vmem %s0, %s240
      %s242 = smul.u32 %s21, 2
      %s243 = sadd.s32 %s242, %s22
      %s244 = smul.u32 2, %s243
      %p245 = scmp.lt.s32.totalorder %s22, 2
      %s246 = scalar_select %p245, %s22, 2
      %s247 = smul.addr %s246, 48
      %s248 = smul.addr %s247, 8
      %s249 = scalar_lea.vmem %s1, %s248
      %p250 = scmp.lt.s32.totalorder %s20, 1
      %s251 = scalar_select %p250, %s20, 1
      %p252 = scmp.lt.s32.totalorder %s21, 7
      %s253 = scalar_select %p252, %s21, 7
      %s254 = smul.addr %s251, 8
      %s255 = sadd.s32 %s253, %s254
      %s256 = smul.addr %s255, 8
      %s257 = scalar_lea.vmem %s2, %s256
      %p258 = scmp.lt.s32.totalorder %s20, 1
      %s259 = scalar_select %p258, %s20, 1
      %s260 = smul.addr %s259, 2
      %s261 = scalar_lea.vmem %s3, %s260
      %p262 = scmp.eq.s32.totalorder %s21, 0
      %p263 = scmp.eq.s32.totalorder %s22, 0
      %p264 = pnand %p262, %p263
      %p265 = pneg %p264
      // Predicated region
      $region29: #{bottleneck_forward.8} parent=27 // pred_check
        _
      $region30: #{bottleneck_forward.8} parent=27 // pred_check_branch
        %267 = sbr.rel (%p264) target = $region32
      $region31: #{bottleneck_forward.8} parent=27 // pred_region
        %268 = vst [vmem:[%s261] sm:$0x3] 0.0
      $region32: #{bottleneck_forward.8} parent=27 // pred_fallthru
        _
      // Predicated region
      $region33: #{bottleneck_forward.8} parent=27 // pred_check
        %p269 = pneg %p263
      $region34: #{bottleneck_forward.8} parent=27 // pred_check_branch
        %271 = sbr.rel (%p269) target = $region36
      $region35: #{bottleneck_forward.8} parent=27 // pred_region
        %272 = vst [vmem:[#allocation2] sm:$0xff] 0.0
      $region36: #{bottleneck_forward.8} parent=27 // pred_fallthru
        _
      %v273 = vld [vmem:[%s241] sm:$0xff]
      %v274 = vld [vmem:[%s249] sm:$0xff]
      %v275 = vld [vmem:[%s249 + $0x8] sm:$0xff]
      %v276 = vld [vmem:[%s249 + $0x10] sm:$0xff]
      %v277 = vld [vmem:[%s249 + $0x18] sm:$0xff]
      %v278 = vld [vmem:[%s249 + $0x20] sm:$0xff]
      %v279 = vld [vmem:[%s249 + $0x28] sm:$0xff]
      %v280 = vld [vmem:[%s249 + $0x30] sm:$0xff]
      %v281 = vld [vmem:[%s249 + $0x38] sm:$0xff]
      %v282 = vld [vmem:[%s249 + $0x40] sm:$0xff]
      %v283 = vld [vmem:[%s249 + $0x48] sm:$0xff]
      %v284 = vld [vmem:[%s249 + $0x50] sm:$0xff]
      %v285 = vld [vmem:[%s249 + $0x58] sm:$0xff]
      %v286 = vld [vmem:[%s249 + $0x60] sm:$0xff]
      %v287 = vld [vmem:[%s249 + $0x68] sm:$0xff]
      %v288 = vld [vmem:[%s249 + $0x70] sm:$0xff]
      %v289 = vld [vmem:[%s249 + $0x78] sm:$0xff]
      %s290 = scalar_lea.vmem %s241, 16
      %v291 = vld [vmem:[%s290] sm:$0xff]
      %s292 = scalar_lea.vmem %s249, 128
      %v293 = vld [vmem:[%s292] sm:$0xff]
      %v294 = vld [vmem:[%s292 + $0x8] sm:$0xff]
      %v295 = vld [vmem:[%s292 + $0x10] sm:$0xff]
      %v296 = vld [vmem:[%s292 + $0x18] sm:$0xff]
      %v297 = vld [vmem:[%s292 + $0x20] sm:$0xff]
      %v298 = vld [vmem:[%s292 + $0x28] sm:$0xff]
      %v299 = vld [vmem:[%s292 + $0x30] sm:$0xff]
      %v300 = vld [vmem:[%s292 + $0x38] sm:$0xff]
      %v301 = vld [vmem:[%s292 + $0x40] sm:$0xff]
      %v302 = vld [vmem:[%s292 + $0x48] sm:$0xff]
      %v303 = vld [vmem:[%s292 + $0x50] sm:$0xff]
      %v304 = vld [vmem:[%s292 + $0x58] sm:$0xff]
      %v305 = vld [vmem:[%s292 + $0x60] sm:$0xff]
      %v306 = vld [vmem:[%s292 + $0x68] sm:$0xff]
      %v307 = vld [vmem:[%s292 + $0x70] sm:$0xff]
      %v308 = vld [vmem:[%s292 + $0x78] sm:$0xff]
      %309 = vmatprep.subr.mxu0 0.0
      %310 = vmatpush1.msra.mxu0 %v293
      %311 = vmatprep.subr.mxu0 0.0
      %312 = vmatpush1.msra.mxu0 %v294
      %313 = vmatprep.subr.mxu0 0.0
      %314 = vmatpush1.msra.mxu0 %v295
      %315 = vmatprep.subr.mxu0 0.0
      %316 = vmatpush1.msra.mxu0 %v296
      %317 = vmatprep.subr.mxu0 0.0
      %318 = vmatpush1.msra.mxu0 %v297
      %319 = vmatprep.subr.mxu0 0.0
      %320 = vmatpush1.msra.mxu0 %v298
      %321 = vmatprep.subr.mxu0 0.0
      %322 = vmatpush1.msra.mxu0 %v299
      %323 = vmatprep.subr.mxu0 0.0
      %324 = vmatpush1.msra.mxu0 %v300
      %325 = vmatprep.subr.mxu0 0.0
      %326 = vmatpush1.msra.mxu0 %v301
      %327 = vmatprep.subr.mxu0 0.0
      %328 = vmatpush1.msra.mxu0 %v302
      %329 = vmatprep.subr.mxu0 0.0
      %330 = vmatpush1.msra.mxu0 %v303
      %331 = vmatprep.subr.mxu0 0.0
      %332 = vmatpush1.msra.mxu0 %v304
      %333 = vmatprep.subr.mxu0 0.0
      %334 = vmatpush1.msra.mxu0 %v305
      %335 = vmatprep.subr.mxu0 0.0
      %336 = vmatpush1.msra.mxu0 %v306
      %337 = vmatprep.subr.mxu0 0.0
      %338 = vmatpush1.msra.mxu0 %v307
      %339 = vmatprep.subr.mxu0 0.0
      %340 = vmatpush1.msra.mxu0 %v308
      %341 = vmatprep.subr.mxu0 0.0
      %342 = vmatpush1.msra.mxu0 0.0
      %343 = vmatprep.subr.mxu0 0.0
      %344 = vmatpush1.msra.mxu0 0.0
      %345 = vmatprep.subr.mxu0 0.0
      %346 = vmatpush1.msra.mxu0 0.0
      %347 = vmatprep.subr.mxu0 0.0
      %348 = vmatpush1.msra.mxu0 0.0
      %349 = vmatprep.subr.mxu0 0.0
      %350 = vmatpush1.msra.mxu0 0.0
      %351 = vmatprep.subr.mxu0 0.0
      %352 = vmatpush1.msra.mxu0 0.0
      %353 = vmatprep.subr.mxu0 0.0
      %354 = vmatpush1.msra.mxu0 0.0
      %355 = vmatprep.subr.mxu0 0.0
      %356 = vmatpush1.msra.mxu0 0.0
      %357 = vmatprep.subr.mxu0 0.0
      %358 = vmatpush1.msra.mxu0 0.0
      %359 = vmatprep.subr.mxu0 0.0
      %360 = vmatpush1.msra.mxu0 0.0
      %361 = vmatprep.subr.mxu0 0.0
      %362 = vmatpush1.msra.mxu0 0.0
      %363 = vmatprep.subr.mxu0 0.0
      %364 = vmatpush1.msra.mxu0 0.0
      %365 = vmatprep.subr.mxu0 0.0
      %366 = vmatpush1.msra.mxu0 0.0
      %367 = vmatprep.subr.mxu0 0.0
      %368 = vmatpush1.msra.mxu0 0.0
      %369 = vmatprep.subr.mxu0 0.0
      %370 = vmatpush1.msra.mxu0 0.0
      %371 = vmatprep.subr.mxu0 0.0
      %372 = vmatpush1.msra.mxu0 0.0
      %373 = vmatprep.mubr.f32.mxu0 0.0
      %374 = vmatmul.mubr.f32.gmra.mrb[0].mxu0 %v291
      %v375 = vpop.f32.mrb[0].mxu0
      %v376 = vadd.f32 0.0, %v375
      %v377 = vpop.f32.mrb[0].mxu0
      %378 = vdwg.mxu0
      %379 = vmatprep.subr.mxu0 0.0
      %380 = vmatpush1.msra.mxu0 %v274
      %381 = vmatprep.subr.mxu0 0.0
      %382 = vmatpush1.msra.mxu0 %v275
      %383 = vmatprep.subr.mxu0 0.0
      %384 = vmatpush1.msra.mxu0 %v276
      %385 = vmatprep.subr.mxu0 0.0
      %386 = vmatpush1.msra.mxu0 %v277
      %387 = vmatprep.subr.mxu0 0.0
      %388 = vmatpush1.msra.mxu0 %v278
      %389 = vmatprep.subr.mxu0 0.0
      %390 = vmatpush1.msra.mxu0 %v279
      %391 = vmatprep.subr.mxu0 0.0
      %392 = vmatpush1.msra.mxu0 %v280
      %393 = vmatprep.subr.mxu0 0.0
      %394 = vmatpush1.msra.mxu0 %v281
      %395 = vmatprep.subr.mxu0 0.0
      %396 = vmatpush1.msra.mxu0 %v282
      %397 = vmatprep.subr.mxu0 0.0
      %398 = vmatpush1.msra.mxu0 %v283
      %399 = vmatprep.subr.mxu0 0.0
      %400 = vmatpush1.msra.mxu0 %v284
      %401 = vmatprep.subr.mxu0 0.0
      %402 = vmatpush1.msra.mxu0 %v285
      %403 = vmatprep.subr.mxu0 0.0
      %404 = vmatpush1.msra.mxu0 %v286
      %405 = vmatprep.subr.mxu0 0.0
      %406 = vmatpush1.msra.mxu0 %v287
      %407 = vmatprep.subr.mxu0 0.0
      %408 = vmatpush1.msra.mxu0 %v288
      %409 = vmatprep.subr.mxu0 0.0
      %410 = vmatpush1.msra.mxu0 %v289
      %411 = vmatprep.subr.mxu0 0.0
      %412 = vmatpush1.msra.mxu0 0.0
      %413 = vmatprep.subr.mxu0 0.0
      %414 = vmatpush1.msra.mxu0 0.0
      %415 = vmatprep.subr.mxu0 0.0
      %416 = vmatpush1.msra.mxu0 0.0
      %417 = vmatprep.subr.mxu0 0.0
      %418 = vmatpush1.msra.mxu0 0.0
      %419 = vmatprep.subr.mxu0 0.0
      %420 = vmatpush1.msra.mxu0 0.0
      %421 = vmatprep.subr.mxu0 0.0
      %422 = vmatpush1.msra.mxu0 0.0
      %423 = vmatprep.subr.mxu0 0.0
      %424 = vmatpush1.msra.mxu0 0.0
      %425 = vmatprep.subr.mxu0 0.0
      %426 = vmatpush1.msra.mxu0 0.0
      %427 = vmatprep.subr.mxu0 0.0
      %428 = vmatpush1.msra.mxu0 0.0
      %429 = vmatprep.subr.mxu0 0.0
      %430 = vmatpush1.msra.mxu0 0.0
      %431 = vmatprep.subr.mxu0 0.0
      %432 = vmatpush1.msra.mxu0 0.0
      %433 = vmatprep.subr.mxu0 0.0
      %434 = vmatpush1.msra.mxu0 0.0
      %435 = vmatprep.subr.mxu0 0.0
      %436 = vmatpush1.msra.mxu0 0.0
      %437 = vmatprep.subr.mxu0 0.0
      %438 = vmatpush1.msra.mxu0 0.0
      %439 = vmatprep.subr.mxu0 0.0
      %440 = vmatpush1.msra.mxu0 0.0
      %441 = vmatprep.subr.mxu0 0.0
      %442 = vmatpush1.msra.mxu0 0.0
      %443 = vmatprep.mubr.f32.mxu0 0.0
      %444 = vmatmul.mubr.f32.gmra.mrb[0].mxu0 %v273
      %v445 = vpop.f32.mrb[0].mxu0
      %v446 = vadd.f32 %v376, %v445
      %v447 = vpop.f32.mrb[0].mxu0
      %448 = vdwg.mxu0
      %v449 = vld [vmem:[%s241 + $0x1] sm:$0xff]
      %s450 = scalar_lea.vmem %s249, 256
      %v451 = vld [vmem:[%s450] sm:$0xff]
      %v452 = vld [vmem:[%s450 + $0x8] sm:$0xff]
      %v453 = vld [vmem:[%s450 + $0x10] sm:$0xff]
      %v454 = vld [vmem:[%s450 + $0x18] sm:$0xff]
      %v455 = vld [vmem:[%s450 + $0x20] sm:$0xff]
      %v456 = vld [vmem:[%s450 + $0x28] sm:$0xff]
      %v457 = vld [vmem:[%s450 + $0x30] sm:$0xff]
      %v458 = vld [vmem:[%s450 + $0x38] sm:$0xff]
      %v459 = vld [vmem:[%s450 + $0x40] sm:$0xff]
      %v460 = vld [vmem:[%s450 + $0x48] sm:$0xff]
      %v461 = vld [vmem:[%s450 + $0x50] sm:$0xff]
      %v462 = vld [vmem:[%s450 + $0x58] sm:$0xff]
      %v463 = vld [vmem:[%s450 + $0x60] sm:$0xff]
      %v464 = vld [vmem:[%s450 + $0x68] sm:$0xff]
      %v465 = vld [vmem:[%s450 + $0x70] sm:$0xff]
      %v466 = vld [vmem:[%s450 + $0x78] sm:$0xff]
      %467 = vmatprep.subr.mxu0 0.0
      %468 = vmatpush1.msra.mxu0 %v451
      %469 = vmatprep.subr.mxu0 0.0
      %470 = vmatpush1.msra.mxu0 %v452
      %471 = vmatprep.subr.mxu0 0.0
      %472 = vmatpush1.msra.mxu0 %v453
      %473 = vmatprep.subr.mxu0 0.0
      %474 = vmatpush1.msra.mxu0 %v454
      %475 = vmatprep.subr.mxu0 0.0
      %476 = vmatpush1.msra.mxu0 %v455
      %477 = vmatprep.subr.mxu0 0.0
      %478 = vmatpush1.msra.mxu0 %v456
      %479 = vmatprep.subr.mxu0 0.0
      %480 = vmatpush1.msra.mxu0 %v457
      %481 = vmatprep.subr.mxu0 0.0
      %482 = vmatpush1.msra.mxu0 %v458
      %483 = vmatprep.subr.mxu0 0.0
      %484 = vmatpush1.msra.mxu0 %v459
      %485 = vmatprep.subr.mxu0 0.0
      %486 = vmatpush1.msra.mxu0 %v460
      %487 = vmatprep.subr.mxu0 0.0
      %488 = vmatpush1.msra.mxu0 %v461
      %489 = vmatprep.subr.mxu0 0.0
      %490 = vmatpush1.msra.mxu0 %v462
      %491 = vmatprep.subr.mxu0 0.0
      %492 = vmatpush1.msra.mxu0 %v463
      %493 = vmatprep.subr.mxu0 0.0
      %494 = vmatpush1.msra.mxu0 %v464
      %495 = vmatprep.subr.mxu0 0.0
      %496 = vmatpush1.msra.mxu0 %v465
      %497 = vmatprep.subr.mxu0 0.0
      %498 = vmatpush1.msra.mxu0 %v466
      %499 = vmatprep.subr.mxu0 0.0
      %500 = vmatpush1.msra.mxu0 0.0
      %501 = vmatprep.subr.mxu0 0.0
      %502 = vmatpush1.msra.mxu0 0.0
      %503 = vmatprep.subr.mxu0 0.0
      %504 = vmatpush1.msra.mxu0 0.0
      %505 = vmatprep.subr.mxu0 0.0
      %506 = vmatpush1.msra.mxu0 0.0
      %507 = vmatprep.subr.mxu0 0.0
      %508 = vmatpush1.msra.mxu0 0.0
      %509 = vmatprep.subr.mxu0 0.0
      %510 = vmatpush1.msra.mxu0 0.0
      %511 = vmatprep.subr.mxu0 0.0
      %512 = vmatpush1.msra.mxu0 0.0
      %513 = vmatprep.subr.mxu0 0.0
      %514 = vmatpush1.msra.mxu0 0.0
      %515 = vmatprep.subr.mxu0 0.0
      %516 = vmatpush1.msra.mxu0 0.0
      %517 = vmatprep.subr.mxu0 0.0
      %518 = vmatpush1.msra.mxu0 0.0
      %519 = vmatprep.subr.mxu0 0.0
      %520 = vmatpush1.msra.mxu0 0.0
      %521 = vmatprep.subr.mxu0 0.0
      %522 = vmatpush1.msra.mxu0 0.0
      %523 = vmatprep.subr.mxu0 0.0
      %524 = vmatpush1.msra.mxu0 0.0
      %525 = vmatprep.subr.mxu0 0.0
      %526 = vmatpush1.msra.mxu0 0.0
      %527 = vmatprep.subr.mxu0 0.0
      %528 = vmatpush1.msra.mxu0 0.0
      %529 = vmatprep.subr.mxu0 0.0
      %530 = vmatpush1.msra.mxu0 0.0
      %531 = vmatprep.mubr.f32.mxu0 0.0
      %532 = vmatmul.mubr.f32.gmra.mrb[0].mxu0 %v449
      %v533 = vpop.f32.mrb[0].mxu0
      %v534 = vadd.f32 0.0, %v533
      %v535 = vpop.f32.mrb[0].mxu0
      %536 = vdwg.mxu0
      %v537 = vadd.f32 %v446, %v534
      %v538 = vld [vmem:[#allocation2] sm:$0xff]
      %v539 = vadd.f32 %v538, %v537
      %540 = vst [vmem:[#allocation2] sm:$0xff] %v539
      %p541 = scmp.eq.s32.totalorder %s22, 2
      // Predicated region
      $region37: #{bottleneck_forward.8} parent=27 // pred_check
        %p542 = pneg %p541
      $region38: #{bottleneck_forward.8} parent=27 // pred_check_branch
        %544 = sbr.rel (%p542) target = $region40
      $region39: #{bottleneck_forward.8} parent=27 // pred_region
        %v545 = vld [vmem:[#allocation2] sm:$0xff]
        %546 = vst [vmem:[%s257] sm:$0xff] %v545
        %v547 = vld [vmem:[%s261] sm:$0x1]
        %v548 = vrot.slane %v545, 4
        %v549 = vadd.f32 %v545, %v548
        %v550 = vrot.slane %v549, 2
        %v551 = vadd.f32 %v549, %v550
        %v552 = vrot.slane %v551, 1
        %v553 = vadd.f32 %v551, %v552
        %v554 = vadd.f32 %v547, %v553
        %555 = vst [vmem:[%s261] sm:$0x1] %v554
        %v556 = vld [vmem:[%s261 + $0x1] sm:$0x1]
        %v557 = vmul.f32 %v545, %v545
        %v558 = vrot.slane %v557, 4
        %v559 = vadd.f32 %v557, %v558
        %v560 = vrot.slane %v559, 2
        %v561 = vadd.f32 %v559, %v560
        %v562 = vrot.slane %v561, 1
        %v563 = vadd.f32 %v561, %v562
        %v564 = vadd.f32 %v556, %v563
        %565 = vst [vmem:[%s261 + $0x1] sm:$0x1] %v564
      $region40: #{bottleneck_forward.8} parent=27 // pred_fallthru
        _
      %p566 = scmp.lt.s32.totalorder %s20, 1
      %s567 = scalar_select %p566, %s20, 1
      %p568 = scmp.lt.s32.totalorder %s21, 7
      %s569 = scalar_select %p568, %s21, 7
      %s570 = smul.addr %s567, 8
      %s571 = sadd.s32 %s569, %s570
      %s572 = smul.addr %s571, 8
      %s573 = scalar_lea.vmem %s2, %s572
      %p574 = scmp.lt.s32.totalorder %s20, 1
      %s575 = scalar_select %p574, %s20, 1
      %s576 = smul.addr %s575, 2
      %s577 = scalar_lea.vmem %s3, %s576
      // Predicated region
      $region41: #{bottleneck_forward.8} parent=27 // pred_check
        %p578 = pneg %p112
      $region42: #{bottleneck_forward.8} parent=27 // pred_check_branch
        %580 = sbr.rel (%p578) target = $region44
      $region43: #{bottleneck_forward.8} parent=27 // pred_region
        _
      $region44: #{bottleneck_forward.8} parent=27 // pred_fallthru
        _
      // Predicated region
      $region45: #{bottleneck_forward.8} parent=27 // pred_check
        %p581 = pneg %p138
      $region46: #{bottleneck_forward.8} parent=27 // pred_check_branch
        %583 = sbr.rel (%p581) target = $region48
      $region47: #{bottleneck_forward.8} parent=27 // pred_region
        _
      $region48: #{bottleneck_forward.8} parent=27 // pred_fallthru
        _
    $region28: #{bottleneck_forward.8} parent=5 // pred_fallthru
      _
    %p584 = scmp.le.s32.totalorder 2, %s10
    // Predicated region
    $region49: #{bottleneck_forward.8} parent=5 // pred_check
      %p585 = pneg %p584
    $region50: #{bottleneck_forward.8} parent=5 // pred_check_branch
      %587 = sbr.rel (%p585) target = $region52
    $region51: #{bottleneck_forward.8} parent=5 // pred_region
      %s588 = ssub.s32 %s10, 2
      // Predicated region
      $region53: #{bottleneck_forward.8} parent=51 // pred_check
        %p589 = pneg %p118
      $region54: #{bottleneck_forward.8} parent=51 // pred_check_branch
        %591 = sbr.rel (%p589) target = $region56
      $region55: #{bottleneck_forward.8} parent=51 // pred_region
        %p592 = scmp.lt.s32.totalorder %s23, 1
        %s593 = scalar_select %p592, %s23, 1
        %p594 = scmp.lt.s32.totalorder %s24, 7
        %s595 = scalar_select %p594, %s24, 7
        %s596 = smul.addr %s593, 8
        %s597 = sadd.s32 %s595, %s596
        %s598 = smul.addr %s597, 8
        %s599 = scalar_lea.vmem %s2, %s598
      $region56: #{bottleneck_forward.8} parent=51 // pred_fallthru
        _
      // Predicated region
      $region57: #{bottleneck_forward.8} parent=51 // pred_check
        %p600 = pneg %p144
      $region58: #{bottleneck_forward.8} parent=51 // pred_check_branch
        %602 = sbr.rel (%p600) target = $region60
      $region59: #{bottleneck_forward.8} parent=51 // pred_region
        %p603 = scmp.lt.s32.totalorder %s23, 1
        %s604 = scalar_select %p603, %s23, 1
        %s605 = smul.addr %s604, 2
        %s606 = scalar_lea.vmem %s3, %s605
      $region60: #{bottleneck_forward.8} parent=51 // pred_fallthru
        _
    $region52: #{bottleneck_forward.8} parent=5 // pred_fallthru
      _
  $region6: #{bottleneck_forward.8} parent=0 // loop_footer
    %s14 = sadd.s32 1, %s10
  $region7: #{bottleneck_forward.8} parent=0 // loop_footer_branch
    %9 = sbr.rel target = $region3
  $region8: #{bottleneck_forward.8} parent=0 // loop_exit
    _

// kernel: bottleneck_forward.9
$region0: #{bottleneck_forward.9}
  #allocation0 [shape = 'u32[]', space=smem, size = 0x4, offset = 0x4, fixed_abs, tag = 'smem constant byte address 0x4 - core index']
  #allocation1 [shape = 'u32[144,128]{1,0:T(1,128)}', space=vmem, size = 0x12000, scoped, tag = 'internal scratch']
  #allocation2 [shape = 'f32[128,128]{1,0:T(8,128)}', space=vmem, size = 0x10000, scoped, tag = 'scratch operand']
  %s0 = inlined_call_operand.vmem [shape: f32[128,128], index: 0, kind: input, shape index: {}]
  %s1 = inlined_call_operand.vmem [shape: f32[128,128], index: 1, kind: input, shape index: {}]
  %s2 = inlined_call_operand.vmem [shape: f32[1,128], index: 2, kind: input, shape index: {}]
  %s3 = inlined_call_operand.vmem [shape: f32[128,128], index: 3, kind: output, shape index: {0}]
  %s4 = inlined_call_operand.vmem [shape: f32[1,2,128], index: 4, kind: output, shape index: {1}]
  %5 = xla_tuple %s3, %s4
  %s6 = sld [smem:[#allocation0]]
  $region38: #{bottleneck_forward.9} parent=0
    _
  %s8 = ssub.s32 1, %s6
  %s9 = scalar_select 0, %s8, %s6
  // Predicated region
  $region2: #{bottleneck_forward.9} parent=0 // pred_check
    _
  $region3: #{bottleneck_forward.9} parent=0 // pred_check_branch
    %11 = sbr.rel (0) target = $region5
  $region4: #{bottleneck_forward.9} parent=0 // pred_region
    _
  $region5: #{bottleneck_forward.9} parent=0 // pred_fallthru
    _
  // Predicated region
  $region6: #{bottleneck_forward.9} parent=0 // pred_check
    _
  $region7: #{bottleneck_forward.9} parent=0 // pred_check_branch
    %13 = sbr.rel (0) target = $region9
  $region8: #{bottleneck_forward.9} parent=0 // pred_region
    _
  $region9: #{bottleneck_forward.9} parent=0 // pred_fallthru
    _
  // Predicated region
  $region10: #{bottleneck_forward.9} parent=0 // pred_check
    _
  $region11: #{bottleneck_forward.9} parent=0 // pred_check_branch
    %15 = sbr.rel (0) target = $region13
  $region12: #{bottleneck_forward.9} parent=0 // pred_region
    _
  $region13: #{bottleneck_forward.9} parent=0 // pred_fallthru
    _
  %p16 = scmp.eq.s32.totalorder 0, 0
  // Predicated region
  $region14: #{bottleneck_forward.9} parent=0 // pred_check
    %p17 = pneg %p16
  $region15: #{bottleneck_forward.9} parent=0 // pred_check_branch
    %19 = sbr.rel (%p17) target = $region17
  $region16: #{bottleneck_forward.9} parent=0 // pred_region
    %20 = vst [vmem:[#allocation2] sm:$0xff] 0.0
    %21 = vst [vmem:[#allocation2 + $0x8] sm:$0xff] 0.0
    %22 = vst [vmem:[#allocation2 + $0x10] sm:$0xff] 0.0
    %23 = vst [vmem:[#allocation2 + $0x18] sm:$0xff] 0.0
    %24 = vst [vmem:[#allocation2 + $0x20] sm:$0xff] 0.0
    %25 = vst [vmem:[#allocation2 + $0x28] sm:$0xff] 0.0
    %26 = vst [vmem:[#allocation2 + $0x30] sm:$0xff] 0.0
    %27 = vst [vmem:[#allocation2 + $0x38] sm:$0xff] 0.0
    %28 = vst [vmem:[#allocation2 + $0x40] sm:$0xff] 0.0
    %29 = vst [vmem:[#allocation2 + $0x48] sm:$0xff] 0.0
    %30 = vst [vmem:[#allocation2 + $0x50] sm:$0xff] 0.0
    %31 = vst [vmem:[#allocation2 + $0x58] sm:$0xff] 0.0
    %32 = vst [vmem:[#allocation2 + $0x60] sm:$0xff] 0.0
    %33 = vst [vmem:[#allocation2 + $0x68] sm:$0xff] 0.0
    %34 = vst [vmem:[#allocation2 + $0x70] sm:$0xff] 0.0
    %35 = vst [vmem:[#allocation2 + $0x78] sm:$0xff] 0.0
  $region17: #{bottleneck_forward.9} parent=0 // pred_fallthru
    _
  %v36 = vld [vmem:[#allocation2] sm:$0xff]
  %v37 = vld [vmem:[#allocation2 + $0x8] sm:$0xff]
  %v38 = vld [vmem:[#allocation2 + $0x10] sm:$0xff]
  %v39 = vld [vmem:[#allocation2 + $0x18] sm:$0xff]
  %v40 = vld [vmem:[#allocation2 + $0x20] sm:$0xff]
  %v41 = vld [vmem:[#allocation2 + $0x28] sm:$0xff]
  %v42 = vld [vmem:[#allocation2 + $0x30] sm:$0xff]
  %v43 = vld [vmem:[#allocation2 + $0x38] sm:$0xff]
  %v44 = vld [vmem:[#allocation2 + $0x40] sm:$0xff]
  %v45 = vld [vmem:[#allocation2 + $0x48] sm:$0xff]
  %v46 = vld [vmem:[#allocation2 + $0x50] sm:$0xff]
  %v47 = vld [vmem:[#allocation2 + $0x58] sm:$0xff]
  %v48 = vld [vmem:[#allocation2 + $0x60] sm:$0xff]
  %v49 = vld [vmem:[#allocation2 + $0x68] sm:$0xff]
  %v50 = vld [vmem:[#allocation2 + $0x70] sm:$0xff]
  %v51 = vld [vmem:[#allocation2 + $0x78] sm:$0xff]
  %v52 = vld [vmem:[%s0] sm:$0xff]
  %v53 = vld [vmem:[%s0 + $0x8] sm:$0xff]
  %v54 = vld [vmem:[%s0 + $0x10] sm:$0xff]
  %v55 = vld [vmem:[%s0 + $0x18] sm:$0xff]
  %v56 = vld [vmem:[%s0 + $0x20] sm:$0xff]
  %v57 = vld [vmem:[%s0 + $0x28] sm:$0xff]
  %v58 = vld [vmem:[%s0 + $0x30] sm:$0xff]
  %v59 = vld [vmem:[%s0 + $0x38] sm:$0xff]
  %v60 = vld [vmem:[%s0 + $0x40] sm:$0xff]
  %v61 = vld [vmem:[%s0 + $0x48] sm:$0xff]
  %v62 = vld [vmem:[%s0 + $0x50] sm:$0xff]
  %v63 = vld [vmem:[%s0 + $0x58] sm:$0xff]
  %v64 = vld [vmem:[%s0 + $0x60] sm:$0xff]
  %v65 = vld [vmem:[%s0 + $0x68] sm:$0xff]
  %v66 = vld [vmem:[%s0 + $0x70] sm:$0xff]
  %v67 = vld [vmem:[%s0 + $0x78] sm:$0xff]
  %v68 = vld [vmem:[%s1] sm:$0xff]
  %v69 = vld [vmem:[%s1 + $0x8] sm:$0xff]
  %v70 = vld [vmem:[%s1 + $0x10] sm:$0xff]
  %v71 = vld [vmem:[%s1 + $0x18] sm:$0xff]
  %v72 = vld [vmem:[%s1 + $0x20] sm:$0xff]
  %v73 = vld [vmem:[%s1 + $0x28] sm:$0xff]
  %v74 = vld [vmem:[%s1 + $0x30] sm:$0xff]
  %v75 = vld [vmem:[%s1 + $0x38] sm:$0xff]
  %v76 = vld [vmem:[%s1 + $0x40] sm:$0xff]
  %v77 = vld [vmem:[%s1 + $0x48] sm:$0xff]
  %v78 = vld [vmem:[%s1 + $0x50] sm:$0xff]
  %v79 = vld [vmem:[%s1 + $0x58] sm:$0xff]
  %v80 = vld [vmem:[%s1 + $0x60] sm:$0xff]
  %v81 = vld [vmem:[%s1 + $0x68] sm:$0xff]
  %v82 = vld [vmem:[%s1 + $0x70] sm:$0xff]
  %v83 = vld [vmem:[%s1 + $0x78] sm:$0xff]
  %84 = vmatprep.subr.mxu0 0.0
  %85 = vmatpush1.msra.mxu0 %v68
  %86 = vmatprep.subr.mxu0 0.0
  %87 = vmatpush1.msra.mxu0 %v69
  %88 = vmatprep.subr.mxu0 0.0
  %89 = vmatpush1.msra.mxu0 %v70
  %90 = vmatprep.subr.mxu0 0.0
  %91 = vmatpush1.msra.mxu0 %v71
  %92 = vmatprep.subr.mxu0 0.0
  %93 = vmatpush1.msra.mxu0 %v72
  %94 = vmatprep.subr.mxu0 0.0
  %95 = vmatpush1.msra.mxu0 %v73
  %96 = vmatprep.subr.mxu0 0.0
  %97 = vmatpush1.msra.mxu0 %v74
  %98 = vmatprep.subr.mxu0 0.0
  %99 = vmatpush1.msra.mxu0 %v75
  %100 = vmatprep.subr.mxu0 0.0
  %101 = vmatpush1.msra.mxu0 %v76
  %102 = vmatprep.subr.mxu0 0.0
  %103 = vmatpush1.msra.mxu0 %v77
  %104 = vmatprep.subr.mxu0 0.0
  %105 = vmatpush1.msra.mxu0 %v78
  %106 = vmatprep.subr.mxu0 0.0
  %107 = vmatpush1.msra.mxu0 %v79
  %108 = vmatprep.subr.mxu0 0.0
  %109 = vmatpush1.msra.mxu0 %v80
  %110 = vmatprep.subr.mxu0 0.0
  %111 = vmatpush1.msra.mxu0 %v81
  %112 = vmatprep.subr.mxu0 0.0
  %113 = vmatpush1.msra.mxu0 %v82
  %114 = vmatprep.subr.mxu0 0.0
  %115 = vmatpush1.msra.mxu0 %v83
  %116 = vmatprep.subr.mxu0 0.0
  %117 = vmatpush1.msra.mxu0 0.0
  %118 = vmatprep.subr.mxu0 0.0
  %119 = vmatpush1.msra.mxu0 0.0
  %120 = vmatprep.subr.mxu0 0.0
  %121 = vmatpush1.msra.mxu0 0.0
  %122 = vmatprep.subr.mxu0 0.0
  %123 = vmatpush1.msra.mxu0 0.0
  %124 = vmatprep.subr.mxu0 0.0
  %125 = vmatpush1.msra.mxu0 0.0
  %126 = vmatprep.subr.mxu0 0.0
  %127 = vmatpush1.msra.mxu0 0.0
  %128 = vmatprep.subr.mxu0 0.0
  %129 = vmatpush1.msra.mxu0 0.0
  %130 = vmatprep.subr.mxu0 0.0
  %131 = vmatpush1.msra.mxu0 0.0
  %132 = vmatprep.subr.mxu0 0.0
  %133 = vmatpush1.msra.mxu0 0.0
  %134 = vmatprep.subr.mxu0 0.0
  %135 = vmatpush1.msra.mxu0 0.0
  %136 = vmatprep.subr.mxu0 0.0
  %137 = vmatpush1.msra.mxu0 0.0
  %138 = vmatprep.subr.mxu0 0.0
  %139 = vmatpush1.msra.mxu0 0.0
  %140 = vmatprep.subr.mxu0 0.0
  %141 = vmatpush1.msra.mxu0 0.0
  %142 = vmatprep.subr.mxu0 0.0
  %143 = vmatpush1.msra.mxu0 0.0
  %144 = vmatprep.subr.mxu0 0.0
  %145 = vmatpush1.msra.mxu0 0.0
  %146 = vmatprep.subr.mxu0 0.0
  %147 = vmatpush1.msra.mxu0 0.0
  %148 = vmatprep.mubr.f32.mxu0 0.0
  %149 = vmatmul.mubr.f32.gmra.mrb[0].mxu0 %v52
  %v150 = vpop.f32.mrb[0].mxu0
  %v151 = vadd.f32 0.0, %v150
  %v152 = vpop.f32.mrb[0].mxu0
  %153 = vmatprep.mubr.f32.mxu0 0.0
  %154 = vmatmul.mubr.f32.gmra.mrb[0].mxu0 %v53
  %v155 = vpop.f32.mrb[0].mxu0
  %v156 = vadd.f32 0.0, %v155
  %v157 = vpop.f32.mrb[0].mxu0
  %158 = vmatprep.mubr.f32.mxu0 0.0
  %159 = vmatmul.mubr.f32.gmra.mrb[0].mxu0 %v54
  %v160 = vpop.f32.mrb[0].mxu0
  %v161 = vadd.f32 0.0, %v160
  %v162 = vpop.f32.mrb[0].mxu0
  %163 = vmatprep.mubr.f32.mxu0 0.0
  %164 = vmatmul.mubr.f32.gmra.mrb[0].mxu0 %v55
  %v165 = vpop.f32.mrb[0].mxu0
  %v166 = vadd.f32 0.0, %v165
  %v167 = vpop.f32.mrb[0].mxu0
  %168 = vmatprep.mubr.f32.mxu0 0.0
  %169 = vmatmul.mubr.f32.gmra.mrb[0].mxu0 %v56
  %v170 = vpop.f32.mrb[0].mxu0
  %v171 = vadd.f32 0.0, %v170
  %v172 = vpop.f32.mrb[0].mxu0
  %173 = vmatprep.mubr.f32.mxu0 0.0
  %174 = vmatmul.mubr.f32.gmra.mrb[0].mxu0 %v57
  %v175 = vpop.f32.mrb[0].mxu0
  %v176 = vadd.f32 0.0, %v175
  %v177 = vpop.f32.mrb[0].mxu0
  %178 = vmatprep.mubr.f32.mxu0 0.0
  %179 = vmatmul.mubr.f32.gmra.mrb[0].mxu0 %v58
  %v180 = vpop.f32.mrb[0].mxu0
  %v181 = vadd.f32 0.0, %v180
  %v182 = vpop.f32.mrb[0].mxu0
  %183 = vmatprep.mubr.f32.mxu0 0.0
  %184 = vmatmul.mubr.f32.gmra.mrb[0].mxu0 %v59
  %v185 = vpop.f32.mrb[0].mxu0
  %v186 = vadd.f32 0.0, %v185
  %v187 = vpop.f32.mrb[0].mxu0
  %188 = vmatprep.mubr.f32.mxu0 0.0
  %189 = vmatmul.mubr.f32.gmra.mrb[0].mxu0 %v60
  %v190 = vpop.f32.mrb[0].mxu0
  %v191 = vadd.f32 0.0, %v190
  %v192 = vpop.f32.mrb[0].mxu0
  %193 = vmatprep.mubr.f32.mxu0 0.0
  %194 = vmatmul.mubr.f32.gmra.mrb[0].mxu0 %v61
  %v195 = vpop.f32.mrb[0].mxu0
  %v196 = vadd.f32 0.0, %v195
  %v197 = vpop.f32.mrb[0].mxu0
  %198 = vmatprep.mubr.f32.mxu0 0.0
  %199 = vmatmul.mubr.f32.gmra.mrb[0].mxu0 %v62
  %v200 = vpop.f32.mrb[0].mxu0
  %v201 = vadd.f32 0.0, %v200
  %v202 = vpop.f32.mrb[0].mxu0
  %203 = vmatprep.mubr.f32.mxu0 0.0
  %204 = vmatmul.mubr.f32.gmra.mrb[0].mxu0 %v63
  %v205 = vpop.f32.mrb[0].mxu0
  %v206 = vadd.f32 0.0, %v205
  %v207 = vpop.f32.mrb[0].mxu0
  %208 = vmatprep.mubr.f32.mxu0 0.0
  %209 = vmatmul.mubr.f32.gmra.mrb[0].mxu0 %v64
  %v210 = vpop.f32.mrb[0].mxu0
  %v211 = vadd.f32 0.0, %v210
  %v212 = vpop.f32.mrb[0].mxu0
  %213 = vmatprep.mubr.f32.mxu0 0.0
  %214 = vmatmul.mubr.f32.gmra.mrb[0].mxu0 %v65
  %v215 = vpop.f32.mrb[0].mxu0
  %v216 = vadd.f32 0.0, %v215
  %v217 = vpop.f32.mrb[0].mxu0
  %218 = vmatprep.mubr.f32.mxu0 0.0
  %219 = vmatmul.mubr.f32.gmra.mrb[0].mxu0 %v66
  %v220 = vpop.f32.mrb[0].mxu0
  %v221 = vadd.f32 0.0, %v220
  %v222 = vpop.f32.mrb[0].mxu0
  %223 = vmatprep.mubr.f32.mxu0 0.0
  %224 = vmatmul.mubr.f32.gmra.mrb[0].mxu0 %v67
  %v225 = vpop.f32.mrb[0].mxu0
  %v226 = vadd.f32 0.0, %v225
  %v227 = vpop.f32.mrb[0].mxu0
  %228 = vdwg.mxu0
  %v229 = vadd.f32 %v36, %v151
  %v230 = vadd.f32 %v37, %v156
  %v231 = vadd.f32 %v38, %v161
  %v232 = vadd.f32 %v39, %v166
  %v233 = vadd.f32 %v40, %v171
  %v234 = vadd.f32 %v41, %v176
  %v235 = vadd.f32 %v42, %v181
  %v236 = vadd.f32 %v43, %v186
  %v237 = vadd.f32 %v44, %v191
  %v238 = vadd.f32 %v45, %v196
  %v239 = vadd.f32 %v46, %v201
  %v240 = vadd.f32 %v47, %v206
  %v241 = vadd.f32 %v48, %v211
  %v242 = vadd.f32 %v49, %v216
  %v243 = vadd.f32 %v50, %v221
  %v244 = vadd.f32 %v51, %v226
  %245 = vst [vmem:[#allocation2] sm:$0xff] %v229
  %246 = vst [vmem:[#allocation2 + $0x8] sm:$0xff] %v230
  %247 = vst [vmem:[#allocation2 + $0x10] sm:$0xff] %v231
  %248 = vst [vmem:[#allocation2 + $0x18] sm:$0xff] %v232
  %249 = vst [vmem:[#allocation2 + $0x20] sm:$0xff] %v233
  %250 = vst [vmem:[#allocation2 + $0x28] sm:$0xff] %v234
  %251 = vst [vmem:[#allocation2 + $0x30] sm:$0xff] %v235
  %252 = vst [vmem:[#allocation2 + $0x38] sm:$0xff] %v236
  %253 = vst [vmem:[#allocation2 + $0x40] sm:$0xff] %v237
  %254 = vst [vmem:[#allocation2 + $0x48] sm:$0xff] %v238
  %255 = vst [vmem:[#allocation2 + $0x50] sm:$0xff] %v239
  %256 = vst [vmem:[#allocation2 + $0x58] sm:$0xff] %v240
  %257 = vst [vmem:[#allocation2 + $0x60] sm:$0xff] %v241
  %258 = vst [vmem:[#allocation2 + $0x68] sm:$0xff] %v242
  %259 = vst [vmem:[#allocation2 + $0x70] sm:$0xff] %v243
  %260 = vst [vmem:[#allocation2 + $0x78] sm:$0xff] %v244
  // Predicated region
  $region18: #{bottleneck_forward.9} parent=0 // pred_check
    %p261 = pneg %p16
  $region19: #{bottleneck_forward.9} parent=0 // pred_check_branch
    %263 = sbr.rel (%p261) target = $region21
  $region20: #{bottleneck_forward.9} parent=0 // pred_region
    %v264 = vld [vmem:[#allocation2] sm:$0xff]
    %v265 = vld [vmem:[#allocation2 + $0x8] sm:$0xff]
    %v266 = vld [vmem:[#allocation2 + $0x10] sm:$0xff]
    %v267 = vld [vmem:[#allocation2 + $0x18] sm:$0xff]
    %v268 = vld [vmem:[#allocation2 + $0x20] sm:$0xff]
    %v269 = vld [vmem:[#allocation2 + $0x28] sm:$0xff]
    %v270 = vld [vmem:[#allocation2 + $0x30] sm:$0xff]
    %v271 = vld [vmem:[#allocation2 + $0x38] sm:$0xff]
    %v272 = vld [vmem:[#allocation2 + $0x40] sm:$0xff]
    %v273 = vld [vmem:[#allocation2 + $0x48] sm:$0xff]
    %v274 = vld [vmem:[#allocation2 + $0x50] sm:$0xff]
    %v275 = vld [vmem:[#allocation2 + $0x58] sm:$0xff]
    %v276 = vld [vmem:[#allocation2 + $0x60] sm:$0xff]
    %v277 = vld [vmem:[#allocation2 + $0x68] sm:$0xff]
    %v278 = vld [vmem:[#allocation2 + $0x70] sm:$0xff]
    %v279 = vld [vmem:[#allocation2 + $0x78] sm:$0xff]
    %v280 = vld [vmem:[%s2] sm:$0x1]
    %v282 = vlaneseq
    %v283 = vshrl.u32 %v282, 7
    %v284 = vsub.s32 0, %v283
    %v285 = vrot.slane %v280, %v284
    %v287 = vadd.f32 %v264, %v285
    %v288 = vadd.f32 %v265, %v285
    %v289 = vadd.f32 %v266, %v285
    %v290 = vadd.f32 %v267, %v285
    %v291 = vadd.f32 %v268, %v285
    %v292 = vadd.f32 %v269, %v285
    %v293 = vadd.f32 %v270, %v285
    %v294 = vadd.f32 %v271, %v285
    %v295 = vadd.f32 %v272, %v285
    %v296 = vadd.f32 %v273, %v285
    %v297 = vadd.f32 %v274, %v285
    %v298 = vadd.f32 %v275, %v285
    %v299 = vadd.f32 %v276, %v285
    %v300 = vadd.f32 %v277, %v285
    %v301 = vadd.f32 %v278, %v285
    %v302 = vadd.f32 %v279, %v285
    %303 = vst [vmem:[%s3] sm:$0xff] %v287
    %304 = vst [vmem:[%s3 + $0x8] sm:$0xff] %v288
    %305 = vst [vmem:[%s3 + $0x10] sm:$0xff] %v289
    %306 = vst [vmem:[%s3 + $0x18] sm:$0xff] %v290
    %307 = vst [vmem:[%s3 + $0x20] sm:$0xff] %v291
    %308 = vst [vmem:[%s3 + $0x28] sm:$0xff] %v292
    %309 = vst [vmem:[%s3 + $0x30] sm:$0xff] %v293
    %310 = vst [vmem:[%s3 + $0x38] sm:$0xff] %v294
    %311 = vst [vmem:[%s3 + $0x40] sm:$0xff] %v295
    %312 = vst [vmem:[%s3 + $0x48] sm:$0xff] %v296
    %313 = vst [vmem:[%s3 + $0x50] sm:$0xff] %v297
    %314 = vst [vmem:[%s3 + $0x58] sm:$0xff] %v298
    %315 = vst [vmem:[%s3 + $0x60] sm:$0xff] %v299
    %316 = vst [vmem:[%s3 + $0x68] sm:$0xff] %v300
    %317 = vst [vmem:[%s3 + $0x70] sm:$0xff] %v301
    %318 = vst [vmem:[%s3 + $0x78] sm:$0xff] %v302
    %v319 = vadd.f32 %v287, %v288
    %v320 = vadd.f32 %v319, %v289
    %v321 = vadd.f32 %v320, %v290
    %v322 = vadd.f32 %v321, %v291
    %v323 = vadd.f32 %v322, %v292
    %v324 = vadd.f32 %v323, %v293
    %v325 = vadd.f32 %v324, %v294
    %v326 = vadd.f32 %v325, %v295
    %v327 = vadd.f32 %v326, %v296
    %v328 = vadd.f32 %v327, %v297
    %v329 = vadd.f32 %v328, %v298
    %v330 = vadd.f32 %v329, %v299
    %v331 = vadd.f32 %v330, %v300
    %v332 = vadd.f32 %v331, %v301
    %v333 = vadd.f32 %v332, %v302
    %v334 = vrot.slane %v333, 4
    %v335 = vadd.f32 %v333, %v334
    %v336 = vrot.slane %v335, 2
    %v337 = vadd.f32 %v335, %v336
    %v338 = vrot.slane %v337, 1
    %v339 = vadd.f32 %v337, %v338
    %340 = vst [vmem:[%s4] sm:$0x1] %v339
    %v341 = vmul.f32 %v287, %v287
    %v342 = vmul.f32 %v288, %v288
    %v343 = vmul.f32 %v289, %v289
    %v344 = vmul.f32 %v290, %v290
    %v345 = vmul.f32 %v291, %v291
    %v346 = vmul.f32 %v292, %v292
    %v347 = vmul.f32 %v293, %v293
    %v348 = vmul.f32 %v294, %v294
    %v349 = vmul.f32 %v295, %v295
    %v350 = vmul.f32 %v296, %v296
    %v351 = vmul.f32 %v297, %v297
    %v352 = vmul.f32 %v298, %v298
    %v353 = vmul.f32 %v299, %v299
    %v354 = vmul.f32 %v300, %v300
    %v355 = vmul.f32 %v301, %v301
    %v356 = vmul.f32 %v302, %v302
    %v357 = vadd.f32 %v341, %v342
    %v358 = vadd.f32 %v357, %v343
    %v359 = vadd.f32 %v358, %v344
    %v360 = vadd.f32 %v359, %v345
    %v361 = vadd.f32 %v360, %v346
    %v362 = vadd.f32 %v361, %v347
    %v363 = vadd.f32 %v362, %v348
    %v364 = vadd.f32 %v363, %v349
    %v365 = vadd.f32 %v364, %v350
    %v366 = vadd.f32 %v365, %v351
    %v367 = vadd.f32 %v366, %v352
    %v368 = vadd.f32 %v367, %v353
    %v369 = vadd.f32 %v368, %v354
    %v370 = vadd.f32 %v369, %v355
    %v371 = vadd.f32 %v370, %v356
    %v372 = vrot.slane %v371, 4
    %v373 = vadd.f32 %v371, %v372
    %v374 = vrot.slane %v373, 2
    %v375 = vadd.f32 %v373, %v374
    %v376 = vrot.slane %v375, 1
    %v377 = vadd.f32 %v375, %v376
    %378 = vst [vmem:[%s4 + $0x1] sm:$0x1] %v377
  $region21: #{bottleneck_forward.9} parent=0 // pred_fallthru
    _
  // Predicated region
  $region22: #{bottleneck_forward.9} parent=0 // pred_check
    _
  $region23: #{bottleneck_forward.9} parent=0 // pred_check_branch
    %380 = sbr.rel (0) target = $region25
  $region24: #{bottleneck_forward.9} parent=0 // pred_region
    _
  $region25: #{bottleneck_forward.9} parent=0 // pred_fallthru
    _
  // Predicated region
  $region26: #{bottleneck_forward.9} parent=0 // pred_check
    _
  $region27: #{bottleneck_forward.9} parent=0 // pred_check_branch
    %382 = sbr.rel (0) target = $region29
  $region28: #{bottleneck_forward.9} parent=0 // pred_region
    _
  $region29: #{bottleneck_forward.9} parent=0 // pred_fallthru
    _
  // Predicated region
  $region30: #{bottleneck_forward.9} parent=0 // pred_check
    _
  $region31: #{bottleneck_forward.9} parent=0 // pred_check_branch
    %384 = sbr.rel (0) target = $region33
  $region32: #{bottleneck_forward.9} parent=0 // pred_region
    _
  $region33: #{bottleneck_forward.9} parent=0 // pred_fallthru
    _
  // Predicated region
  $region34: #{bottleneck_forward.9} parent=0 // pred_check
    _
  $region35: #{bottleneck_forward.9} parent=0 // pred_check_branch
    %386 = sbr.rel (0) target = $region37
  $region36: #{bottleneck_forward.9} parent=0 // pred_region
    _
  $region37: #{bottleneck_forward.9} parent=0 // pred_fallthru
    _

// kernel: bottleneck_forward.11
$region0: #{bottleneck_forward.11}
  #allocation0 [shape = 'u32[]', space=smem, size = 0x4, offset = 0x4, fixed_abs, tag = 'smem constant byte address 0x4 - core index']
  #allocation1 [shape = 'u32[144,128]{1,0:T(1,128)}', space=vmem, size = 0x12000, scoped, tag = 'internal scratch']
  %s0 = inlined_call_operand.vmem [shape: f32[128,128], index: 0, kind: input, shape index: {}]
  %s1 = inlined_call_operand.vmem [shape: f32[128,128], index: 1, kind: input, shape index: {}]
  %s2 = inlined_call_operand.vmem [shape: f32[1,128], index: 2, kind: input, shape index: {}]
  %s3 = inlined_call_operand.vmem [shape: f32[1,128], index: 3, kind: input, shape index: {}]
  %s4 = inlined_call_operand.vmem [shape: f32[1,128], index: 4, kind: input, shape index: {}]
  %s5 = inlined_call_operand.vmem [shape: f32[1,128], index: 5, kind: input, shape index: {}]
  %s6 = inlined_call_operand.vmem [shape: f32[128,128], index: 6, kind: output, shape index: {}]
  %s7 = sld [smem:[#allocation0]]
  $region34: #{bottleneck_forward.11} parent=0
    _
  %s9 = ssub.s32 1, %s7
  %s10 = scalar_select 0, %s9, %s7
  // Predicated region
  $region2: #{bottleneck_forward.11} parent=0 // pred_check
    _
  $region3: #{bottleneck_forward.11} parent=0 // pred_check_branch
    %12 = sbr.rel (0) target = $region5
  $region4: #{bottleneck_forward.11} parent=0 // pred_region
    _
  $region5: #{bottleneck_forward.11} parent=0 // pred_fallthru
    _
  // Predicated region
  $region6: #{bottleneck_forward.11} parent=0 // pred_check
    _
  $region7: #{bottleneck_forward.11} parent=0 // pred_check_branch
    %14 = sbr.rel (0) target = $region9
  $region8: #{bottleneck_forward.11} parent=0 // pred_region
    _
  $region9: #{bottleneck_forward.11} parent=0 // pred_fallthru
    _
  // Predicated region
  $region10: #{bottleneck_forward.11} parent=0 // pred_check
    _
  $region11: #{bottleneck_forward.11} parent=0 // pred_check_branch
    %16 = sbr.rel (0) target = $region13
  $region12: #{bottleneck_forward.11} parent=0 // pred_region
    _
  $region13: #{bottleneck_forward.11} parent=0 // pred_fallthru
    _
  // Predicated region
  $region14: #{bottleneck_forward.11} parent=0 // pred_check
    _
  $region15: #{bottleneck_forward.11} parent=0 // pred_check_branch
    %18 = sbr.rel (0) target = $region17
  $region16: #{bottleneck_forward.11} parent=0 // pred_region
    _
  $region17: #{bottleneck_forward.11} parent=0 // pred_fallthru
    _
  // Predicated region
  $region18: #{bottleneck_forward.11} parent=0 // pred_check
    _
  $region19: #{bottleneck_forward.11} parent=0 // pred_check_branch
    %20 = sbr.rel (0) target = $region21
  $region20: #{bottleneck_forward.11} parent=0 // pred_region
    _
  $region21: #{bottleneck_forward.11} parent=0 // pred_fallthru
    _
  // Predicated region
  $region22: #{bottleneck_forward.11} parent=0 // pred_check
    _
  $region23: #{bottleneck_forward.11} parent=0 // pred_check_branch
    %22 = sbr.rel (0) target = $region25
  $region24: #{bottleneck_forward.11} parent=0 // pred_region
    _
  $region25: #{bottleneck_forward.11} parent=0 // pred_fallthru
    _
  %v23 = vld [vmem:[%s0] sm:$0xff]
  %v24 = vld [vmem:[%s0 + $0x8] sm:$0xff]
  %v25 = vld [vmem:[%s0 + $0x10] sm:$0xff]
  %v26 = vld [vmem:[%s0 + $0x18] sm:$0xff]
  %v27 = vld [vmem:[%s0 + $0x20] sm:$0xff]
  %v28 = vld [vmem:[%s0 + $0x28] sm:$0xff]
  %v29 = vld [vmem:[%s0 + $0x30] sm:$0xff]
  %v30 = vld [vmem:[%s0 + $0x38] sm:$0xff]
  %v31 = vld [vmem:[%s0 + $0x40] sm:$0xff]
  %v32 = vld [vmem:[%s0 + $0x48] sm:$0xff]
  %v33 = vld [vmem:[%s0 + $0x50] sm:$0xff]
  %v34 = vld [vmem:[%s0 + $0x58] sm:$0xff]
  %v35 = vld [vmem:[%s0 + $0x60] sm:$0xff]
  %v36 = vld [vmem:[%s0 + $0x68] sm:$0xff]
  %v37 = vld [vmem:[%s0 + $0x70] sm:$0xff]
  %v38 = vld [vmem:[%s0 + $0x78] sm:$0xff]
  %v39 = vld [vmem:[%s2] sm:$0x1]
  %v41 = vlaneseq
  %v42 = vshrl.u32 %v41, 7
  %v43 = vsub.s32 0, %v42
  %v44 = vrot.slane %v39, %v43
  %v46 = vmul.f32 %v23, %v44
  %v47 = vmul.f32 %v24, %v44
  %v48 = vmul.f32 %v25, %v44
  %v49 = vmul.f32 %v26, %v44
  %v50 = vmul.f32 %v27, %v44
  %v51 = vmul.f32 %v28, %v44
  %v52 = vmul.f32 %v29, %v44
  %v53 = vmul.f32 %v30, %v44
  %v54 = vmul.f32 %v31, %v44
  %v55 = vmul.f32 %v32, %v44
  %v56 = vmul.f32 %v33, %v44
  %v57 = vmul.f32 %v34, %v44
  %v58 = vmul.f32 %v35, %v44
  %v59 = vmul.f32 %v36, %v44
  %v60 = vmul.f32 %v37, %v44
  %v61 = vmul.f32 %v38, %v44
  %v62 = vld [vmem:[%s3] sm:$0x1]
  %v64 = vlaneseq
  %v65 = vshrl.u32 %v64, 7
  %v66 = vsub.s32 0, %v65
  %v67 = vrot.slane %v62, %v66
  %v69 = vadd.f32 %v46, %v67
  %v70 = vadd.f32 %v47, %v67
  %v71 = vadd.f32 %v48, %v67
  %v72 = vadd.f32 %v49, %v67
  %v73 = vadd.f32 %v50, %v67
  %v74 = vadd.f32 %v51, %v67
  %v75 = vadd.f32 %v52, %v67
  %v76 = vadd.f32 %v53, %v67
  %v77 = vadd.f32 %v54, %v67
  %v78 = vadd.f32 %v55, %v67
  %v79 = vadd.f32 %v56, %v67
  %v80 = vadd.f32 %v57, %v67
  %v81 = vadd.f32 %v58, %v67
  %v82 = vadd.f32 %v59, %v67
  %v83 = vadd.f32 %v60, %v67
  %v84 = vadd.f32 %v61, %v67
  %v85 = vld [vmem:[%s1] sm:$0xff]
  %v86 = vld [vmem:[%s1 + $0x8] sm:$0xff]
  %v87 = vld [vmem:[%s1 + $0x10] sm:$0xff]
  %v88 = vld [vmem:[%s1 + $0x18] sm:$0xff]
  %v89 = vld [vmem:[%s1 + $0x20] sm:$0xff]
  %v90 = vld [vmem:[%s1 + $0x28] sm:$0xff]
  %v91 = vld [vmem:[%s1 + $0x30] sm:$0xff]
  %v92 = vld [vmem:[%s1 + $0x38] sm:$0xff]
  %v93 = vld [vmem:[%s1 + $0x40] sm:$0xff]
  %v94 = vld [vmem:[%s1 + $0x48] sm:$0xff]
  %v95 = vld [vmem:[%s1 + $0x50] sm:$0xff]
  %v96 = vld [vmem:[%s1 + $0x58] sm:$0xff]
  %v97 = vld [vmem:[%s1 + $0x60] sm:$0xff]
  %v98 = vld [vmem:[%s1 + $0x68] sm:$0xff]
  %v99 = vld [vmem:[%s1 + $0x70] sm:$0xff]
  %v100 = vld [vmem:[%s1 + $0x78] sm:$0xff]
  %v101 = vld [vmem:[%s4] sm:$0x1]
  %v103 = vlaneseq
  %v104 = vshrl.u32 %v103, 7
  %v105 = vsub.s32 0, %v104
  %v106 = vrot.slane %v101, %v105
  %v108 = vmul.f32 %v85, %v106
  %v109 = vmul.f32 %v86, %v106
  %v110 = vmul.f32 %v87, %v106
  %v111 = vmul.f32 %v88, %v106
  %v112 = vmul.f32 %v89, %v106
  %v113 = vmul.f32 %v90, %v106
  %v114 = vmul.f32 %v91, %v106
  %v115 = vmul.f32 %v92, %v106
  %v116 = vmul.f32 %v93, %v106
  %v117 = vmul.f32 %v94, %v106
  %v118 = vmul.f32 %v95, %v106
  %v119 = vmul.f32 %v96, %v106
  %v120 = vmul.f32 %v97, %v106
  %v121 = vmul.f32 %v98, %v106
  %v122 = vmul.f32 %v99, %v106
  %v123 = vmul.f32 %v100, %v106
  %v124 = vld [vmem:[%s5] sm:$0x1]
  %v126 = vlaneseq
  %v127 = vshrl.u32 %v126, 7
  %v128 = vsub.s32 0, %v127
  %v129 = vrot.slane %v124, %v128
  %v131 = vadd.f32 %v108, %v129
  %v132 = vadd.f32 %v109, %v129
  %v133 = vadd.f32 %v110, %v129
  %v134 = vadd.f32 %v111, %v129
  %v135 = vadd.f32 %v112, %v129
  %v136 = vadd.f32 %v113, %v129
  %v137 = vadd.f32 %v114, %v129
  %v138 = vadd.f32 %v115, %v129
  %v139 = vadd.f32 %v116, %v129
  %v140 = vadd.f32 %v117, %v129
  %v141 = vadd.f32 %v118, %v129
  %v142 = vadd.f32 %v119, %v129
  %v143 = vadd.f32 %v120, %v129
  %v144 = vadd.f32 %v121, %v129
  %v145 = vadd.f32 %v122, %v129
  %v146 = vadd.f32 %v123, %v129
  %v147 = vadd.f32 %v69, %v131
  %v148 = vadd.f32 %v70, %v132
  %v149 = vadd.f32 %v71, %v133
  %v150 = vadd.f32 %v72, %v134
  %v151 = vadd.f32 %v73, %v135
  %v152 = vadd.f32 %v74, %v136
  %v153 = vadd.f32 %v75, %v137
  %v154 = vadd.f32 %v76, %v138
  %v155 = vadd.f32 %v77, %v139
  %v156 = vadd.f32 %v78, %v140
  %v157 = vadd.f32 %v79, %v141
  %v158 = vadd.f32 %v80, %v142
  %v159 = vadd.f32 %v81, %v143
  %v160 = vadd.f32 %v82, %v144
  %v161 = vadd.f32 %v83, %v145
  %v162 = vadd.f32 %v84, %v146
  %v163 = vmax.f32 %v147, 0.0
  %v164 = vmax.f32 %v148, 0.0
  %v165 = vmax.f32 %v149, 0.0
  %v166 = vmax.f32 %v150, 0.0
  %v167 = vmax.f32 %v151, 0.0
  %v168 = vmax.f32 %v152, 0.0
  %v169 = vmax.f32 %v153, 0.0
  %v170 = vmax.f32 %v154, 0.0
  %v171 = vmax.f32 %v155, 0.0
  %v172 = vmax.f32 %v156, 0.0
  %v173 = vmax.f32 %v157, 0.0
  %v174 = vmax.f32 %v158, 0.0
  %v175 = vmax.f32 %v159, 0.0
  %v176 = vmax.f32 %v160, 0.0
  %v177 = vmax.f32 %v161, 0.0
  %v178 = vmax.f32 %v162, 0.0
  %179 = vst [vmem:[%s6] sm:$0xff] %v163
  %180 = vst [vmem:[%s6 + $0x8] sm:$0xff] %v164
  %181 = vst [vmem:[%s6 + $0x10] sm:$0xff] %v165
  %182 = vst [vmem:[%s6 + $0x18] sm:$0xff] %v166
  %183 = vst [vmem:[%s6 + $0x20] sm:$0xff] %v167
  %184 = vst [vmem:[%s6 + $0x28] sm:$0xff] %v168
  %185 = vst [vmem:[%s6 + $0x30] sm:$0xff] %v169
  %186 = vst [vmem:[%s6 + $0x38] sm:$0xff] %v170
  %187 = vst [vmem:[%s6 + $0x40] sm:$0xff] %v171
  %188 = vst [vmem:[%s6 + $0x48] sm:$0xff] %v172
  %189 = vst [vmem:[%s6 + $0x50] sm:$0xff] %v173
  %190 = vst [vmem:[%s6 + $0x58] sm:$0xff] %v174
  %191 = vst [vmem:[%s6 + $0x60] sm:$0xff] %v175
  %192 = vst [vmem:[%s6 + $0x68] sm:$0xff] %v176
  %193 = vst [vmem:[%s6 + $0x70] sm:$0xff] %v177
  %194 = vst [vmem:[%s6 + $0x78] sm:$0xff] %v178
  // Predicated region
  $region26: #{bottleneck_forward.11} parent=0 // pred_check
    _
  $region27: #{bottleneck_forward.11} parent=0 // pred_check_branch
    %196 = sbr.rel (0) target = $region29
  $region28: #{bottleneck_forward.11} parent=0 // pred_region
    _
  $region29: #{bottleneck_forward.11} parent=0 // pred_fallthru
    _
  // Predicated region
  $region30: #{bottleneck_forward.11} parent=0 // pred_check
    _
  $region31: #{bottleneck_forward.11} parent=0 // pred_check_branch
    %198 = sbr.rel (0) target = $region33
  $region32: #{bottleneck_forward.11} parent=0 // pred_region
    _
  $region33: #{bottleneck_forward.11} parent=0 // pred_fallthru
    _

</llo_original>
